<compile_context>
chip_gen: v6e
topology: v6e:2x2x1
jax: 0.10.0
libtpu: 0.0.40
codegen_flags: <defaults>
</compile_context>

<pallas_src>
import jax
import jax.numpy as jnp
import numpy as np
from jax import lax
from jax.experimental import pallas as pl
from jax.experimental.pallas import tpu as pltpu

# ---------------- config (matches module defaults at small scale) ----------
D_MODEL = 64
NUM_HEADS = 4
FEATURE_DIM = 16
HEAD_DIM = D_MODEL // NUM_HEADS          # head_dim = d_model // num_heads
EPS = 1e-12
BATCH = 2
SEQ = 16

HIGHEST = lax.Precision.HIGHEST


# ---------------- single fused forward kernel (one step, no grid) ----------
def _fused_kernel(x_ref, wqkv_ref, wo_ref, kmask_ref, blkones_ref, causal_ref,
                  o_ref):
    """Whole forward: q/k/v projections, causal linear attention over the
    B*H 'super-heads' (batch folded into the lane axis), out-projection."""
    L = x_ref.shape[0]                       # 16
    GF, GL = kmask_ref.shape                 # (B*H*FD, B*H*L) = (128, 128)
    GV = blkones_ref.shape[1]                # B*H*DV = 128
    n_rep = GL // L                          # B*H = 8

    x = x_ref[...].astype(jnp.float32)       # (L, B*D) = (16, 128)

    # Fused q/k/v projection against the batch-block-diagonal weight:
    # one lane-dense (16, 384) MXU matmul; slices land on 128-lane boundaries.
    qkv = jnp.dot(x, wqkv_ref[...], preferred_element_type=jnp.float32,
                  precision=HIGHEST)                                  # (16, 384)
    q = qkv[:, :GF]                                                   # (16, 128)
    k = qkv[:, GF:2 * GF]                                             # (16, 128)
    v = qkv[:, 2 * GF:2 * GF + GV]                                    # (16, 128)

    # Block-diagonal K^T over super-heads: (GF, GL) = (128, 128).
    # Host-precomputed selector mask replaces the old iota/where chain.
    k_bd = jnp.concatenate([k.T] * n_rep, axis=1) * kmask_ref[...]

    # Score slab: A[:, g*L:(g+1)*L] = q_g @ k_g^T, causal-masked.  (16, 128)
    a = jnp.dot(q, k_bd, preferred_element_type=jnp.float32,
                precision=HIGHEST)
    a = a * causal_ref[...]

    # Block-diagonal V over super-heads: (GL, GV) = (128, 128).
    v_bd = jnp.concatenate([v] * n_rep, axis=0) * blkones_ref[...]

    # Numerator already in 'l (b h d)' layout; denominator is an MXU row-sum
    # (A @ block-diag ones), broadcast across each head's DV lanes — no XLU
    # cross-lane reduce, no per-head loop.
    y_num = jnp.dot(a, v_bd, preferred_element_type=jnp.float32,
                    precision=HIGHEST)                                # (16, 128)
    denom = jnp.dot(a, blkones_ref[...], preferred_element_type=jnp.float32,
                    precision=HIGHEST)                                # (16, 128)

    y = y_num * pl.reciprocal(denom + EPS, approx=False)              # exact

    # Out-projection against the batch-block-diagonal wo^T; full (16, 128)
    # lane-dense unmasked store.
    o_ref[...] = jnp.dot(y, wo_ref[...], preferred_element_type=jnp.float32,
                         precision=HIGHEST).astype(o_ref.dtype)


# ---------------- wrapper ---------------------------------------------------
def linear_attention_forward(hidden_states, fused):
    b, l, d = hidden_states.shape
    # Fold batch into the lane axis: (B, L, D) -> (L, B*D).  Tiny wrapper-side
    # layout plumbing so every kernel tensor is 128-lane dense.
    x_lane = jnp.transpose(hidden_states, (1, 0, 2)).reshape(l, b * d)
    vmem = pl.BlockSpec(memory_space=pltpu.MemorySpace.VMEM)
    out_lane = pl.pallas_call(
        _fused_kernel,
        out_shape=jax.ShapeDtypeStruct((l, b * d), hidden_states.dtype),
        in_specs=[vmem] * 6,
        out_specs=vmem,
    )(x_lane, fused["wqkv_bd"], fused["wo_bd"],
      fused["kmask"], fused["blkones"], fused["causal"])
    return jnp.transpose(out_lane.reshape(l, b, d), (1, 0, 2))


# ---------------- parameter / constant prep (done once, host side) ---------
def init_params(key):
    def linear_w(key, out_f, in_f):
        bound = 1.0 / np.sqrt(in_f)
        return jax.random.uniform(
            key, (out_f, in_f), jnp.float32, minval=-bound, maxval=bound
        )

    k1, k2, k3, k4 = jax.random.split(key, 4)
    return {
        "wq": linear_w(k1, FEATURE_DIM * NUM_HEADS, D_MODEL),
        "wk": linear_w(k2, FEATURE_DIM * NUM_HEADS, D_MODEL),
        "wv": linear_w(k3, NUM_HEADS * HEAD_DIM, D_MODEL),
        "wo": linear_w(k4, D_MODEL, NUM_HEADS * HEAD_DIM),
    }


def _rep_block_diag(m, n):
    """Block-diagonal with n copies of m on the diagonal."""
    return jnp.kron(jnp.eye(n, dtype=m.dtype), m)


def prepare_fused_weights(params, batch, seq):
    # Batch-block-diagonal fused weights (q/k/v fused, pre-transposed) and the
    # data-independent selector / causal-mask constants — all built ONCE.
    wq_bd = _rep_block_diag(params["wq"].T, batch)    # (B*D, B*H*FD)
    wk_bd = _rep_block_diag(params["wk"].T, batch)    # (B*D, B*H*FD)
    wv_bd = _rep_block_diag(params["wv"].T, batch)    # (B*D, B*H*DV)
    wqkv_bd = jnp.concatenate([wq_bd, wk_bd, wv_bd], axis=1)   # (128, 384)
    wo_bd = _rep_block_diag(params["wo"].T, batch)             # (128, 128)

    G = batch * NUM_HEADS
    GF, GL, GV = G * FEATURE_DIM, G * seq, G * HEAD_DIM
    r = np.arange(GF)[:, None]
    c = np.arange(GL)[None, :]
    kmask = (r // FEATURE_DIM == c // seq).astype(np.float32)      # (GF, GL)
    r2 = np.arange(GL)[:, None]
    c2 = np.arange(GV)[None, :]
    blkones = (r2 // seq == c2 // HEAD_DIM).astype(np.float32)     # (GL, GV)
    rows = np.arange(seq)[:, None]
    cols = np.arange(GL)[None, :] % seq
    causal = (cols <= rows).astype(np.float32)                     # (L, GL)

    return {
        "wqkv_bd": jnp.asarray(wqkv_bd),
        "wo_bd": jnp.asarray(wo_bd),
        "kmask": jnp.asarray(kmask),
        "blkones": jnp.asarray(blkones),
        "causal": jnp.asarray(causal),
    }


# ---------------- pure-JAX reference (mirrors PyTorch math) -----------------
def linear_attention_ref(hidden_states, params):
    b, l, d = hidden_states.shape
    q = jnp.dot(hidden_states, params["wq"].T, precision=HIGHEST)
    k = jnp.dot(hidden_states, params["wk"].T, precision=HIGHEST)
    v = jnp.dot(hidden_states, params["wv"].T, precision=HIGHEST)
    q = q.reshape(b, l, NUM_HEADS, FEATURE_DIM).transpose(0, 2, 1, 3)
    k = k.reshape(b, l, NUM_HEADS, FEATURE_DIM).transpose(0, 2, 1, 3)
    v = v.reshape(b, l, NUM_HEADS, HEAD_DIM).transpose(0, 2, 1, 3)

    a = jnp.einsum("bhnd,bhmd->bhnm", q, k, precision=HIGHEST)
    a = jnp.tril(a)
    y = jnp.einsum("bhnm,bhme->bhne", a, v, precision=HIGHEST)
    z = 1.0 / (jnp.einsum("bhld,bhld->bhl", q, jnp.cumsum(k, axis=2),
                          precision=HIGHEST) + EPS)
    y = y * z[..., None]
    y = jnp.transpose(y, (0, 2, 1, 3)).reshape(b, l, NUM_HEADS * HEAD_DIM)
    return jnp.dot(y, params["wo"].T, precision=HIGHEST)


if __name__ == "__main__":
    key = jax.random.PRNGKey(0)
    kp, kx = jax.random.split(key)
    params = init_params(kp)
    fused = prepare_fused_weights(params, BATCH, SEQ)
    hidden_states = jax.random.normal(kx, (BATCH, SEQ, D_MODEL), jnp.float32)

    out = jax.block_until_ready(linear_attention_forward(hidden_states, fused))
    ref = jax.block_until_ready(linear_attention_ref(hidden_states, params))

    assert out.shape == (BATCH, SEQ, D_MODEL)
    # Tolerance tightened vs. previous version: exact reciprocal and
    # precision=HIGHEST on both the kernel and the reference; remaining slack
    # covers the summation-order difference on the cancellation-prone denom.
    np.testing.assert_allclose(np.asarray(out), np.asarray(ref),
                               rtol=5e-3, atol=5e-4)
    print("KERNEL_OK")
</pallas_src>

<mosaic_0001>
module attributes {stable_mosaic.version = 11 : i64} {
  func.func @_fused_kernel(%arg0: memref<16x128xf32, #tpu.memory_space<vmem>>, %arg1: memref<128x384xf32, #tpu.memory_space<vmem>>, %arg2: memref<128x128xf32, #tpu.memory_space<vmem>>, %arg3: memref<128x128xf32, #tpu.memory_space<vmem>>, %arg4: memref<128x128xf32, #tpu.memory_space<vmem>>, %arg5: memref<16x128xf32, #tpu.memory_space<vmem>>, %arg6: memref<16x128xf32, #tpu.memory_space<vmem>>) attributes {dimension_semantics = [], scalar_prefetch = 0 : i64, scratch_operands = 0 : i64, tpu.core_type = #tpu.core_type<tc>} {
    %c0 = arith.constant 0 : index
    %c0_0 = arith.constant 0 : index
    %0 = vector.load %arg0[%c0, %c0_0] : memref<16x128xf32, #tpu.memory_space<vmem>>, vector<16x128xf32>
    %c0_1 = arith.constant 0 : index
    %c0_2 = arith.constant 0 : index
    %1 = vector.load %arg1[%c0_1, %c0_2] : memref<128x384xf32, #tpu.memory_space<vmem>>, vector<128x384xf32>
    %cst = arith.constant dense<0.000000e+00> : vector<16x384xf32>
    %2 = tpu.matmul %0, %1, %cst {dimension_numbers = #tpu.dot_dimension_numbers<[1], [0], [0], [1], [0, 0, 1, 1], [], []>, precision = #tpu.contract_precision<fp32>} : vector<16x128xf32>, vector<128x384xf32>, vector<16x384xf32> -> vector<16x384xf32>
    %3 = vector.extract_strided_slice %2 {offsets = [0, 0], sizes = [16, 128], strides = [1, 1]} : vector<16x384xf32> to vector<16x128xf32>
    %4 = vector.extract_strided_slice %2 {offsets = [0, 128], sizes = [16, 128], strides = [1, 1]} : vector<16x384xf32> to vector<16x128xf32>
    %5 = vector.extract_strided_slice %2 {offsets = [0, 256], sizes = [16, 128], strides = [1, 1]} : vector<16x384xf32> to vector<16x128xf32>
    %6 = tpu.transpose %4, [1, 0] : vector<16x128xf32> -> vector<128x16xf32>
    %7 = tpu.concatenate %6, %6, %6, %6, %6, %6, %6, %6 in 1 : vector<128x16xf32>, vector<128x16xf32>, vector<128x16xf32>, vector<128x16xf32>, vector<128x16xf32>, vector<128x16xf32>, vector<128x16xf32>, vector<128x16xf32> -> vector<128x128xf32>
    %c0_3 = arith.constant 0 : index
    %c0_4 = arith.constant 0 : index
    %8 = vector.load %arg3[%c0_3, %c0_4] : memref<128x128xf32, #tpu.memory_space<vmem>>, vector<128x128xf32>
    %9 = arith.mulf %7, %8 : vector<128x128xf32>
    %cst_5 = arith.constant dense<0.000000e+00> : vector<16x128xf32>
    %10 = tpu.matmul %3, %9, %cst_5 {dimension_numbers = #tpu.dot_dimension_numbers<[1], [0], [0], [1], [0, 0, 1, 1], [], []>, precision = #tpu.contract_precision<fp32>} : vector<16x128xf32>, vector<128x128xf32>, vector<16x128xf32> -> vector<16x128xf32>
    %c0_6 = arith.constant 0 : index
    %c0_7 = arith.constant 0 : index
    %11 = vector.load %arg5[%c0_6, %c0_7] : memref<16x128xf32, #tpu.memory_space<vmem>>, vector<16x128xf32>
    %12 = arith.mulf %10, %11 : vector<16x128xf32>
    %13 = tpu.concatenate %5, %5, %5, %5, %5, %5, %5, %5 in 0 : vector<16x128xf32>, vector<16x128xf32>, vector<16x128xf32>, vector<16x128xf32>, vector<16x128xf32>, vector<16x128xf32>, vector<16x128xf32>, vector<16x128xf32> -> vector<128x128xf32>
    %c0_8 = arith.constant 0 : index
    %c0_9 = arith.constant 0 : index
    %14 = vector.load %arg4[%c0_8, %c0_9] : memref<128x128xf32, #tpu.memory_space<vmem>>, vector<128x128xf32>
    %15 = arith.mulf %13, %14 : vector<128x128xf32>
    %cst_10 = arith.constant dense<0.000000e+00> : vector<16x128xf32>
    %16 = tpu.matmul %12, %15, %cst_10 {dimension_numbers = #tpu.dot_dimension_numbers<[1], [0], [0], [1], [0, 0, 1, 1], [], []>, precision = #tpu.contract_precision<fp32>} : vector<16x128xf32>, vector<128x128xf32>, vector<16x128xf32> -> vector<16x128xf32>
    %c0_11 = arith.constant 0 : index
    %c0_12 = arith.constant 0 : index
    %17 = vector.load %arg4[%c0_11, %c0_12] : memref<128x128xf32, #tpu.memory_space<vmem>>, vector<128x128xf32>
    %cst_13 = arith.constant dense<0.000000e+00> : vector<16x128xf32>
    %18 = tpu.matmul %12, %17, %cst_13 {dimension_numbers = #tpu.dot_dimension_numbers<[1], [0], [0], [1], [0, 0, 1, 1], [], []>, precision = #tpu.contract_precision<fp32>} : vector<16x128xf32>, vector<128x128xf32>, vector<16x128xf32> -> vector<16x128xf32>
    %cst_14 = arith.constant 9.99999996E-13 : f32
    %19 = vector.broadcast %cst_14 : f32 to vector<16x128xf32>
    %20 = arith.addf %18, %19 : vector<16x128xf32>
    %21 = tpu.reciprocal %20 : vector<16x128xf32> -> vector<16x128xf32>
    %22 = arith.mulf %16, %21 : vector<16x128xf32>
    %c0_15 = arith.constant 0 : index
    %c0_16 = arith.constant 0 : index
    %23 = vector.load %arg2[%c0_15, %c0_16] : memref<128x128xf32, #tpu.memory_space<vmem>>, vector<128x128xf32>
    %cst_17 = arith.constant dense<0.000000e+00> : vector<16x128xf32>
    %24 = tpu.matmul %22, %23, %cst_17 {dimension_numbers = #tpu.dot_dimension_numbers<[1], [0], [0], [1], [0, 0, 1, 1], [], []>, precision = #tpu.contract_precision<fp32>} : vector<16x128xf32>, vector<128x128xf32>, vector<16x128xf32> -> vector<16x128xf32>
    %c0_18 = arith.constant 0 : index
    %c0_19 = arith.constant 0 : index
    %25 = vector.load %arg6[%c0_18, %c0_19] : memref<16x128xf32, #tpu.memory_space<vmem>>, vector<16x128xf32>
    tpu.vector_store %arg6[%c0_18, %c0_19], %24 {strides = array<i32>} : memref<16x128xf32, #tpu.memory_space<vmem>>, vector<16x128xf32>,
    return
  }
}

</mosaic_0001>

<llo_original>
// kernel: tpu_custom_call.1
$region0: #{tpu_custom_call.1}
  #allocation0 [shape = 'u32[]', space=smem, size = 0x4, offset = 0x4, fixed_abs, tag = 'smem constant byte address 0x4 - core index']
  #allocation1 [shape = 'u32[144,128]{1,0:T(1,128)}', space=vmem, size = 0x12000, scoped, tag = 'internal scratch']
  %s0 = inlined_call_operand.hbm [shape: f32[16,128], index: 0, kind: input, shape index: {}]
  %s1 = inlined_call_operand.hbm [shape: f32[128,384], index: 1, kind: input, shape index: {}]
  %s2 = inlined_call_operand.hbm [shape: f32[128,128], index: 2, kind: input, shape index: {}]
  %s3 = inlined_call_operand.hbm [shape: f32[128,128], index: 3, kind: input, shape index: {}]
  %s4 = inlined_call_operand.hbm [shape: f32[128,128], index: 4, kind: input, shape index: {}]
  %s5 = inlined_call_operand.hbm [shape: f32[16,128], index: 5, kind: input, shape index: {}]
  %s6 = inlined_call_operand.hbm [shape: f32[16,128], index: 6, kind: output, shape index: {}]
  %s7 = sld [smem:[#allocation0]]
  $region58: #{tpu_custom_call.1} parent=0
    _
  %s9 = ssub.s32 1, %s7
  %s10 = scalar_select 0, %s9, %s7
  $region1: #{tpu_custom_call.1} parent=0
    #allocation2 [shape = 'u8[8192]{0}', space=vmem, size = 0x2000, scoped, tag = 'input window, operand 0, single buffered']
    #allocation3 [shape = 's32[1]{0}', space=sflag, size = 0x4, scoped, tag = 'scoped memory for tpu_custom_call.1']
    #allocation4 [shape = 's32[1]{0}', space=sflag, size = 0x4, scoped, tag = 'scoped memory for tpu_custom_call.1']
    #allocation5 [shape = 'u8[196608]{0}', space=vmem, size = 0x30000, scoped, tag = 'input window, operand 1, single buffered']
    #allocation6 [shape = 's32[1]{0}', space=sflag, size = 0x4, scoped, tag = 'scoped memory for tpu_custom_call.1']
    #allocation7 [shape = 'u8[65536]{0}', space=vmem, size = 0x10000, scoped, tag = 'input window, operand 2, single buffered']
    #allocation8 [shape = 'u8[65536]{0}', space=vmem, size = 0x10000, scoped, tag = 'input window, operand 3, single buffered']
    #allocation9 [shape = 's32[1]{0}', space=sflag, size = 0x4, scoped, tag = 'scoped memory for tpu_custom_call.1']
    #allocation10 [shape = 'u8[65536]{0}', space=vmem, size = 0x10000, scoped, tag = 'input window, operand 4, single buffered']
    #allocation11 [shape = 'u8[8192]{0}', space=vmem, size = 0x2000, scoped, tag = 'input window, operand 5, single buffered']
    #allocation12 [shape = 's32[1]{0}', space=sflag, size = 0x4, scoped, tag = 'scoped memory for tpu_custom_call.1']
    #allocation13 [shape = 'u8[8192]{0}', space=vmem, size = 0x2000, scoped, tag = 'output window, operand 0, single buffered']
    %11 = vsyncpa [#allocation3], 0
    %12 = vsyncpa [#allocation6], 0
    %13 = vsyncpa [#allocation9], 0
    %14 = vsyncpa [#allocation12], 0
    %15 = vsyncpa [#allocation4], 0
    // Predicated region
    $region2: #{tpu_custom_call.1} parent=1 // pred_check
      _
    $region3: #{tpu_custom_call.1} parent=1 // pred_check_branch
      %17 = sbr.rel (0) target = $region5
    $region4: #{tpu_custom_call.1} parent=1 // pred_region
      %s19 = ssub.s32 256, 256
      %20 = vsyncadd [#allocation3], %s19
      %s21 = sshll.u32 [#allocation2], 4
      %s22 = int_to_ptr.vmem [resolvable:$true] %s21
      %27 = dma.hbm_to_vmem [thread:$0]  %s0, 256, %s22, [#allocation3], 128, 128, 8
    $region5: #{tpu_custom_call.1} parent=1 // pred_fallthru
      _
    // Predicated region
    $region6: #{tpu_custom_call.1} parent=1 // pred_check
      _
    $region7: #{tpu_custom_call.1} parent=1 // pred_check_branch
      %29 = sbr.rel (0) target = $region9
    $region8: #{tpu_custom_call.1} parent=1 // pred_region
      %s31 = ssub.s32 6144, 6144
      %32 = vsyncadd [#allocation6], %s31
      %s33 = sshll.u32 [#allocation5], 4
      %s34 = int_to_ptr.vmem [resolvable:$true] %s33
      %39 = dma.hbm_to_vmem [thread:$0]  %s1, 6144, %s34, [#allocation6], 384, 384, 24
    $region9: #{tpu_custom_call.1} parent=1 // pred_fallthru
      _
    // Predicated region
    $region10: #{tpu_custom_call.1} parent=1 // pred_check
      _
    $region11: #{tpu_custom_call.1} parent=1 // pred_check_branch
      %41 = sbr.rel (0) target = $region13
    $region12: #{tpu_custom_call.1} parent=1 // pred_region
      %s43 = ssub.s32 2048, 2048
      %44 = vsyncadd [#allocation6], %s43
      %s45 = sshll.u32 [#allocation7], 4
      %s46 = int_to_ptr.vmem [resolvable:$true] %s45
      %51 = dma.hbm_to_vmem [thread:$0]  %s2, 2048, %s46, [#allocation6], 128, 128, 8
    $region13: #{tpu_custom_call.1} parent=1 // pred_fallthru
      _
    // Predicated region
    $region14: #{tpu_custom_call.1} parent=1 // pred_check
      _
    $region15: #{tpu_custom_call.1} parent=1 // pred_check_branch
      %53 = sbr.rel (0) target = $region17
    $region16: #{tpu_custom_call.1} parent=1 // pred_region
      %s55 = ssub.s32 2048, 2048
      %56 = vsyncadd [#allocation9], %s55
      %s57 = sshll.u32 [#allocation8], 4
      %s58 = int_to_ptr.vmem [resolvable:$true] %s57
      %63 = dma.hbm_to_vmem [thread:$0]  %s3, 2048, %s58, [#allocation9], 128, 128, 8
    $region17: #{tpu_custom_call.1} parent=1 // pred_fallthru
      _
    // Predicated region
    $region18: #{tpu_custom_call.1} parent=1 // pred_check
      _
    $region19: #{tpu_custom_call.1} parent=1 // pred_check_branch
      %65 = sbr.rel (0) target = $region21
    $region20: #{tpu_custom_call.1} parent=1 // pred_region
      %s67 = ssub.s32 2048, 2048
      %68 = vsyncadd [#allocation9], %s67
      %s69 = sshll.u32 [#allocation10], 4
      %s70 = int_to_ptr.vmem [resolvable:$true] %s69
      %75 = dma.hbm_to_vmem [thread:$0]  %s4, 2048, %s70, [#allocation9], 128, 128, 8
    $region21: #{tpu_custom_call.1} parent=1 // pred_fallthru
      _
    // Predicated region
    $region22: #{tpu_custom_call.1} parent=1 // pred_check
      _
    $region23: #{tpu_custom_call.1} parent=1 // pred_check_branch
      %77 = sbr.rel (0) target = $region25
    $region24: #{tpu_custom_call.1} parent=1 // pred_region
      %s79 = ssub.s32 256, 256
      %80 = vsyncadd [#allocation12], %s79
      %s81 = sshll.u32 [#allocation11], 4
      %s82 = int_to_ptr.vmem [resolvable:$true] %s81
      %87 = dma.hbm_to_vmem [thread:$0]  %s5, 256, %s82, [#allocation12], 128, 128, 8
    $region25: #{tpu_custom_call.1} parent=1 // pred_fallthru
      _
    // Predicated region
    $region26: #{tpu_custom_call.1} parent=1 // pred_check
      _
    $region27: #{tpu_custom_call.1} parent=1 // pred_check_branch
      %89 = sbr.rel (0) target = $region29
    $region28: #{tpu_custom_call.1} parent=1 // pred_region
      %90 = dma.done [#allocation3], 256
    $region29: #{tpu_custom_call.1} parent=1 // pred_fallthru
      _
    // Predicated region
    $region30: #{tpu_custom_call.1} parent=1 // pred_check
      _
    $region31: #{tpu_custom_call.1} parent=1 // pred_check_branch
      %92 = sbr.rel (0) target = $region33
    $region32: #{tpu_custom_call.1} parent=1 // pred_region
      %93 = dma.done [#allocation6], 6144
    $region33: #{tpu_custom_call.1} parent=1 // pred_fallthru
      _
    // Predicated region
    $region34: #{tpu_custom_call.1} parent=1 // pred_check
      _
    $region35: #{tpu_custom_call.1} parent=1 // pred_check_branch
      %95 = sbr.rel (0) target = $region37
    $region36: #{tpu_custom_call.1} parent=1 // pred_region
      %96 = dma.done [#allocation6], 2048
    $region37: #{tpu_custom_call.1} parent=1 // pred_fallthru
      _
    // Predicated region
    $region38: #{tpu_custom_call.1} parent=1 // pred_check
      _
    $region39: #{tpu_custom_call.1} parent=1 // pred_check_branch
      %98 = sbr.rel (0) target = $region41
    $region40: #{tpu_custom_call.1} parent=1 // pred_region
      %99 = dma.done [#allocation9], 2048
    $region41: #{tpu_custom_call.1} parent=1 // pred_fallthru
      _
    // Predicated region
    $region42: #{tpu_custom_call.1} parent=1 // pred_check
      _
    $region43: #{tpu_custom_call.1} parent=1 // pred_check_branch
      %101 = sbr.rel (0) target = $region45
    $region44: #{tpu_custom_call.1} parent=1 // pred_region
      %102 = dma.done [#allocation9], 2048
    $region45: #{tpu_custom_call.1} parent=1 // pred_fallthru
      _
    // Predicated region
    $region46: #{tpu_custom_call.1} parent=1 // pred_check
      _
    $region47: #{tpu_custom_call.1} parent=1 // pred_check_branch
      %104 = sbr.rel (0) target = $region49
    $region48: #{tpu_custom_call.1} parent=1 // pred_region
      %105 = dma.done [#allocation12], 256
    $region49: #{tpu_custom_call.1} parent=1 // pred_fallthru
      _
    %v106 = vld [vmem:[#allocation2] sm:$0xff]
    %v107 = vld [vmem:[#allocation2 + $0x8] sm:$0xff]
    %v108 = vld [vmem:[#allocation5] sm:$0xff]
    %v109 = vld [vmem:[#allocation5 + $0x8] sm:$0xff]
    %v110 = vld [vmem:[#allocation5 + $0x10] sm:$0xff]
    %v111 = vld [vmem:[#allocation5 + $0x18] sm:$0xff]
    %v112 = vld [vmem:[#allocation5 + $0x20] sm:$0xff]
    %v113 = vld [vmem:[#allocation5 + $0x28] sm:$0xff]
    %v114 = vld [vmem:[#allocation5 + $0x30] sm:$0xff]
    %v115 = vld [vmem:[#allocation5 + $0x38] sm:$0xff]
    %v116 = vld [vmem:[#allocation5 + $0x40] sm:$0xff]
    %v117 = vld [vmem:[#allocation5 + $0x48] sm:$0xff]
    %v118 = vld [vmem:[#allocation5 + $0x50] sm:$0xff]
    %v119 = vld [vmem:[#allocation5 + $0x58] sm:$0xff]
    %v120 = vld [vmem:[#allocation5 + $0x60] sm:$0xff]
    %v121 = vld [vmem:[#allocation5 + $0x68] sm:$0xff]
    %v122 = vld [vmem:[#allocation5 + $0x70] sm:$0xff]
    %v123 = vld [vmem:[#allocation5 + $0x78] sm:$0xff]
    %v124 = vld [vmem:[#allocation5 + $0x80] sm:$0xff]
    %v125 = vld [vmem:[#allocation5 + $0x88] sm:$0xff]
    %v126 = vld [vmem:[#allocation5 + $0x90] sm:$0xff]
    %v127 = vld [vmem:[#allocation5 + $0x98] sm:$0xff]
    %v128 = vld [vmem:[#allocation5 + $0xa0] sm:$0xff]
    %v129 = vld [vmem:[#allocation5 + $0xa8] sm:$0xff]
    %v130 = vld [vmem:[#allocation5 + $0xb0] sm:$0xff]
    %v131 = vld [vmem:[#allocation5 + $0xb8] sm:$0xff]
    %v132 = vld [vmem:[#allocation5 + $0xc0] sm:$0xff]
    %v133 = vld [vmem:[#allocation5 + $0xc8] sm:$0xff]
    %v134 = vld [vmem:[#allocation5 + $0xd0] sm:$0xff]
    %v135 = vld [vmem:[#allocation5 + $0xd8] sm:$0xff]
    %v136 = vld [vmem:[#allocation5 + $0xe0] sm:$0xff]
    %v137 = vld [vmem:[#allocation5 + $0xe8] sm:$0xff]
    %v138 = vld [vmem:[#allocation5 + $0xf0] sm:$0xff]
    %v139 = vld [vmem:[#allocation5 + $0xf8] sm:$0xff]
    %v140 = vld [vmem:[#allocation5 + $0x100] sm:$0xff]
    %v141 = vld [vmem:[#allocation5 + $0x108] sm:$0xff]
    %v142 = vld [vmem:[#allocation5 + $0x110] sm:$0xff]
    %v143 = vld [vmem:[#allocation5 + $0x118] sm:$0xff]
    %v144 = vld [vmem:[#allocation5 + $0x120] sm:$0xff]
    %v145 = vld [vmem:[#allocation5 + $0x128] sm:$0xff]
    %v146 = vld [vmem:[#allocation5 + $0x130] sm:$0xff]
    %v147 = vld [vmem:[#allocation5 + $0x138] sm:$0xff]
    %v148 = vld [vmem:[#allocation5 + $0x140] sm:$0xff]
    %v149 = vld [vmem:[#allocation5 + $0x148] sm:$0xff]
    %v150 = vld [vmem:[#allocation5 + $0x150] sm:$0xff]
    %v151 = vld [vmem:[#allocation5 + $0x158] sm:$0xff]
    %v152 = vld [vmem:[#allocation5 + $0x160] sm:$0xff]
    %v153 = vld [vmem:[#allocation5 + $0x168] sm:$0xff]
    %v154 = vld [vmem:[#allocation5 + $0x170] sm:$0xff]
    %v155 = vld [vmem:[#allocation5 + $0x178] sm:$0xff]
    %v156 = vand.u32 %v154, 4294901760
    %157 = vmatprep.subr.mxu0 %v156
    %v158 = vand.u32 %v153, 4294901760
    %159 = vmatpush1.msra.mxu0 %v158
    %v160 = vand.u32 %v151, 4294901760
    %161 = vmatprep.subr.mxu0 %v160
    %v162 = vand.u32 %v150, 4294901760
    %163 = vmatpush1.msra.mxu0 %v162
    %v164 = vand.u32 %v148, 4294901760
    %165 = vmatprep.subr.mxu0 %v164
    %v166 = vand.u32 %v147, 4294901760
    %167 = vmatpush1.msra.mxu0 %v166
    %v168 = vand.u32 %v145, 4294901760
    %169 = vmatprep.subr.mxu0 %v168
    %v170 = vand.u32 %v144, 4294901760
    %171 = vmatpush1.msra.mxu0 %v170
    %v172 = vand.u32 %v142, 4294901760
    %173 = vmatprep.subr.mxu0 %v172
    %v174 = vand.u32 %v141, 4294901760
    %175 = vmatpush1.msra.mxu0 %v174
    %v176 = vand.u32 %v139, 4294901760
    %177 = vmatprep.subr.mxu0 %v176
    %v178 = vand.u32 %v138, 4294901760
    %179 = vmatpush1.msra.mxu0 %v178
    %v180 = vand.u32 %v136, 4294901760
    %181 = vmatprep.subr.mxu0 %v180
    %v182 = vand.u32 %v135, 4294901760
    %183 = vmatpush1.msra.mxu0 %v182
    %v184 = vand.u32 %v133, 4294901760
    %185 = vmatprep.subr.mxu0 %v184
    %v186 = vand.u32 %v132, 4294901760
    %187 = vmatpush1.msra.mxu0 %v186
    %v188 = vand.u32 %v130, 4294901760
    %189 = vmatprep.subr.mxu0 %v188
    %v190 = vand.u32 %v129, 4294901760
    %191 = vmatpush1.msra.mxu0 %v190
    %v192 = vand.u32 %v127, 4294901760
    %193 = vmatprep.subr.mxu0 %v192
    %v194 = vand.u32 %v126, 4294901760
    %195 = vmatpush1.msra.mxu0 %v194
    %v196 = vand.u32 %v124, 4294901760
    %197 = vmatprep.subr.mxu0 %v196
    %v198 = vand.u32 %v123, 4294901760
    %199 = vmatpush1.msra.mxu0 %v198
    %v200 = vand.u32 %v121, 4294901760
    %201 = vmatprep.subr.mxu0 %v200
    %v202 = vand.u32 %v120, 4294901760
    %203 = vmatpush1.msra.mxu0 %v202
    %v204 = vand.u32 %v118, 4294901760
    %205 = vmatprep.subr.mxu0 %v204
    %v206 = vand.u32 %v117, 4294901760
    %207 = vmatpush1.msra.mxu0 %v206
    %v208 = vand.u32 %v115, 4294901760
    %209 = vmatprep.subr.mxu0 %v208
    %v210 = vand.u32 %v114, 4294901760
    %211 = vmatpush1.msra.mxu0 %v210
    %v212 = vand.u32 %v112, 4294901760
    %213 = vmatprep.subr.mxu0 %v212
    %v214 = vand.u32 %v111, 4294901760
    %215 = vmatpush1.msra.mxu0 %v214
    %v216 = vand.u32 %v109, 4294901760
    %217 = vmatprep.subr.mxu0 %v216
    %v218 = vand.u32 %v108, 4294901760
    %219 = vmatpush1.msra.mxu0 %v218
    %220 = vmatprep.subr.mxu0 0.0
    %221 = vmatpush2.msra.mxu0 0.0
    %222 = vmatprep.subr.mxu0 0.0
    %223 = vmatpush2.msra.mxu0 0.0
    %224 = vmatprep.subr.mxu0 0.0
    %225 = vmatpush2.msra.mxu0 0.0
    %226 = vmatprep.subr.mxu0 0.0
    %227 = vmatpush2.msra.mxu0 0.0
    %228 = vmatprep.subr.mxu0 0.0
    %229 = vmatpush2.msra.mxu0 0.0
    %230 = vmatprep.subr.mxu0 0.0
    %231 = vmatpush2.msra.mxu0 0.0
    %232 = vmatprep.subr.mxu0 0.0
    %233 = vmatpush2.msra.mxu0 0.0
    %234 = vmatprep.subr.mxu0 0.0
    %235 = vmatpush2.msra.mxu0 0.0
    %236 = vmatprep.subr.mxu0 0.0
    %237 = vmatpush2.msra.mxu0 0.0
    %238 = vmatprep.subr.mxu0 0.0
    %239 = vmatpush2.msra.mxu0 0.0
    %240 = vmatprep.subr.mxu0 0.0
    %241 = vmatpush2.msra.mxu0 0.0
    %242 = vmatprep.subr.mxu0 0.0
    %243 = vmatpush2.msra.mxu0 0.0
    %244 = vmatprep.subr.mxu0 0.0
    %245 = vmatpush2.msra.mxu0 0.0
    %246 = vmatprep.subr.mxu0 0.0
    %247 = vmatpush2.msra.mxu0 0.0
    %248 = vmatprep.subr.mxu0 0.0
    %249 = vmatpush2.msra.mxu0 0.0
    %250 = vmatprep.subr.mxu0 0.0
    %251 = vmatpush2.msra.mxu0 0.0
    %252 = vmatprep.mubr.f32.mxu0 0.0
    %v253 = vand.u32 %v106, 4294901760
    %v254 = vsub.f32 %v106, %v253
    %v255 = vand.u32 %v254, 4294901760
    %v256 = vsub.f32 %v254, %v255
    %v257 = vand.u32 %v256, 4294901760
    %258 = vmatmul.mubr.f32.gmra.mxu0 %v257
    %v259 = vpop.f32.mrf.mxu0
    %v260 = vadd.f32 0.0, %v259
    %v261 = vpop.f32.mrf.mxu0
    %v262 = vadd.f32 0.0, %v261
    %263 = vmatprep.mubr.f32.mxu0 0.0
    %v264 = vand.u32 %v107, 4294901760
    %v265 = vsub.f32 %v107, %v264
    %v266 = vand.u32 %v265, 4294901760
    %v267 = vsub.f32 %v265, %v266
    %v268 = vand.u32 %v267, 4294901760
    %269 = vmatmul.mubr.f32.gmra.mxu0 %v268
    %v270 = vpop.f32.mrf.mxu0
    %v271 = vadd.f32 0.0, %v270
    %v272 = vpop.f32.mrf.mxu0
    %v273 = vadd.f32 0.0, %v272
    %274 = vdwg.mxu0
    %v275 = vand.u32 %v154, 4294901760
    %v276 = vsub.f32 %v154, %v275
    %v277 = vand.u32 %v276, 4294901760
    %v278 = vsub.f32 %v276, %v277
    %v279 = vand.u32 %v278, 4294901760
    %280 = vmatprep.subr.mxu0 %v279
    %v281 = vand.u32 %v153, 4294901760
    %v282 = vsub.f32 %v153, %v281
    %v283 = vand.u32 %v282, 4294901760
    %v284 = vsub.f32 %v282, %v283
    %v285 = vand.u32 %v284, 4294901760
    %286 = vmatpush1.msra.mxu0 %v285
    %v287 = vand.u32 %v151, 4294901760
    %v288 = vsub.f32 %v151, %v287
    %v289 = vand.u32 %v288, 4294901760
    %v290 = vsub.f32 %v288, %v289
    %v291 = vand.u32 %v290, 4294901760
    %292 = vmatprep.subr.mxu0 %v291
    %v293 = vand.u32 %v150, 4294901760
    %v294 = vsub.f32 %v150, %v293
    %v295 = vand.u32 %v294, 4294901760
    %v296 = vsub.f32 %v294, %v295
    %v297 = vand.u32 %v296, 4294901760
    %298 = vmatpush1.msra.mxu0 %v297
    %v299 = vand.u32 %v148, 4294901760
    %v300 = vsub.f32 %v148, %v299
    %v301 = vand.u32 %v300, 4294901760
    %v302 = vsub.f32 %v300, %v301
    %v303 = vand.u32 %v302, 4294901760
    %304 = vmatprep.subr.mxu0 %v303
    %v305 = vand.u32 %v147, 4294901760
    %v306 = vsub.f32 %v147, %v305
    %v307 = vand.u32 %v306, 4294901760
    %v308 = vsub.f32 %v306, %v307
    %v309 = vand.u32 %v308, 4294901760
    %310 = vmatpush1.msra.mxu0 %v309
    %v311 = vand.u32 %v145, 4294901760
    %v312 = vsub.f32 %v145, %v311
    %v313 = vand.u32 %v312, 4294901760
    %v314 = vsub.f32 %v312, %v313
    %v315 = vand.u32 %v314, 4294901760
    %316 = vmatprep.subr.mxu0 %v315
    %v317 = vand.u32 %v144, 4294901760
    %v318 = vsub.f32 %v144, %v317
    %v319 = vand.u32 %v318, 4294901760
    %v320 = vsub.f32 %v318, %v319
    %v321 = vand.u32 %v320, 4294901760
    %322 = vmatpush1.msra.mxu0 %v321
    %v323 = vand.u32 %v142, 4294901760
    %v324 = vsub.f32 %v142, %v323
    %v325 = vand.u32 %v324, 4294901760
    %v326 = vsub.f32 %v324, %v325
    %v327 = vand.u32 %v326, 4294901760
    %328 = vmatprep.subr.mxu0 %v327
    %v329 = vand.u32 %v141, 4294901760
    %v330 = vsub.f32 %v141, %v329
    %v331 = vand.u32 %v330, 4294901760
    %v332 = vsub.f32 %v330, %v331
    %v333 = vand.u32 %v332, 4294901760
    %334 = vmatpush1.msra.mxu0 %v333
    %v335 = vand.u32 %v139, 4294901760
    %v336 = vsub.f32 %v139, %v335
    %v337 = vand.u32 %v336, 4294901760
    %v338 = vsub.f32 %v336, %v337
    %v339 = vand.u32 %v338, 4294901760
    %340 = vmatprep.subr.mxu0 %v339
    %v341 = vand.u32 %v138, 4294901760
    %v342 = vsub.f32 %v138, %v341
    %v343 = vand.u32 %v342, 4294901760
    %v344 = vsub.f32 %v342, %v343
    %v345 = vand.u32 %v344, 4294901760
    %346 = vmatpush1.msra.mxu0 %v345
    %v347 = vand.u32 %v136, 4294901760
    %v348 = vsub.f32 %v136, %v347
    %v349 = vand.u32 %v348, 4294901760
    %v350 = vsub.f32 %v348, %v349
    %v351 = vand.u32 %v350, 4294901760
    %352 = vmatprep.subr.mxu0 %v351
    %v353 = vand.u32 %v135, 4294901760
    %v354 = vsub.f32 %v135, %v353
    %v355 = vand.u32 %v354, 4294901760
    %v356 = vsub.f32 %v354, %v355
    %v357 = vand.u32 %v356, 4294901760
    %358 = vmatpush1.msra.mxu0 %v357
    %v359 = vand.u32 %v133, 4294901760
    %v360 = vsub.f32 %v133, %v359
    %v361 = vand.u32 %v360, 4294901760
    %v362 = vsub.f32 %v360, %v361
    %v363 = vand.u32 %v362, 4294901760
    %364 = vmatprep.subr.mxu0 %v363
    %v365 = vand.u32 %v132, 4294901760
    %v366 = vsub.f32 %v132, %v365
    %v367 = vand.u32 %v366, 4294901760
    %v368 = vsub.f32 %v366, %v367
    %v369 = vand.u32 %v368, 4294901760
    %370 = vmatpush1.msra.mxu0 %v369
    %v371 = vand.u32 %v130, 4294901760
    %v372 = vsub.f32 %v130, %v371
    %v373 = vand.u32 %v372, 4294901760
    %v374 = vsub.f32 %v372, %v373
    %v375 = vand.u32 %v374, 4294901760
    %376 = vmatprep.subr.mxu0 %v375
    %v377 = vand.u32 %v129, 4294901760
    %v378 = vsub.f32 %v129, %v377
    %v379 = vand.u32 %v378, 4294901760
    %v380 = vsub.f32 %v378, %v379
    %v381 = vand.u32 %v380, 4294901760
    %382 = vmatpush1.msra.mxu0 %v381
    %v383 = vand.u32 %v127, 4294901760
    %v384 = vsub.f32 %v127, %v383
    %v385 = vand.u32 %v384, 4294901760
    %v386 = vsub.f32 %v384, %v385
    %v387 = vand.u32 %v386, 4294901760
    %388 = vmatprep.subr.mxu0 %v387
    %v389 = vand.u32 %v126, 4294901760
    %v390 = vsub.f32 %v126, %v389
    %v391 = vand.u32 %v390, 4294901760
    %v392 = vsub.f32 %v390, %v391
    %v393 = vand.u32 %v392, 4294901760
    %394 = vmatpush1.msra.mxu0 %v393
    %v395 = vand.u32 %v124, 4294901760
    %v396 = vsub.f32 %v124, %v395
    %v397 = vand.u32 %v396, 4294901760
    %v398 = vsub.f32 %v396, %v397
    %v399 = vand.u32 %v398, 4294901760
    %400 = vmatprep.subr.mxu0 %v399
    %v401 = vand.u32 %v123, 4294901760
    %v402 = vsub.f32 %v123, %v401
    %v403 = vand.u32 %v402, 4294901760
    %v404 = vsub.f32 %v402, %v403
    %v405 = vand.u32 %v404, 4294901760
    %406 = vmatpush1.msra.mxu0 %v405
    %v407 = vand.u32 %v121, 4294901760
    %v408 = vsub.f32 %v121, %v407
    %v409 = vand.u32 %v408, 4294901760
    %v410 = vsub.f32 %v408, %v409
    %v411 = vand.u32 %v410, 4294901760
    %412 = vmatprep.subr.mxu0 %v411
    %v413 = vand.u32 %v120, 4294901760
    %v414 = vsub.f32 %v120, %v413
    %v415 = vand.u32 %v414, 4294901760
    %v416 = vsub.f32 %v414, %v415
    %v417 = vand.u32 %v416, 4294901760
    %418 = vmatpush1.msra.mxu0 %v417
    %v419 = vand.u32 %v118, 4294901760
    %v420 = vsub.f32 %v118, %v419
    %v421 = vand.u32 %v420, 4294901760
    %v422 = vsub.f32 %v420, %v421
    %v423 = vand.u32 %v422, 4294901760
    %424 = vmatprep.subr.mxu0 %v423
    %v425 = vand.u32 %v117, 4294901760
    %v426 = vsub.f32 %v117, %v425
    %v427 = vand.u32 %v426, 4294901760
    %v428 = vsub.f32 %v426, %v427
    %v429 = vand.u32 %v428, 4294901760
    %430 = vmatpush1.msra.mxu0 %v429
    %v431 = vand.u32 %v115, 4294901760
    %v432 = vsub.f32 %v115, %v431
    %v433 = vand.u32 %v432, 4294901760
    %v434 = vsub.f32 %v432, %v433
    %v435 = vand.u32 %v434, 4294901760
    %436 = vmatprep.subr.mxu0 %v435
    %v437 = vand.u32 %v114, 4294901760
    %v438 = vsub.f32 %v114, %v437
    %v439 = vand.u32 %v438, 4294901760
    %v440 = vsub.f32 %v438, %v439
    %v441 = vand.u32 %v440, 4294901760
    %442 = vmatpush1.msra.mxu0 %v441
    %v443 = vand.u32 %v112, 4294901760
    %v444 = vsub.f32 %v112, %v443
    %v445 = vand.u32 %v444, 4294901760
    %v446 = vsub.f32 %v444, %v445
    %v447 = vand.u32 %v446, 4294901760
    %448 = vmatprep.subr.mxu0 %v447
    %v449 = vand.u32 %v111, 4294901760
    %v450 = vsub.f32 %v111, %v449
    %v451 = vand.u32 %v450, 4294901760
    %v452 = vsub.f32 %v450, %v451
    %v453 = vand.u32 %v452, 4294901760
    %454 = vmatpush1.msra.mxu0 %v453
    %v455 = vand.u32 %v109, 4294901760
    %v456 = vsub.f32 %v109, %v455
    %v457 = vand.u32 %v456, 4294901760
    %v458 = vsub.f32 %v456, %v457
    %v459 = vand.u32 %v458, 4294901760
    %460 = vmatprep.subr.mxu0 %v459
    %v461 = vand.u32 %v108, 4294901760
    %v462 = vsub.f32 %v108, %v461
    %v463 = vand.u32 %v462, 4294901760
    %v464 = vsub.f32 %v462, %v463
    %v465 = vand.u32 %v464, 4294901760
    %466 = vmatpush1.msra.mxu0 %v465
    %467 = vmatprep.subr.mxu0 0.0
    %468 = vmatpush2.msra.mxu0 0.0
    %469 = vmatprep.subr.mxu0 0.0
    %470 = vmatpush2.msra.mxu0 0.0
    %471 = vmatprep.subr.mxu0 0.0
    %472 = vmatpush2.msra.mxu0 0.0
    %473 = vmatprep.subr.mxu0 0.0
    %474 = vmatpush2.msra.mxu0 0.0
    %475 = vmatprep.subr.mxu0 0.0
    %476 = vmatpush2.msra.mxu0 0.0
    %477 = vmatprep.subr.mxu0 0.0
    %478 = vmatpush2.msra.mxu0 0.0
    %479 = vmatprep.subr.mxu0 0.0
    %480 = vmatpush2.msra.mxu0 0.0
    %481 = vmatprep.subr.mxu0 0.0
    %482 = vmatpush2.msra.mxu0 0.0
    %483 = vmatprep.subr.mxu0 0.0
    %484 = vmatpush2.msra.mxu0 0.0
    %485 = vmatprep.subr.mxu0 0.0
    %486 = vmatpush2.msra.mxu0 0.0
    %487 = vmatprep.subr.mxu0 0.0
    %488 = vmatpush2.msra.mxu0 0.0
    %489 = vmatprep.subr.mxu0 0.0
    %490 = vmatpush2.msra.mxu0 0.0
    %491 = vmatprep.subr.mxu0 0.0
    %492 = vmatpush2.msra.mxu0 0.0
    %493 = vmatprep.subr.mxu0 0.0
    %494 = vmatpush2.msra.mxu0 0.0
    %495 = vmatprep.subr.mxu0 0.0
    %496 = vmatpush2.msra.mxu0 0.0
    %497 = vmatprep.subr.mxu0 0.0
    %498 = vmatpush2.msra.mxu0 0.0
    %499 = vmatprep.mubr.f32.mxu0 0.0
    %v500 = vand.u32 %v106, 4294901760
    %501 = vmatmul.mubr.f32.gmra.mxu0 %v500
    %v502 = vpop.f32.mrf.mxu0
    %v503 = vadd.f32 %v260, %v502
    %v504 = vpop.f32.mrf.mxu0
    %v505 = vadd.f32 %v262, %v504
    %506 = vmatprep.mubr.f32.mxu0 0.0
    %v507 = vand.u32 %v107, 4294901760
    %508 = vmatmul.mubr.f32.gmra.mxu0 %v507
    %v509 = vpop.f32.mrf.mxu0
    %v510 = vadd.f32 %v271, %v509
    %v511 = vpop.f32.mrf.mxu0
    %v512 = vadd.f32 %v273, %v511
    %513 = vdwg.mxu0
    %v514 = vand.u32 %v154, 4294901760
    %v515 = vsub.f32 %v154, %v514
    %516 = vmatprep.subr.mxu0 %v515
    %v517 = vand.u32 %v153, 4294901760
    %v518 = vsub.f32 %v153, %v517
    %519 = vmatpush1.msra.mxu0 %v518
    %v520 = vand.u32 %v151, 4294901760
    %v521 = vsub.f32 %v151, %v520
    %522 = vmatprep.subr.mxu0 %v521
    %v523 = vand.u32 %v150, 4294901760
    %v524 = vsub.f32 %v150, %v523
    %525 = vmatpush1.msra.mxu0 %v524
    %v526 = vand.u32 %v148, 4294901760
    %v527 = vsub.f32 %v148, %v526
    %528 = vmatprep.subr.mxu0 %v527
    %v529 = vand.u32 %v147, 4294901760
    %v530 = vsub.f32 %v147, %v529
    %531 = vmatpush1.msra.mxu0 %v530
    %v532 = vand.u32 %v145, 4294901760
    %v533 = vsub.f32 %v145, %v532
    %534 = vmatprep.subr.mxu0 %v533
    %v535 = vand.u32 %v144, 4294901760
    %v536 = vsub.f32 %v144, %v535
    %537 = vmatpush1.msra.mxu0 %v536
    %v538 = vand.u32 %v142, 4294901760
    %v539 = vsub.f32 %v142, %v538
    %540 = vmatprep.subr.mxu0 %v539
    %v541 = vand.u32 %v141, 4294901760
    %v542 = vsub.f32 %v141, %v541
    %543 = vmatpush1.msra.mxu0 %v542
    %v544 = vand.u32 %v139, 4294901760
    %v545 = vsub.f32 %v139, %v544
    %546 = vmatprep.subr.mxu0 %v545
    %v547 = vand.u32 %v138, 4294901760
    %v548 = vsub.f32 %v138, %v547
    %549 = vmatpush1.msra.mxu0 %v548
    %v550 = vand.u32 %v136, 4294901760
    %v551 = vsub.f32 %v136, %v550
    %552 = vmatprep.subr.mxu0 %v551
    %v553 = vand.u32 %v135, 4294901760
    %v554 = vsub.f32 %v135, %v553
    %555 = vmatpush1.msra.mxu0 %v554
    %v556 = vand.u32 %v133, 4294901760
    %v557 = vsub.f32 %v133, %v556
    %558 = vmatprep.subr.mxu0 %v557
    %v559 = vand.u32 %v132, 4294901760
    %v560 = vsub.f32 %v132, %v559
    %561 = vmatpush1.msra.mxu0 %v560
    %v562 = vand.u32 %v130, 4294901760
    %v563 = vsub.f32 %v130, %v562
    %564 = vmatprep.subr.mxu0 %v563
    %v565 = vand.u32 %v129, 4294901760
    %v566 = vsub.f32 %v129, %v565
    %567 = vmatpush1.msra.mxu0 %v566
    %v568 = vand.u32 %v127, 4294901760
    %v569 = vsub.f32 %v127, %v568
    %570 = vmatprep.subr.mxu0 %v569
    %v571 = vand.u32 %v126, 4294901760
    %v572 = vsub.f32 %v126, %v571
    %573 = vmatpush1.msra.mxu0 %v572
    %v574 = vand.u32 %v124, 4294901760
    %v575 = vsub.f32 %v124, %v574
    %576 = vmatprep.subr.mxu0 %v575
    %v577 = vand.u32 %v123, 4294901760
    %v578 = vsub.f32 %v123, %v577
    %579 = vmatpush1.msra.mxu0 %v578
    %v580 = vand.u32 %v121, 4294901760
    %v581 = vsub.f32 %v121, %v580
    %582 = vmatprep.subr.mxu0 %v581
    %v583 = vand.u32 %v120, 4294901760
    %v584 = vsub.f32 %v120, %v583
    %585 = vmatpush1.msra.mxu0 %v584
    %v586 = vand.u32 %v118, 4294901760
    %v587 = vsub.f32 %v118, %v586
    %588 = vmatprep.subr.mxu0 %v587
    %v589 = vand.u32 %v117, 4294901760
    %v590 = vsub.f32 %v117, %v589
    %591 = vmatpush1.msra.mxu0 %v590
    %v592 = vand.u32 %v115, 4294901760
    %v593 = vsub.f32 %v115, %v592
    %594 = vmatprep.subr.mxu0 %v593
    %v595 = vand.u32 %v114, 4294901760
    %v596 = vsub.f32 %v114, %v595
    %597 = vmatpush1.msra.mxu0 %v596
    %v598 = vand.u32 %v112, 4294901760
    %v599 = vsub.f32 %v112, %v598
    %600 = vmatprep.subr.mxu0 %v599
    %v601 = vand.u32 %v111, 4294901760
    %v602 = vsub.f32 %v111, %v601
    %603 = vmatpush1.msra.mxu0 %v602
    %v604 = vand.u32 %v109, 4294901760
    %v605 = vsub.f32 %v109, %v604
    %606 = vmatprep.subr.mxu0 %v605
    %v607 = vand.u32 %v108, 4294901760
    %v608 = vsub.f32 %v108, %v607
    %609 = vmatpush1.msra.mxu0 %v608
    %610 = vmatprep.subr.mxu0 0.0
    %611 = vmatpush2.msra.mxu0 0.0
    %612 = vmatprep.subr.mxu0 0.0
    %613 = vmatpush2.msra.mxu0 0.0
    %614 = vmatprep.subr.mxu0 0.0
    %615 = vmatpush2.msra.mxu0 0.0
    %616 = vmatprep.subr.mxu0 0.0
    %617 = vmatpush2.msra.mxu0 0.0
    %618 = vmatprep.subr.mxu0 0.0
    %619 = vmatpush2.msra.mxu0 0.0
    %620 = vmatprep.subr.mxu0 0.0
    %621 = vmatpush2.msra.mxu0 0.0
    %622 = vmatprep.subr.mxu0 0.0
    %623 = vmatpush2.msra.mxu0 0.0
    %624 = vmatprep.subr.mxu0 0.0
    %625 = vmatpush2.msra.mxu0 0.0
    %626 = vmatprep.subr.mxu0 0.0
    %627 = vmatpush2.msra.mxu0 0.0
    %628 = vmatprep.subr.mxu0 0.0
    %629 = vmatpush2.msra.mxu0 0.0
    %630 = vmatprep.subr.mxu0 0.0
    %631 = vmatpush2.msra.mxu0 0.0
    %632 = vmatprep.subr.mxu0 0.0
    %633 = vmatpush2.msra.mxu0 0.0
    %634 = vmatprep.subr.mxu0 0.0
    %635 = vmatpush2.msra.mxu0 0.0
    %636 = vmatprep.subr.mxu0 0.0
    %637 = vmatpush2.msra.mxu0 0.0
    %638 = vmatprep.subr.mxu0 0.0
    %639 = vmatpush2.msra.mxu0 0.0
    %640 = vmatprep.subr.mxu0 0.0
    %641 = vmatpush2.msra.mxu0 0.0
    %642 = vmatprep.mubr.f32.mxu0 0.0
    %v643 = vand.u32 %v106, 4294901760
    %v644 = vsub.f32 %v106, %v643
    %645 = vmatmul.mubr.f32.gmra.mxu0 %v644
    %v646 = vpop.f32.mrf.mxu0
    %v647 = vadd.f32 %v503, %v646
    %v648 = vpop.f32.mrf.mxu0
    %v649 = vadd.f32 %v505, %v648
    %650 = vmatprep.mubr.f32.mxu0 0.0
    %v651 = vand.u32 %v107, 4294901760
    %v652 = vsub.f32 %v107, %v651
    %653 = vmatmul.mubr.f32.gmra.mxu0 %v652
    %v654 = vpop.f32.mrf.mxu0
    %v655 = vadd.f32 %v510, %v654
    %v656 = vpop.f32.mrf.mxu0
    %v657 = vadd.f32 %v512, %v656
    %658 = vdwg.mxu0
    %v659 = vand.u32 %v154, 4294901760
    %660 = vmatprep.subr.mxu0 %v659
    %v661 = vand.u32 %v153, 4294901760
    %662 = vmatpush1.msra.mxu0 %v661
    %v663 = vand.u32 %v151, 4294901760
    %664 = vmatprep.subr.mxu0 %v663
    %v665 = vand.u32 %v150, 4294901760
    %666 = vmatpush1.msra.mxu0 %v665
    %v667 = vand.u32 %v148, 4294901760
    %668 = vmatprep.subr.mxu0 %v667
    %v669 = vand.u32 %v147, 4294901760
    %670 = vmatpush1.msra.mxu0 %v669
    %v671 = vand.u32 %v145, 4294901760
    %672 = vmatprep.subr.mxu0 %v671
    %v673 = vand.u32 %v144, 4294901760
    %674 = vmatpush1.msra.mxu0 %v673
    %v675 = vand.u32 %v142, 4294901760
    %676 = vmatprep.subr.mxu0 %v675
    %v677 = vand.u32 %v141, 4294901760
    %678 = vmatpush1.msra.mxu0 %v677
    %v679 = vand.u32 %v139, 4294901760
    %680 = vmatprep.subr.mxu0 %v679
    %v681 = vand.u32 %v138, 4294901760
    %682 = vmatpush1.msra.mxu0 %v681
    %v683 = vand.u32 %v136, 4294901760
    %684 = vmatprep.subr.mxu0 %v683
    %v685 = vand.u32 %v135, 4294901760
    %686 = vmatpush1.msra.mxu0 %v685
    %v687 = vand.u32 %v133, 4294901760
    %688 = vmatprep.subr.mxu0 %v687
    %v689 = vand.u32 %v132, 4294901760
    %690 = vmatpush1.msra.mxu0 %v689
    %v691 = vand.u32 %v130, 4294901760
    %692 = vmatprep.subr.mxu0 %v691
    %v693 = vand.u32 %v129, 4294901760
    %694 = vmatpush1.msra.mxu0 %v693
    %v695 = vand.u32 %v127, 4294901760
    %696 = vmatprep.subr.mxu0 %v695
    %v697 = vand.u32 %v126, 4294901760
    %698 = vmatpush1.msra.mxu0 %v697
    %v699 = vand.u32 %v124, 4294901760
    %700 = vmatprep.subr.mxu0 %v699
    %v701 = vand.u32 %v123, 4294901760
    %702 = vmatpush1.msra.mxu0 %v701
    %v703 = vand.u32 %v121, 4294901760
    %704 = vmatprep.subr.mxu0 %v703
    %v705 = vand.u32 %v120, 4294901760
    %706 = vmatpush1.msra.mxu0 %v705
    %v707 = vand.u32 %v118, 4294901760
    %708 = vmatprep.subr.mxu0 %v707
    %v709 = vand.u32 %v117, 4294901760
    %710 = vmatpush1.msra.mxu0 %v709
    %v711 = vand.u32 %v115, 4294901760
    %712 = vmatprep.subr.mxu0 %v711
    %v713 = vand.u32 %v114, 4294901760
    %714 = vmatpush1.msra.mxu0 %v713
    %v715 = vand.u32 %v112, 4294901760
    %716 = vmatprep.subr.mxu0 %v715
    %v717 = vand.u32 %v111, 4294901760
    %718 = vmatpush1.msra.mxu0 %v717
    %v719 = vand.u32 %v109, 4294901760
    %720 = vmatprep.subr.mxu0 %v719
    %v721 = vand.u32 %v108, 4294901760
    %722 = vmatpush1.msra.mxu0 %v721
    %723 = vmatprep.subr.mxu0 0.0
    %724 = vmatpush2.msra.mxu0 0.0
    %725 = vmatprep.subr.mxu0 0.0
    %726 = vmatpush2.msra.mxu0 0.0
    %727 = vmatprep.subr.mxu0 0.0
    %728 = vmatpush2.msra.mxu0 0.0
    %729 = vmatprep.subr.mxu0 0.0
    %730 = vmatpush2.msra.mxu0 0.0
    %731 = vmatprep.subr.mxu0 0.0
    %732 = vmatpush2.msra.mxu0 0.0
    %733 = vmatprep.subr.mxu0 0.0
    %734 = vmatpush2.msra.mxu0 0.0
    %735 = vmatprep.subr.mxu0 0.0
    %736 = vmatpush2.msra.mxu0 0.0
    %737 = vmatprep.subr.mxu0 0.0
    %738 = vmatpush2.msra.mxu0 0.0
    %739 = vmatprep.subr.mxu0 0.0
    %740 = vmatpush2.msra.mxu0 0.0
    %741 = vmatprep.subr.mxu0 0.0
    %742 = vmatpush2.msra.mxu0 0.0
    %743 = vmatprep.subr.mxu0 0.0
    %744 = vmatpush2.msra.mxu0 0.0
    %745 = vmatprep.subr.mxu0 0.0
    %746 = vmatpush2.msra.mxu0 0.0
    %747 = vmatprep.subr.mxu0 0.0
    %748 = vmatpush2.msra.mxu0 0.0
    %749 = vmatprep.subr.mxu0 0.0
    %750 = vmatpush2.msra.mxu0 0.0
    %751 = vmatprep.subr.mxu0 0.0
    %752 = vmatpush2.msra.mxu0 0.0
    %753 = vmatprep.subr.mxu0 0.0
    %754 = vmatpush2.msra.mxu0 0.0
    %755 = vmatprep.mubr.f32.mxu0 0.0
    %v756 = vand.u32 %v106, 4294901760
    %v757 = vsub.f32 %v106, %v756
    %v758 = vand.u32 %v757, 4294901760
    %759 = vmatmul.mubr.f32.gmra.mxu0 %v758
    %v760 = vpop.f32.mrf.mxu0
    %v761 = vadd.f32 %v647, %v760
    %v762 = vpop.f32.mrf.mxu0
    %v763 = vadd.f32 %v649, %v762
    %764 = vmatprep.mubr.f32.mxu0 0.0
    %v765 = vand.u32 %v107, 4294901760
    %v766 = vsub.f32 %v107, %v765
    %v767 = vand.u32 %v766, 4294901760
    %768 = vmatmul.mubr.f32.gmra.mxu0 %v767
    %v769 = vpop.f32.mrf.mxu0
    %v770 = vadd.f32 %v655, %v769
    %v771 = vpop.f32.mrf.mxu0
    %v772 = vadd.f32 %v657, %v771
    %773 = vdwg.mxu0
    %v774 = vand.u32 %v154, 4294901760
    %v775 = vsub.f32 %v154, %v774
    %v776 = vand.u32 %v775, 4294901760
    %777 = vmatprep.subr.mxu0 %v776
    %v778 = vand.u32 %v153, 4294901760
    %v779 = vsub.f32 %v153, %v778
    %v780 = vand.u32 %v779, 4294901760
    %781 = vmatpush1.msra.mxu0 %v780
    %v782 = vand.u32 %v151, 4294901760
    %v783 = vsub.f32 %v151, %v782
    %v784 = vand.u32 %v783, 4294901760
    %785 = vmatprep.subr.mxu0 %v784
    %v786 = vand.u32 %v150, 4294901760
    %v787 = vsub.f32 %v150, %v786
    %v788 = vand.u32 %v787, 4294901760
    %789 = vmatpush1.msra.mxu0 %v788
    %v790 = vand.u32 %v148, 4294901760
    %v791 = vsub.f32 %v148, %v790
    %v792 = vand.u32 %v791, 4294901760
    %793 = vmatprep.subr.mxu0 %v792
    %v794 = vand.u32 %v147, 4294901760
    %v795 = vsub.f32 %v147, %v794
    %v796 = vand.u32 %v795, 4294901760
    %797 = vmatpush1.msra.mxu0 %v796
    %v798 = vand.u32 %v145, 4294901760
    %v799 = vsub.f32 %v145, %v798
    %v800 = vand.u32 %v799, 4294901760
    %801 = vmatprep.subr.mxu0 %v800
    %v802 = vand.u32 %v144, 4294901760
    %v803 = vsub.f32 %v144, %v802
    %v804 = vand.u32 %v803, 4294901760
    %805 = vmatpush1.msra.mxu0 %v804
    %v806 = vand.u32 %v142, 4294901760
    %v807 = vsub.f32 %v142, %v806
    %v808 = vand.u32 %v807, 4294901760
    %809 = vmatprep.subr.mxu0 %v808
    %v810 = vand.u32 %v141, 4294901760
    %v811 = vsub.f32 %v141, %v810
    %v812 = vand.u32 %v811, 4294901760
    %813 = vmatpush1.msra.mxu0 %v812
    %v814 = vand.u32 %v139, 4294901760
    %v815 = vsub.f32 %v139, %v814
    %v816 = vand.u32 %v815, 4294901760
    %817 = vmatprep.subr.mxu0 %v816
    %v818 = vand.u32 %v138, 4294901760
    %v819 = vsub.f32 %v138, %v818
    %v820 = vand.u32 %v819, 4294901760
    %821 = vmatpush1.msra.mxu0 %v820
    %v822 = vand.u32 %v136, 4294901760
    %v823 = vsub.f32 %v136, %v822
    %v824 = vand.u32 %v823, 4294901760
    %825 = vmatprep.subr.mxu0 %v824
    %v826 = vand.u32 %v135, 4294901760
    %v827 = vsub.f32 %v135, %v826
    %v828 = vand.u32 %v827, 4294901760
    %829 = vmatpush1.msra.mxu0 %v828
    %v830 = vand.u32 %v133, 4294901760
    %v831 = vsub.f32 %v133, %v830
    %v832 = vand.u32 %v831, 4294901760
    %833 = vmatprep.subr.mxu0 %v832
    %v834 = vand.u32 %v132, 4294901760
    %v835 = vsub.f32 %v132, %v834
    %v836 = vand.u32 %v835, 4294901760
    %837 = vmatpush1.msra.mxu0 %v836
    %v838 = vand.u32 %v130, 4294901760
    %v839 = vsub.f32 %v130, %v838
    %v840 = vand.u32 %v839, 4294901760
    %841 = vmatprep.subr.mxu0 %v840
    %v842 = vand.u32 %v129, 4294901760
    %v843 = vsub.f32 %v129, %v842
    %v844 = vand.u32 %v843, 4294901760
    %845 = vmatpush1.msra.mxu0 %v844
    %v846 = vand.u32 %v127, 4294901760
    %v847 = vsub.f32 %v127, %v846
    %v848 = vand.u32 %v847, 4294901760
    %849 = vmatprep.subr.mxu0 %v848
    %v850 = vand.u32 %v126, 4294901760
    %v851 = vsub.f32 %v126, %v850
    %v852 = vand.u32 %v851, 4294901760
    %853 = vmatpush1.msra.mxu0 %v852
    %v854 = vand.u32 %v124, 4294901760
    %v855 = vsub.f32 %v124, %v854
    %v856 = vand.u32 %v855, 4294901760
    %857 = vmatprep.subr.mxu0 %v856
    %v858 = vand.u32 %v123, 4294901760
    %v859 = vsub.f32 %v123, %v858
    %v860 = vand.u32 %v859, 4294901760
    %861 = vmatpush1.msra.mxu0 %v860
    %v862 = vand.u32 %v121, 4294901760
    %v863 = vsub.f32 %v121, %v862
    %v864 = vand.u32 %v863, 4294901760
    %865 = vmatprep.subr.mxu0 %v864
    %v866 = vand.u32 %v120, 4294901760
    %v867 = vsub.f32 %v120, %v866
    %v868 = vand.u32 %v867, 4294901760
    %869 = vmatpush1.msra.mxu0 %v868
    %v870 = vand.u32 %v118, 4294901760
    %v871 = vsub.f32 %v118, %v870
    %v872 = vand.u32 %v871, 4294901760
    %873 = vmatprep.subr.mxu0 %v872
    %v874 = vand.u32 %v117, 4294901760
    %v875 = vsub.f32 %v117, %v874
    %v876 = vand.u32 %v875, 4294901760
    %877 = vmatpush1.msra.mxu0 %v876
    %v878 = vand.u32 %v115, 4294901760
    %v879 = vsub.f32 %v115, %v878
    %v880 = vand.u32 %v879, 4294901760
    %881 = vmatprep.subr.mxu0 %v880
    %v882 = vand.u32 %v114, 4294901760
    %v883 = vsub.f32 %v114, %v882
    %v884 = vand.u32 %v883, 4294901760
    %885 = vmatpush1.msra.mxu0 %v884
    %v886 = vand.u32 %v112, 4294901760
    %v887 = vsub.f32 %v112, %v886
    %v888 = vand.u32 %v887, 4294901760
    %889 = vmatprep.subr.mxu0 %v888
    %v890 = vand.u32 %v111, 4294901760
    %v891 = vsub.f32 %v111, %v890
    %v892 = vand.u32 %v891, 4294901760
    %893 = vmatpush1.msra.mxu0 %v892
    %v894 = vand.u32 %v109, 4294901760
    %v895 = vsub.f32 %v109, %v894
    %v896 = vand.u32 %v895, 4294901760
    %897 = vmatprep.subr.mxu0 %v896
    %v898 = vand.u32 %v108, 4294901760
    %v899 = vsub.f32 %v108, %v898
    %v900 = vand.u32 %v899, 4294901760
    %901 = vmatpush1.msra.mxu0 %v900
    %902 = vmatprep.subr.mxu0 0.0
    %903 = vmatpush2.msra.mxu0 0.0
    %904 = vmatprep.subr.mxu0 0.0
    %905 = vmatpush2.msra.mxu0 0.0
    %906 = vmatprep.subr.mxu0 0.0
    %907 = vmatpush2.msra.mxu0 0.0
    %908 = vmatprep.subr.mxu0 0.0
    %909 = vmatpush2.msra.mxu0 0.0
    %910 = vmatprep.subr.mxu0 0.0
    %911 = vmatpush2.msra.mxu0 0.0
    %912 = vmatprep.subr.mxu0 0.0
    %913 = vmatpush2.msra.mxu0 0.0
    %914 = vmatprep.subr.mxu0 0.0
    %915 = vmatpush2.msra.mxu0 0.0
    %916 = vmatprep.subr.mxu0 0.0
    %917 = vmatpush2.msra.mxu0 0.0
    %918 = vmatprep.subr.mxu0 0.0
    %919 = vmatpush2.msra.mxu0 0.0
    %920 = vmatprep.subr.mxu0 0.0
    %921 = vmatpush2.msra.mxu0 0.0
    %922 = vmatprep.subr.mxu0 0.0
    %923 = vmatpush2.msra.mxu0 0.0
    %924 = vmatprep.subr.mxu0 0.0
    %925 = vmatpush2.msra.mxu0 0.0
    %926 = vmatprep.subr.mxu0 0.0
    %927 = vmatpush2.msra.mxu0 0.0
    %928 = vmatprep.subr.mxu0 0.0
    %929 = vmatpush2.msra.mxu0 0.0
    %930 = vmatprep.subr.mxu0 0.0
    %931 = vmatpush2.msra.mxu0 0.0
    %932 = vmatprep.subr.mxu0 0.0
    %933 = vmatpush2.msra.mxu0 0.0
    %934 = vmatprep.mubr.f32.mxu0 0.0
    %v935 = vand.u32 %v106, 4294901760
    %936 = vmatmul.mubr.f32.gmra.mxu0 %v935
    %v937 = vpop.f32.mrf.mxu0
    %v938 = vadd.f32 %v761, %v937
    %v939 = vpop.f32.mrf.mxu0
    %v940 = vadd.f32 %v763, %v939
    %941 = vmatprep.mubr.f32.mxu0 0.0
    %v942 = vand.u32 %v107, 4294901760
    %943 = vmatmul.mubr.f32.gmra.mxu0 %v942
    %v944 = vpop.f32.mrf.mxu0
    %v945 = vadd.f32 %v770, %v944
    %v946 = vpop.f32.mrf.mxu0
    %v947 = vadd.f32 %v772, %v946
    %948 = vdwg.mxu0
    %v949 = vand.u32 %v154, 4294901760
    %950 = vmatprep.subr.mxu0 %v949
    %v951 = vand.u32 %v153, 4294901760
    %952 = vmatpush1.msra.mxu0 %v951
    %v953 = vand.u32 %v151, 4294901760
    %954 = vmatprep.subr.mxu0 %v953
    %v955 = vand.u32 %v150, 4294901760
    %956 = vmatpush1.msra.mxu0 %v955
    %v957 = vand.u32 %v148, 4294901760
    %958 = vmatprep.subr.mxu0 %v957
    %v959 = vand.u32 %v147, 4294901760
    %960 = vmatpush1.msra.mxu0 %v959
    %v961 = vand.u32 %v145, 4294901760
    %962 = vmatprep.subr.mxu0 %v961
    %v963 = vand.u32 %v144, 4294901760
    %964 = vmatpush1.msra.mxu0 %v963
    %v965 = vand.u32 %v142, 4294901760
    %966 = vmatprep.subr.mxu0 %v965
    %v967 = vand.u32 %v141, 4294901760
    %968 = vmatpush1.msra.mxu0 %v967
    %v969 = vand.u32 %v139, 4294901760
    %970 = vmatprep.subr.mxu0 %v969
    %v971 = vand.u32 %v138, 4294901760
    %972 = vmatpush1.msra.mxu0 %v971
    %v973 = vand.u32 %v136, 4294901760
    %974 = vmatprep.subr.mxu0 %v973
    %v975 = vand.u32 %v135, 4294901760
    %976 = vmatpush1.msra.mxu0 %v975
    %v977 = vand.u32 %v133, 4294901760
    %978 = vmatprep.subr.mxu0 %v977
    %v979 = vand.u32 %v132, 4294901760
    %980 = vmatpush1.msra.mxu0 %v979
    %v981 = vand.u32 %v130, 4294901760
    %982 = vmatprep.subr.mxu0 %v981
    %v983 = vand.u32 %v129, 4294901760
    %984 = vmatpush1.msra.mxu0 %v983
    %v985 = vand.u32 %v127, 4294901760
    %986 = vmatprep.subr.mxu0 %v985
    %v987 = vand.u32 %v126, 4294901760
    %988 = vmatpush1.msra.mxu0 %v987
    %v989 = vand.u32 %v124, 4294901760
    %990 = vmatprep.subr.mxu0 %v989
    %v991 = vand.u32 %v123, 4294901760
    %992 = vmatpush1.msra.mxu0 %v991
    %v993 = vand.u32 %v121, 4294901760
    %994 = vmatprep.subr.mxu0 %v993
    %v995 = vand.u32 %v120, 4294901760
    %996 = vmatpush1.msra.mxu0 %v995
    %v997 = vand.u32 %v118, 4294901760
    %998 = vmatprep.subr.mxu0 %v997
    %v999 = vand.u32 %v117, 4294901760
    %1000 = vmatpush1.msra.mxu0 %v999
    %v1001 = vand.u32 %v115, 4294901760
    %1002 = vmatprep.subr.mxu0 %v1001
    %v1003 = vand.u32 %v114, 4294901760
    %1004 = vmatpush1.msra.mxu0 %v1003
    %v1005 = vand.u32 %v112, 4294901760
    %1006 = vmatprep.subr.mxu0 %v1005
    %v1007 = vand.u32 %v111, 4294901760
    %1008 = vmatpush1.msra.mxu0 %v1007
    %v1009 = vand.u32 %v109, 4294901760
    %1010 = vmatprep.subr.mxu0 %v1009
    %v1011 = vand.u32 %v108, 4294901760
    %1012 = vmatpush1.msra.mxu0 %v1011
    %1013 = vmatprep.subr.mxu0 0.0
    %1014 = vmatpush2.msra.mxu0 0.0
    %1015 = vmatprep.subr.mxu0 0.0
    %1016 = vmatpush2.msra.mxu0 0.0
    %1017 = vmatprep.subr.mxu0 0.0
    %1018 = vmatpush2.msra.mxu0 0.0
    %1019 = vmatprep.subr.mxu0 0.0
    %1020 = vmatpush2.msra.mxu0 0.0
    %1021 = vmatprep.subr.mxu0 0.0
    %1022 = vmatpush2.msra.mxu0 0.0
    %1023 = vmatprep.subr.mxu0 0.0
    %1024 = vmatpush2.msra.mxu0 0.0
    %1025 = vmatprep.subr.mxu0 0.0
    %1026 = vmatpush2.msra.mxu0 0.0
    %1027 = vmatprep.subr.mxu0 0.0
    %1028 = vmatpush2.msra.mxu0 0.0
    %1029 = vmatprep.subr.mxu0 0.0
    %1030 = vmatpush2.msra.mxu0 0.0
    %1031 = vmatprep.subr.mxu0 0.0
    %1032 = vmatpush2.msra.mxu0 0.0
    %1033 = vmatprep.subr.mxu0 0.0
    %1034 = vmatpush2.msra.mxu0 0.0
    %1035 = vmatprep.subr.mxu0 0.0
    %1036 = vmatpush2.msra.mxu0 0.0
    %1037 = vmatprep.subr.mxu0 0.0
    %1038 = vmatpush2.msra.mxu0 0.0
    %1039 = vmatprep.subr.mxu0 0.0
    %1040 = vmatpush2.msra.mxu0 0.0
    %1041 = vmatprep.subr.mxu0 0.0
    %1042 = vmatpush2.msra.mxu0 0.0
    %1043 = vmatprep.subr.mxu0 0.0
    %1044 = vmatpush2.msra.mxu0 0.0
    %1045 = vmatprep.mubr.f32.mxu0 0.0
    %v1046 = vand.u32 %v106, 4294901760
    %1047 = vmatmul.mubr.f32.gmra.mxu0 %v1046
    %v1048 = vpop.f32.mrf.mxu0
    %v1049 = vadd.f32 %v938, %v1048
    %v1050 = vpop.f32.mrf.mxu0
    %v1051 = vadd.f32 %v940, %v1050
    %1052 = vmatprep.mubr.f32.mxu0 0.0
    %v1053 = vand.u32 %v107, 4294901760
    %1054 = vmatmul.mubr.f32.gmra.mxu0 %v1053
    %v1055 = vpop.f32.mrf.mxu0
    %v1056 = vadd.f32 %v945, %v1055
    %v1057 = vpop.f32.mrf.mxu0
    %v1058 = vadd.f32 %v947, %v1057
    %1059 = vdwg.mxu0
    %1060 = vmatprep.subr.mxu0 0.0
    %v1061 = vand.u32 %v155, 4294901760
    %1062 = vmatpush1.msra.mxu0 %v1061
    %1063 = vmatprep.subr.mxu0 0.0
    %v1064 = vand.u32 %v152, 4294901760
    %1065 = vmatpush1.msra.mxu0 %v1064
    %1066 = vmatprep.subr.mxu0 0.0
    %v1067 = vand.u32 %v149, 4294901760
    %1068 = vmatpush1.msra.mxu0 %v1067
    %1069 = vmatprep.subr.mxu0 0.0
    %v1070 = vand.u32 %v146, 4294901760
    %1071 = vmatpush1.msra.mxu0 %v1070
    %1072 = vmatprep.subr.mxu0 0.0
    %v1073 = vand.u32 %v143, 4294901760
    %1074 = vmatpush1.msra.mxu0 %v1073
    %1075 = vmatprep.subr.mxu0 0.0
    %v1076 = vand.u32 %v140, 4294901760
    %1077 = vmatpush1.msra.mxu0 %v1076
    %1078 = vmatprep.subr.mxu0 0.0
    %v1079 = vand.u32 %v137, 4294901760
    %1080 = vmatpush1.msra.mxu0 %v1079
    %1081 = vmatprep.subr.mxu0 0.0
    %v1082 = vand.u32 %v134, 4294901760
    %1083 = vmatpush1.msra.mxu0 %v1082
    %1084 = vmatprep.subr.mxu0 0.0
    %v1085 = vand.u32 %v131, 4294901760
    %1086 = vmatpush1.msra.mxu0 %v1085
    %1087 = vmatprep.subr.mxu0 0.0
    %v1088 = vand.u32 %v128, 4294901760
    %1089 = vmatpush1.msra.mxu0 %v1088
    %1090 = vmatprep.subr.mxu0 0.0
    %v1091 = vand.u32 %v125, 4294901760
    %1092 = vmatpush1.msra.mxu0 %v1091
    %1093 = vmatprep.subr.mxu0 0.0
    %v1094 = vand.u32 %v122, 4294901760
    %1095 = vmatpush1.msra.mxu0 %v1094
    %1096 = vmatprep.subr.mxu0 0.0
    %v1097 = vand.u32 %v119, 4294901760
    %1098 = vmatpush1.msra.mxu0 %v1097
    %1099 = vmatprep.subr.mxu0 0.0
    %v1100 = vand.u32 %v116, 4294901760
    %1101 = vmatpush1.msra.mxu0 %v1100
    %1102 = vmatprep.subr.mxu0 0.0
    %v1103 = vand.u32 %v113, 4294901760
    %1104 = vmatpush1.msra.mxu0 %v1103
    %1105 = vmatprep.subr.mxu0 0.0
    %v1106 = vand.u32 %v110, 4294901760
    %1107 = vmatpush1.msra.mxu0 %v1106
    %1108 = vmatprep.subr.mxu0 0.0
    %1109 = vmatpush2.msra.mxu0 0.0
    %1110 = vmatprep.subr.mxu0 0.0
    %1111 = vmatpush2.msra.mxu0 0.0
    %1112 = vmatprep.subr.mxu0 0.0
    %1113 = vmatpush2.msra.mxu0 0.0
    %1114 = vmatprep.subr.mxu0 0.0
    %1115 = vmatpush2.msra.mxu0 0.0
    %1116 = vmatprep.subr.mxu0 0.0
    %1117 = vmatpush2.msra.mxu0 0.0
    %1118 = vmatprep.subr.mxu0 0.0
    %1119 = vmatpush2.msra.mxu0 0.0
    %1120 = vmatprep.subr.mxu0 0.0
    %1121 = vmatpush2.msra.mxu0 0.0
    %1122 = vmatprep.subr.mxu0 0.0
    %1123 = vmatpush2.msra.mxu0 0.0
    %1124 = vmatprep.subr.mxu0 0.0
    %1125 = vmatpush2.msra.mxu0 0.0
    %1126 = vmatprep.subr.mxu0 0.0
    %1127 = vmatpush2.msra.mxu0 0.0
    %1128 = vmatprep.subr.mxu0 0.0
    %1129 = vmatpush2.msra.mxu0 0.0
    %1130 = vmatprep.subr.mxu0 0.0
    %1131 = vmatpush2.msra.mxu0 0.0
    %1132 = vmatprep.subr.mxu0 0.0
    %1133 = vmatpush2.msra.mxu0 0.0
    %1134 = vmatprep.subr.mxu0 0.0
    %1135 = vmatpush2.msra.mxu0 0.0
    %1136 = vmatprep.subr.mxu0 0.0
    %1137 = vmatpush2.msra.mxu0 0.0
    %1138 = vmatprep.subr.mxu0 0.0
    %1139 = vmatpush2.msra.mxu0 0.0
    %1140 = vmatprep.mubr.f32.mxu0 0.0
    %v1141 = vand.u32 %v106, 4294901760
    %v1142 = vsub.f32 %v106, %v1141
    %v1143 = vand.u32 %v1142, 4294901760
    %v1144 = vsub.f32 %v1142, %v1143
    %v1145 = vand.u32 %v1144, 4294901760
    %1146 = vmatmul.mubr.f32.gmra.mxu0 %v1145
    %v1147 = vpop.f32.mrf.mxu0
    %v1148 = vadd.f32 0.0, %v1147
    %v1149 = vpop.f32.mrf.mxu0
    %1150 = vmatprep.mubr.f32.mxu0 0.0
    %v1151 = vand.u32 %v107, 4294901760
    %v1152 = vsub.f32 %v107, %v1151
    %v1153 = vand.u32 %v1152, 4294901760
    %v1154 = vsub.f32 %v1152, %v1153
    %v1155 = vand.u32 %v1154, 4294901760
    %1156 = vmatmul.mubr.f32.gmra.mxu0 %v1155
    %v1157 = vpop.f32.mrf.mxu0
    %v1158 = vadd.f32 0.0, %v1157
    %v1159 = vpop.f32.mrf.mxu0
    %1160 = vdwg.mxu0
    %1161 = vmatprep.subr.mxu0 0.0
    %v1162 = vand.u32 %v155, 4294901760
    %v1163 = vsub.f32 %v155, %v1162
    %v1164 = vand.u32 %v1163, 4294901760
    %v1165 = vsub.f32 %v1163, %v1164
    %v1166 = vand.u32 %v1165, 4294901760
    %1167 = vmatpush1.msra.mxu0 %v1166
    %1168 = vmatprep.subr.mxu0 0.0
    %v1169 = vand.u32 %v152, 4294901760
    %v1170 = vsub.f32 %v152, %v1169
    %v1171 = vand.u32 %v1170, 4294901760
    %v1172 = vsub.f32 %v1170, %v1171
    %v1173 = vand.u32 %v1172, 4294901760
    %1174 = vmatpush1.msra.mxu0 %v1173
    %1175 = vmatprep.subr.mxu0 0.0
    %v1176 = vand.u32 %v149, 4294901760
    %v1177 = vsub.f32 %v149, %v1176
    %v1178 = vand.u32 %v1177, 4294901760
    %v1179 = vsub.f32 %v1177, %v1178
    %v1180 = vand.u32 %v1179, 4294901760
    %1181 = vmatpush1.msra.mxu0 %v1180
    %1182 = vmatprep.subr.mxu0 0.0
    %v1183 = vand.u32 %v146, 4294901760
    %v1184 = vsub.f32 %v146, %v1183
    %v1185 = vand.u32 %v1184, 4294901760
    %v1186 = vsub.f32 %v1184, %v1185
    %v1187 = vand.u32 %v1186, 4294901760
    %1188 = vmatpush1.msra.mxu0 %v1187
    %1189 = vmatprep.subr.mxu0 0.0
    %v1190 = vand.u32 %v143, 4294901760
    %v1191 = vsub.f32 %v143, %v1190
    %v1192 = vand.u32 %v1191, 4294901760
    %v1193 = vsub.f32 %v1191, %v1192
    %v1194 = vand.u32 %v1193, 4294901760
    %1195 = vmatpush1.msra.mxu0 %v1194
    %1196 = vmatprep.subr.mxu0 0.0
    %v1197 = vand.u32 %v140, 4294901760
    %v1198 = vsub.f32 %v140, %v1197
    %v1199 = vand.u32 %v1198, 4294901760
    %v1200 = vsub.f32 %v1198, %v1199
    %v1201 = vand.u32 %v1200, 4294901760
    %1202 = vmatpush1.msra.mxu0 %v1201
    %1203 = vmatprep.subr.mxu0 0.0
    %v1204 = vand.u32 %v137, 4294901760
    %v1205 = vsub.f32 %v137, %v1204
    %v1206 = vand.u32 %v1205, 4294901760
    %v1207 = vsub.f32 %v1205, %v1206
    %v1208 = vand.u32 %v1207, 4294901760
    %1209 = vmatpush1.msra.mxu0 %v1208
    %1210 = vmatprep.subr.mxu0 0.0
    %v1211 = vand.u32 %v134, 4294901760
    %v1212 = vsub.f32 %v134, %v1211
    %v1213 = vand.u32 %v1212, 4294901760
    %v1214 = vsub.f32 %v1212, %v1213
    %v1215 = vand.u32 %v1214, 4294901760
    %1216 = vmatpush1.msra.mxu0 %v1215
    %1217 = vmatprep.subr.mxu0 0.0
    %v1218 = vand.u32 %v131, 4294901760
    %v1219 = vsub.f32 %v131, %v1218
    %v1220 = vand.u32 %v1219, 4294901760
    %v1221 = vsub.f32 %v1219, %v1220
    %v1222 = vand.u32 %v1221, 4294901760
    %1223 = vmatpush1.msra.mxu0 %v1222
    %1224 = vmatprep.subr.mxu0 0.0
    %v1225 = vand.u32 %v128, 4294901760
    %v1226 = vsub.f32 %v128, %v1225
    %v1227 = vand.u32 %v1226, 4294901760
    %v1228 = vsub.f32 %v1226, %v1227
    %v1229 = vand.u32 %v1228, 4294901760
    %1230 = vmatpush1.msra.mxu0 %v1229
    %1231 = vmatprep.subr.mxu0 0.0
    %v1232 = vand.u32 %v125, 4294901760
    %v1233 = vsub.f32 %v125, %v1232
    %v1234 = vand.u32 %v1233, 4294901760
    %v1235 = vsub.f32 %v1233, %v1234
    %v1236 = vand.u32 %v1235, 4294901760
    %1237 = vmatpush1.msra.mxu0 %v1236
    %1238 = vmatprep.subr.mxu0 0.0
    %v1239 = vand.u32 %v122, 4294901760
    %v1240 = vsub.f32 %v122, %v1239
    %v1241 = vand.u32 %v1240, 4294901760
    %v1242 = vsub.f32 %v1240, %v1241
    %v1243 = vand.u32 %v1242, 4294901760
    %1244 = vmatpush1.msra.mxu0 %v1243
    %1245 = vmatprep.subr.mxu0 0.0
    %v1246 = vand.u32 %v119, 4294901760
    %v1247 = vsub.f32 %v119, %v1246
    %v1248 = vand.u32 %v1247, 4294901760
    %v1249 = vsub.f32 %v1247, %v1248
    %v1250 = vand.u32 %v1249, 4294901760
    %1251 = vmatpush1.msra.mxu0 %v1250
    %1252 = vmatprep.subr.mxu0 0.0
    %v1253 = vand.u32 %v116, 4294901760
    %v1254 = vsub.f32 %v116, %v1253
    %v1255 = vand.u32 %v1254, 4294901760
    %v1256 = vsub.f32 %v1254, %v1255
    %v1257 = vand.u32 %v1256, 4294901760
    %1258 = vmatpush1.msra.mxu0 %v1257
    %1259 = vmatprep.subr.mxu0 0.0
    %v1260 = vand.u32 %v113, 4294901760
    %v1261 = vsub.f32 %v113, %v1260
    %v1262 = vand.u32 %v1261, 4294901760
    %v1263 = vsub.f32 %v1261, %v1262
    %v1264 = vand.u32 %v1263, 4294901760
    %1265 = vmatpush1.msra.mxu0 %v1264
    %1266 = vmatprep.subr.mxu0 0.0
    %v1267 = vand.u32 %v110, 4294901760
    %v1268 = vsub.f32 %v110, %v1267
    %v1269 = vand.u32 %v1268, 4294901760
    %v1270 = vsub.f32 %v1268, %v1269
    %v1271 = vand.u32 %v1270, 4294901760
    %1272 = vmatpush1.msra.mxu0 %v1271
    %1273 = vmatprep.subr.mxu0 0.0
    %1274 = vmatpush2.msra.mxu0 0.0
    %1275 = vmatprep.subr.mxu0 0.0
    %1276 = vmatpush2.msra.mxu0 0.0
    %1277 = vmatprep.subr.mxu0 0.0
    %1278 = vmatpush2.msra.mxu0 0.0
    %1279 = vmatprep.subr.mxu0 0.0
    %1280 = vmatpush2.msra.mxu0 0.0
    %1281 = vmatprep.subr.mxu0 0.0
    %1282 = vmatpush2.msra.mxu0 0.0
    %1283 = vmatprep.subr.mxu0 0.0
    %1284 = vmatpush2.msra.mxu0 0.0
    %1285 = vmatprep.subr.mxu0 0.0
    %1286 = vmatpush2.msra.mxu0 0.0
    %1287 = vmatprep.subr.mxu0 0.0
    %1288 = vmatpush2.msra.mxu0 0.0
    %1289 = vmatprep.subr.mxu0 0.0
    %1290 = vmatpush2.msra.mxu0 0.0
    %1291 = vmatprep.subr.mxu0 0.0
    %1292 = vmatpush2.msra.mxu0 0.0
    %1293 = vmatprep.subr.mxu0 0.0
    %1294 = vmatpush2.msra.mxu0 0.0
    %1295 = vmatprep.subr.mxu0 0.0
    %1296 = vmatpush2.msra.mxu0 0.0
    %1297 = vmatprep.subr.mxu0 0.0
    %1298 = vmatpush2.msra.mxu0 0.0
    %1299 = vmatprep.subr.mxu0 0.0
    %1300 = vmatpush2.msra.mxu0 0.0
    %1301 = vmatprep.subr.mxu0 0.0
    %1302 = vmatpush2.msra.mxu0 0.0
    %1303 = vmatprep.subr.mxu0 0.0
    %1304 = vmatpush2.msra.mxu0 0.0
    %1305 = vmatprep.mubr.f32.mxu0 0.0
    %v1306 = vand.u32 %v106, 4294901760
    %1307 = vmatmul.mubr.f32.gmra.mxu0 %v1306
    %v1308 = vpop.f32.mrf.mxu0
    %v1309 = vadd.f32 %v1148, %v1308
    %v1310 = vpop.f32.mrf.mxu0
    %1311 = vmatprep.mubr.f32.mxu0 0.0
    %v1312 = vand.u32 %v107, 4294901760
    %1313 = vmatmul.mubr.f32.gmra.mxu0 %v1312
    %v1314 = vpop.f32.mrf.mxu0
    %v1315 = vadd.f32 %v1158, %v1314
    %v1316 = vpop.f32.mrf.mxu0
    %1317 = vdwg.mxu0
    %1318 = vmatprep.subr.mxu0 0.0
    %v1319 = vand.u32 %v155, 4294901760
    %v1320 = vsub.f32 %v155, %v1319
    %1321 = vmatpush1.msra.mxu0 %v1320
    %1322 = vmatprep.subr.mxu0 0.0
    %v1323 = vand.u32 %v152, 4294901760
    %v1324 = vsub.f32 %v152, %v1323
    %1325 = vmatpush1.msra.mxu0 %v1324
    %1326 = vmatprep.subr.mxu0 0.0
    %v1327 = vand.u32 %v149, 4294901760
    %v1328 = vsub.f32 %v149, %v1327
    %1329 = vmatpush1.msra.mxu0 %v1328
    %1330 = vmatprep.subr.mxu0 0.0
    %v1331 = vand.u32 %v146, 4294901760
    %v1332 = vsub.f32 %v146, %v1331
    %1333 = vmatpush1.msra.mxu0 %v1332
    %1334 = vmatprep.subr.mxu0 0.0
    %v1335 = vand.u32 %v143, 4294901760
    %v1336 = vsub.f32 %v143, %v1335
    %1337 = vmatpush1.msra.mxu0 %v1336
    %1338 = vmatprep.subr.mxu0 0.0
    %v1339 = vand.u32 %v140, 4294901760
    %v1340 = vsub.f32 %v140, %v1339
    %1341 = vmatpush1.msra.mxu0 %v1340
    %1342 = vmatprep.subr.mxu0 0.0
    %v1343 = vand.u32 %v137, 4294901760
    %v1344 = vsub.f32 %v137, %v1343
    %1345 = vmatpush1.msra.mxu0 %v1344
    %1346 = vmatprep.subr.mxu0 0.0
    %v1347 = vand.u32 %v134, 4294901760
    %v1348 = vsub.f32 %v134, %v1347
    %1349 = vmatpush1.msra.mxu0 %v1348
    %1350 = vmatprep.subr.mxu0 0.0
    %v1351 = vand.u32 %v131, 4294901760
    %v1352 = vsub.f32 %v131, %v1351
    %1353 = vmatpush1.msra.mxu0 %v1352
    %1354 = vmatprep.subr.mxu0 0.0
    %v1355 = vand.u32 %v128, 4294901760
    %v1356 = vsub.f32 %v128, %v1355
    %1357 = vmatpush1.msra.mxu0 %v1356
    %1358 = vmatprep.subr.mxu0 0.0
    %v1359 = vand.u32 %v125, 4294901760
    %v1360 = vsub.f32 %v125, %v1359
    %1361 = vmatpush1.msra.mxu0 %v1360
    %1362 = vmatprep.subr.mxu0 0.0
    %v1363 = vand.u32 %v122, 4294901760
    %v1364 = vsub.f32 %v122, %v1363
    %1365 = vmatpush1.msra.mxu0 %v1364
    %1366 = vmatprep.subr.mxu0 0.0
    %v1367 = vand.u32 %v119, 4294901760
    %v1368 = vsub.f32 %v119, %v1367
    %1369 = vmatpush1.msra.mxu0 %v1368
    %1370 = vmatprep.subr.mxu0 0.0
    %v1371 = vand.u32 %v116, 4294901760
    %v1372 = vsub.f32 %v116, %v1371
    %1373 = vmatpush1.msra.mxu0 %v1372
    %1374 = vmatprep.subr.mxu0 0.0
    %v1375 = vand.u32 %v113, 4294901760
    %v1376 = vsub.f32 %v113, %v1375
    %1377 = vmatpush1.msra.mxu0 %v1376
    %1378 = vmatprep.subr.mxu0 0.0
    %v1379 = vand.u32 %v110, 4294901760
    %v1380 = vsub.f32 %v110, %v1379
    %1381 = vmatpush1.msra.mxu0 %v1380
    %1382 = vmatprep.subr.mxu0 0.0
    %1383 = vmatpush2.msra.mxu0 0.0
    %1384 = vmatprep.subr.mxu0 0.0
    %1385 = vmatpush2.msra.mxu0 0.0
    %1386 = vmatprep.subr.mxu0 0.0
    %1387 = vmatpush2.msra.mxu0 0.0
    %1388 = vmatprep.subr.mxu0 0.0
    %1389 = vmatpush2.msra.mxu0 0.0
    %1390 = vmatprep.subr.mxu0 0.0
    %1391 = vmatpush2.msra.mxu0 0.0
    %1392 = vmatprep.subr.mxu0 0.0
    %1393 = vmatpush2.msra.mxu0 0.0
    %1394 = vmatprep.subr.mxu0 0.0
    %1395 = vmatpush2.msra.mxu0 0.0
    %1396 = vmatprep.subr.mxu0 0.0
    %1397 = vmatpush2.msra.mxu0 0.0
    %1398 = vmatprep.subr.mxu0 0.0
    %1399 = vmatpush2.msra.mxu0 0.0
    %1400 = vmatprep.subr.mxu0 0.0
    %1401 = vmatpush2.msra.mxu0 0.0
    %1402 = vmatprep.subr.mxu0 0.0
    %1403 = vmatpush2.msra.mxu0 0.0
    %1404 = vmatprep.subr.mxu0 0.0
    %1405 = vmatpush2.msra.mxu0 0.0
    %1406 = vmatprep.subr.mxu0 0.0
    %1407 = vmatpush2.msra.mxu0 0.0
    %1408 = vmatprep.subr.mxu0 0.0
    %1409 = vmatpush2.msra.mxu0 0.0
    %1410 = vmatprep.subr.mxu0 0.0
    %1411 = vmatpush2.msra.mxu0 0.0
    %1412 = vmatprep.subr.mxu0 0.0
    %1413 = vmatpush2.msra.mxu0 0.0
    %1414 = vmatprep.mubr.f32.mxu0 0.0
    %v1415 = vand.u32 %v106, 4294901760
    %v1416 = vsub.f32 %v106, %v1415
    %1417 = vmatmul.mubr.f32.gmra.mxu0 %v1416
    %v1418 = vpop.f32.mrf.mxu0
    %v1419 = vadd.f32 %v1309, %v1418
    %v1420 = vpop.f32.mrf.mxu0
    %1421 = vmatprep.mubr.f32.mxu0 0.0
    %v1422 = vand.u32 %v107, 4294901760
    %v1423 = vsub.f32 %v107, %v1422
    %1424 = vmatmul.mubr.f32.gmra.mxu0 %v1423
    %v1425 = vpop.f32.mrf.mxu0
    %v1426 = vadd.f32 %v1315, %v1425
    %v1427 = vpop.f32.mrf.mxu0
    %1428 = vdwg.mxu0
    %1429 = vmatprep.subr.mxu0 0.0
    %v1430 = vand.u32 %v155, 4294901760
    %1431 = vmatpush1.msra.mxu0 %v1430
    %1432 = vmatprep.subr.mxu0 0.0
    %v1433 = vand.u32 %v152, 4294901760
    %1434 = vmatpush1.msra.mxu0 %v1433
    %1435 = vmatprep.subr.mxu0 0.0
    %v1436 = vand.u32 %v149, 4294901760
    %1437 = vmatpush1.msra.mxu0 %v1436
    %1438 = vmatprep.subr.mxu0 0.0
    %v1439 = vand.u32 %v146, 4294901760
    %1440 = vmatpush1.msra.mxu0 %v1439
    %1441 = vmatprep.subr.mxu0 0.0
    %v1442 = vand.u32 %v143, 4294901760
    %1443 = vmatpush1.msra.mxu0 %v1442
    %1444 = vmatprep.subr.mxu0 0.0
    %v1445 = vand.u32 %v140, 4294901760
    %1446 = vmatpush1.msra.mxu0 %v1445
    %1447 = vmatprep.subr.mxu0 0.0
    %v1448 = vand.u32 %v137, 4294901760
    %1449 = vmatpush1.msra.mxu0 %v1448
    %1450 = vmatprep.subr.mxu0 0.0
    %v1451 = vand.u32 %v134, 4294901760
    %1452 = vmatpush1.msra.mxu0 %v1451
    %1453 = vmatprep.subr.mxu0 0.0
    %v1454 = vand.u32 %v131, 4294901760
    %1455 = vmatpush1.msra.mxu0 %v1454
    %1456 = vmatprep.subr.mxu0 0.0
    %v1457 = vand.u32 %v128, 4294901760
    %1458 = vmatpush1.msra.mxu0 %v1457
    %1459 = vmatprep.subr.mxu0 0.0
    %v1460 = vand.u32 %v125, 4294901760
    %1461 = vmatpush1.msra.mxu0 %v1460
    %1462 = vmatprep.subr.mxu0 0.0
    %v1463 = vand.u32 %v122, 4294901760
    %1464 = vmatpush1.msra.mxu0 %v1463
    %1465 = vmatprep.subr.mxu0 0.0
    %v1466 = vand.u32 %v119, 4294901760
    %1467 = vmatpush1.msra.mxu0 %v1466
    %1468 = vmatprep.subr.mxu0 0.0
    %v1469 = vand.u32 %v116, 4294901760
    %1470 = vmatpush1.msra.mxu0 %v1469
    %1471 = vmatprep.subr.mxu0 0.0
    %v1472 = vand.u32 %v113, 4294901760
    %1473 = vmatpush1.msra.mxu0 %v1472
    %1474 = vmatprep.subr.mxu0 0.0
    %v1475 = vand.u32 %v110, 4294901760
    %1476 = vmatpush1.msra.mxu0 %v1475
    %1477 = vmatprep.subr.mxu0 0.0
    %1478 = vmatpush2.msra.mxu0 0.0
    %1479 = vmatprep.subr.mxu0 0.0
    %1480 = vmatpush2.msra.mxu0 0.0
    %1481 = vmatprep.subr.mxu0 0.0
    %1482 = vmatpush2.msra.mxu0 0.0
    %1483 = vmatprep.subr.mxu0 0.0
    %1484 = vmatpush2.msra.mxu0 0.0
    %1485 = vmatprep.subr.mxu0 0.0
    %1486 = vmatpush2.msra.mxu0 0.0
    %1487 = vmatprep.subr.mxu0 0.0
    %1488 = vmatpush2.msra.mxu0 0.0
    %1489 = vmatprep.subr.mxu0 0.0
    %1490 = vmatpush2.msra.mxu0 0.0
    %1491 = vmatprep.subr.mxu0 0.0
    %1492 = vmatpush2.msra.mxu0 0.0
    %1493 = vmatprep.subr.mxu0 0.0
    %1494 = vmatpush2.msra.mxu0 0.0
    %1495 = vmatprep.subr.mxu0 0.0
    %1496 = vmatpush2.msra.mxu0 0.0
    %1497 = vmatprep.subr.mxu0 0.0
    %1498 = vmatpush2.msra.mxu0 0.0
    %1499 = vmatprep.subr.mxu0 0.0
    %1500 = vmatpush2.msra.mxu0 0.0
    %1501 = vmatprep.subr.mxu0 0.0
    %1502 = vmatpush2.msra.mxu0 0.0
    %1503 = vmatprep.subr.mxu0 0.0
    %1504 = vmatpush2.msra.mxu0 0.0
    %1505 = vmatprep.subr.mxu0 0.0
    %1506 = vmatpush2.msra.mxu0 0.0
    %1507 = vmatprep.subr.mxu0 0.0
    %1508 = vmatpush2.msra.mxu0 0.0
    %1509 = vmatprep.mubr.f32.mxu0 0.0
    %v1510 = vand.u32 %v106, 4294901760
    %v1511 = vsub.f32 %v106, %v1510
    %v1512 = vand.u32 %v1511, 4294901760
    %1513 = vmatmul.mubr.f32.gmra.mxu0 %v1512
    %v1514 = vpop.f32.mrf.mxu0
    %v1515 = vadd.f32 %v1419, %v1514
    %v1516 = vpop.f32.mrf.mxu0
    %1517 = vmatprep.mubr.f32.mxu0 0.0
    %v1518 = vand.u32 %v107, 4294901760
    %v1519 = vsub.f32 %v107, %v1518
    %v1520 = vand.u32 %v1519, 4294901760
    %1521 = vmatmul.mubr.f32.gmra.mxu0 %v1520
    %v1522 = vpop.f32.mrf.mxu0
    %v1523 = vadd.f32 %v1426, %v1522
    %v1524 = vpop.f32.mrf.mxu0
    %1525 = vdwg.mxu0
    %1526 = vmatprep.subr.mxu0 0.0
    %v1527 = vand.u32 %v155, 4294901760
    %v1528 = vsub.f32 %v155, %v1527
    %v1529 = vand.u32 %v1528, 4294901760
    %1530 = vmatpush1.msra.mxu0 %v1529
    %1531 = vmatprep.subr.mxu0 0.0
    %v1532 = vand.u32 %v152, 4294901760
    %v1533 = vsub.f32 %v152, %v1532
    %v1534 = vand.u32 %v1533, 4294901760
    %1535 = vmatpush1.msra.mxu0 %v1534
    %1536 = vmatprep.subr.mxu0 0.0
    %v1537 = vand.u32 %v149, 4294901760
    %v1538 = vsub.f32 %v149, %v1537
    %v1539 = vand.u32 %v1538, 4294901760
    %1540 = vmatpush1.msra.mxu0 %v1539
    %1541 = vmatprep.subr.mxu0 0.0
    %v1542 = vand.u32 %v146, 4294901760
    %v1543 = vsub.f32 %v146, %v1542
    %v1544 = vand.u32 %v1543, 4294901760
    %1545 = vmatpush1.msra.mxu0 %v1544
    %1546 = vmatprep.subr.mxu0 0.0
    %v1547 = vand.u32 %v143, 4294901760
    %v1548 = vsub.f32 %v143, %v1547
    %v1549 = vand.u32 %v1548, 4294901760
    %1550 = vmatpush1.msra.mxu0 %v1549
    %1551 = vmatprep.subr.mxu0 0.0
    %v1552 = vand.u32 %v140, 4294901760
    %v1553 = vsub.f32 %v140, %v1552
    %v1554 = vand.u32 %v1553, 4294901760
    %1555 = vmatpush1.msra.mxu0 %v1554
    %1556 = vmatprep.subr.mxu0 0.0
    %v1557 = vand.u32 %v137, 4294901760
    %v1558 = vsub.f32 %v137, %v1557
    %v1559 = vand.u32 %v1558, 4294901760
    %1560 = vmatpush1.msra.mxu0 %v1559
    %1561 = vmatprep.subr.mxu0 0.0
    %v1562 = vand.u32 %v134, 4294901760
    %v1563 = vsub.f32 %v134, %v1562
    %v1564 = vand.u32 %v1563, 4294901760
    %1565 = vmatpush1.msra.mxu0 %v1564
    %1566 = vmatprep.subr.mxu0 0.0
    %v1567 = vand.u32 %v131, 4294901760
    %v1568 = vsub.f32 %v131, %v1567
    %v1569 = vand.u32 %v1568, 4294901760
    %1570 = vmatpush1.msra.mxu0 %v1569
    %1571 = vmatprep.subr.mxu0 0.0
    %v1572 = vand.u32 %v128, 4294901760
    %v1573 = vsub.f32 %v128, %v1572
    %v1574 = vand.u32 %v1573, 4294901760
    %1575 = vmatpush1.msra.mxu0 %v1574
    %1576 = vmatprep.subr.mxu0 0.0
    %v1577 = vand.u32 %v125, 4294901760
    %v1578 = vsub.f32 %v125, %v1577
    %v1579 = vand.u32 %v1578, 4294901760
    %1580 = vmatpush1.msra.mxu0 %v1579
    %1581 = vmatprep.subr.mxu0 0.0
    %v1582 = vand.u32 %v122, 4294901760
    %v1583 = vsub.f32 %v122, %v1582
    %v1584 = vand.u32 %v1583, 4294901760
    %1585 = vmatpush1.msra.mxu0 %v1584
    %1586 = vmatprep.subr.mxu0 0.0
    %v1587 = vand.u32 %v119, 4294901760
    %v1588 = vsub.f32 %v119, %v1587
    %v1589 = vand.u32 %v1588, 4294901760
    %1590 = vmatpush1.msra.mxu0 %v1589
    %1591 = vmatprep.subr.mxu0 0.0
    %v1592 = vand.u32 %v116, 4294901760
    %v1593 = vsub.f32 %v116, %v1592
    %v1594 = vand.u32 %v1593, 4294901760
    %1595 = vmatpush1.msra.mxu0 %v1594
    %1596 = vmatprep.subr.mxu0 0.0
    %v1597 = vand.u32 %v113, 4294901760
    %v1598 = vsub.f32 %v113, %v1597
    %v1599 = vand.u32 %v1598, 4294901760
    %1600 = vmatpush1.msra.mxu0 %v1599
    %1601 = vmatprep.subr.mxu0 0.0
    %v1602 = vand.u32 %v110, 4294901760
    %v1603 = vsub.f32 %v110, %v1602
    %v1604 = vand.u32 %v1603, 4294901760
    %1605 = vmatpush1.msra.mxu0 %v1604
    %1606 = vmatprep.subr.mxu0 0.0
    %1607 = vmatpush2.msra.mxu0 0.0
    %1608 = vmatprep.subr.mxu0 0.0
    %1609 = vmatpush2.msra.mxu0 0.0
    %1610 = vmatprep.subr.mxu0 0.0
    %1611 = vmatpush2.msra.mxu0 0.0
    %1612 = vmatprep.subr.mxu0 0.0
    %1613 = vmatpush2.msra.mxu0 0.0
    %1614 = vmatprep.subr.mxu0 0.0
    %1615 = vmatpush2.msra.mxu0 0.0
    %1616 = vmatprep.subr.mxu0 0.0
    %1617 = vmatpush2.msra.mxu0 0.0
    %1618 = vmatprep.subr.mxu0 0.0
    %1619 = vmatpush2.msra.mxu0 0.0
    %1620 = vmatprep.subr.mxu0 0.0
    %1621 = vmatpush2.msra.mxu0 0.0
    %1622 = vmatprep.subr.mxu0 0.0
    %1623 = vmatpush2.msra.mxu0 0.0
    %1624 = vmatprep.subr.mxu0 0.0
    %1625 = vmatpush2.msra.mxu0 0.0
    %1626 = vmatprep.subr.mxu0 0.0
    %1627 = vmatpush2.msra.mxu0 0.0
    %1628 = vmatprep.subr.mxu0 0.0
    %1629 = vmatpush2.msra.mxu0 0.0
    %1630 = vmatprep.subr.mxu0 0.0
    %1631 = vmatpush2.msra.mxu0 0.0
    %1632 = vmatprep.subr.mxu0 0.0
    %1633 = vmatpush2.msra.mxu0 0.0
    %1634 = vmatprep.subr.mxu0 0.0
    %1635 = vmatpush2.msra.mxu0 0.0
    %1636 = vmatprep.subr.mxu0 0.0
    %1637 = vmatpush2.msra.mxu0 0.0
    %1638 = vmatprep.mubr.f32.mxu0 0.0
    %v1639 = vand.u32 %v106, 4294901760
    %1640 = vmatmul.mubr.f32.gmra.mxu0 %v1639
    %v1641 = vpop.f32.mrf.mxu0
    %v1642 = vadd.f32 %v1515, %v1641
    %v1643 = vpop.f32.mrf.mxu0
    %1644 = vmatprep.mubr.f32.mxu0 0.0
    %v1645 = vand.u32 %v107, 4294901760
    %1646 = vmatmul.mubr.f32.gmra.mxu0 %v1645
    %v1647 = vpop.f32.mrf.mxu0
    %v1648 = vadd.f32 %v1523, %v1647
    %v1649 = vpop.f32.mrf.mxu0
    %1650 = vdwg.mxu0
    %1651 = vmatprep.subr.mxu0 0.0
    %v1652 = vand.u32 %v155, 4294901760
    %1653 = vmatpush1.msra.mxu0 %v1652
    %1654 = vmatprep.subr.mxu0 0.0
    %v1655 = vand.u32 %v152, 4294901760
    %1656 = vmatpush1.msra.mxu0 %v1655
    %1657 = vmatprep.subr.mxu0 0.0
    %v1658 = vand.u32 %v149, 4294901760
    %1659 = vmatpush1.msra.mxu0 %v1658
    %1660 = vmatprep.subr.mxu0 0.0
    %v1661 = vand.u32 %v146, 4294901760
    %1662 = vmatpush1.msra.mxu0 %v1661
    %1663 = vmatprep.subr.mxu0 0.0
    %v1664 = vand.u32 %v143, 4294901760
    %1665 = vmatpush1.msra.mxu0 %v1664
    %1666 = vmatprep.subr.mxu0 0.0
    %v1667 = vand.u32 %v140, 4294901760
    %1668 = vmatpush1.msra.mxu0 %v1667
    %1669 = vmatprep.subr.mxu0 0.0
    %v1670 = vand.u32 %v137, 4294901760
    %1671 = vmatpush1.msra.mxu0 %v1670
    %1672 = vmatprep.subr.mxu0 0.0
    %v1673 = vand.u32 %v134, 4294901760
    %1674 = vmatpush1.msra.mxu0 %v1673
    %1675 = vmatprep.subr.mxu0 0.0
    %v1676 = vand.u32 %v131, 4294901760
    %1677 = vmatpush1.msra.mxu0 %v1676
    %1678 = vmatprep.subr.mxu0 0.0
    %v1679 = vand.u32 %v128, 4294901760
    %1680 = vmatpush1.msra.mxu0 %v1679
    %1681 = vmatprep.subr.mxu0 0.0
    %v1682 = vand.u32 %v125, 4294901760
    %1683 = vmatpush1.msra.mxu0 %v1682
    %1684 = vmatprep.subr.mxu0 0.0
    %v1685 = vand.u32 %v122, 4294901760
    %1686 = vmatpush1.msra.mxu0 %v1685
    %1687 = vmatprep.subr.mxu0 0.0
    %v1688 = vand.u32 %v119, 4294901760
    %1689 = vmatpush1.msra.mxu0 %v1688
    %1690 = vmatprep.subr.mxu0 0.0
    %v1691 = vand.u32 %v116, 4294901760
    %1692 = vmatpush1.msra.mxu0 %v1691
    %1693 = vmatprep.subr.mxu0 0.0
    %v1694 = vand.u32 %v113, 4294901760
    %1695 = vmatpush1.msra.mxu0 %v1694
    %1696 = vmatprep.subr.mxu0 0.0
    %v1697 = vand.u32 %v110, 4294901760
    %1698 = vmatpush1.msra.mxu0 %v1697
    %1699 = vmatprep.subr.mxu0 0.0
    %1700 = vmatpush2.msra.mxu0 0.0
    %1701 = vmatprep.subr.mxu0 0.0
    %1702 = vmatpush2.msra.mxu0 0.0
    %1703 = vmatprep.subr.mxu0 0.0
    %1704 = vmatpush2.msra.mxu0 0.0
    %1705 = vmatprep.subr.mxu0 0.0
    %1706 = vmatpush2.msra.mxu0 0.0
    %1707 = vmatprep.subr.mxu0 0.0
    %1708 = vmatpush2.msra.mxu0 0.0
    %1709 = vmatprep.subr.mxu0 0.0
    %1710 = vmatpush2.msra.mxu0 0.0
    %1711 = vmatprep.subr.mxu0 0.0
    %1712 = vmatpush2.msra.mxu0 0.0
    %1713 = vmatprep.subr.mxu0 0.0
    %1714 = vmatpush2.msra.mxu0 0.0
    %1715 = vmatprep.subr.mxu0 0.0
    %1716 = vmatpush2.msra.mxu0 0.0
    %1717 = vmatprep.subr.mxu0 0.0
    %1718 = vmatpush2.msra.mxu0 0.0
    %1719 = vmatprep.subr.mxu0 0.0
    %1720 = vmatpush2.msra.mxu0 0.0
    %1721 = vmatprep.subr.mxu0 0.0
    %1722 = vmatpush2.msra.mxu0 0.0
    %1723 = vmatprep.subr.mxu0 0.0
    %1724 = vmatpush2.msra.mxu0 0.0
    %1725 = vmatprep.subr.mxu0 0.0
    %1726 = vmatpush2.msra.mxu0 0.0
    %1727 = vmatprep.subr.mxu0 0.0
    %1728 = vmatpush2.msra.mxu0 0.0
    %1729 = vmatprep.subr.mxu0 0.0
    %1730 = vmatpush2.msra.mxu0 0.0
    %1731 = vmatprep.mubr.f32.mxu0 0.0
    %v1732 = vand.u32 %v106, 4294901760
    %1733 = vmatmul.mubr.f32.gmra.mxu0 %v1732
    %v1734 = vpop.f32.mrf.mxu0
    %v1735 = vadd.f32 %v1642, %v1734
    %v1736 = vpop.f32.mrf.mxu0
    %1737 = vmatprep.mubr.f32.mxu0 0.0
    %v1738 = vand.u32 %v107, 4294901760
    %1739 = vmatmul.mubr.f32.gmra.mxu0 %v1738
    %v1740 = vpop.f32.mrf.mxu0
    %v1741 = vadd.f32 %v1648, %v1740
    %v1742 = vpop.f32.mrf.mxu0
    %1743 = vdwg.mxu0
    %1744 = vxpose.xlu0.b32.start [1/16] %v1051, 128
    %1745 = vxpose.xlu0.b32.cont [2/16] %v1058, 128
    %1746 = vxpose.xlu0.b32.cont [3/16] 0.0, 128
    %1747 = vxpose.xlu0.b32.cont [4/16] 0.0, 128
    %1748 = vxpose.xlu0.b32.cont [5/16] 0.0, 128
    %1749 = vxpose.xlu0.b32.cont [6/16] 0.0, 128
    %1750 = vxpose.xlu0.b32.cont [7/16] 0.0, 128
    %1751 = vxpose.xlu0.b32.cont [8/16] 0.0, 128
    %1752 = vxpose.xlu0.b32.cont [9/16] 0.0, 128
    %1753 = vxpose.xlu0.b32.cont [10/16] 0.0, 128
    %1754 = vxpose.xlu0.b32.cont [11/16] 0.0, 128
    %1755 = vxpose.xlu0.b32.cont [12/16] 0.0, 128
    %1756 = vxpose.xlu0.b32.cont [13/16] 0.0, 128
    %1757 = vxpose.xlu0.b32.cont [14/16] 0.0, 128
    %1758 = vxpose.xlu0.b32.cont [15/16] 0.0, 128
    %1759 = vxpose.xlu0.b32.end [16/16] 0.0, 128
    %v1760 = vpop.trf.xlu0
    %v1761 = vpop.trf.xlu0
    %v1762 = vpop.trf.xlu0
    %v1763 = vpop.trf.xlu0
    %v1764 = vpop.trf.xlu0
    %v1765 = vpop.trf.xlu0
    %v1766 = vpop.trf.xlu0
    %v1767 = vpop.trf.xlu0
    %v1768 = vpop.trf.xlu0
    %v1769 = vpop.trf.xlu0
    %v1770 = vpop.trf.xlu0
    %v1771 = vpop.trf.xlu0
    %v1772 = vpop.trf.xlu0
    %v1773 = vpop.trf.xlu0
    %v1774 = vpop.trf.xlu0
    %v1775 = vpop.trf.xlu0
    %1792 = vrot.lane.b32.xlu0 %v1760, 16
    %v1793 = vpop.permute.xlu0 %1792
    %1794 = vrot.lane.b32.xlu0 %v1761, 16
    %v1795 = vpop.permute.xlu0 %1794
    %1796 = vrot.lane.b32.xlu0 %v1762, 16
    %v1797 = vpop.permute.xlu0 %1796
    %1798 = vrot.lane.b32.xlu0 %v1763, 16
    %v1799 = vpop.permute.xlu0 %1798
    %1800 = vrot.lane.b32.xlu0 %v1764, 16
    %v1801 = vpop.permute.xlu0 %1800
    %1802 = vrot.lane.b32.xlu0 %v1765, 16
    %v1803 = vpop.permute.xlu0 %1802
    %1804 = vrot.lane.b32.xlu0 %v1766, 16
    %v1805 = vpop.permute.xlu0 %1804
    %1806 = vrot.lane.b32.xlu0 %v1767, 16
    %v1807 = vpop.permute.xlu0 %1806
    %1808 = vrot.lane.b32.xlu0 %v1768, 16
    %v1809 = vpop.permute.xlu0 %1808
    %1810 = vrot.lane.b32.xlu0 %v1769, 16
    %v1811 = vpop.permute.xlu0 %1810
    %1812 = vrot.lane.b32.xlu0 %v1770, 16
    %v1813 = vpop.permute.xlu0 %1812
    %1814 = vrot.lane.b32.xlu0 %v1771, 16
    %v1815 = vpop.permute.xlu0 %1814
    %1816 = vrot.lane.b32.xlu0 %v1772, 16
    %v1817 = vpop.permute.xlu0 %1816
    %1818 = vrot.lane.b32.xlu0 %v1773, 16
    %v1819 = vpop.permute.xlu0 %1818
    %1820 = vrot.lane.b32.xlu0 %v1774, 16
    %v1821 = vpop.permute.xlu0 %1820
    %1822 = vrot.lane.b32.xlu0 %v1775, 16
    %v1823 = vpop.permute.xlu0 %1822
    %1840 = vrot.lane.b32.xlu0 %v1760, 32
    %v1841 = vpop.permute.xlu0 %1840
    %1842 = vrot.lane.b32.xlu0 %v1761, 32
    %v1843 = vpop.permute.xlu0 %1842
    %1844 = vrot.lane.b32.xlu0 %v1762, 32
    %v1845 = vpop.permute.xlu0 %1844
    %1846 = vrot.lane.b32.xlu0 %v1763, 32
    %v1847 = vpop.permute.xlu0 %1846
    %1848 = vrot.lane.b32.xlu0 %v1764, 32
    %v1849 = vpop.permute.xlu0 %1848
    %1850 = vrot.lane.b32.xlu0 %v1765, 32
    %v1851 = vpop.permute.xlu0 %1850
    %1852 = vrot.lane.b32.xlu0 %v1766, 32
    %v1853 = vpop.permute.xlu0 %1852
    %1854 = vrot.lane.b32.xlu0 %v1767, 32
    %v1855 = vpop.permute.xlu0 %1854
    %1856 = vrot.lane.b32.xlu0 %v1768, 32
    %v1857 = vpop.permute.xlu0 %1856
    %1858 = vrot.lane.b32.xlu0 %v1769, 32
    %v1859 = vpop.permute.xlu0 %1858
    %1860 = vrot.lane.b32.xlu0 %v1770, 32
    %v1861 = vpop.permute.xlu0 %1860
    %1862 = vrot.lane.b32.xlu0 %v1771, 32
    %v1863 = vpop.permute.xlu0 %1862
    %1864 = vrot.lane.b32.xlu0 %v1772, 32
    %v1865 = vpop.permute.xlu0 %1864
    %1866 = vrot.lane.b32.xlu0 %v1773, 32
    %v1867 = vpop.permute.xlu0 %1866
    %1868 = vrot.lane.b32.xlu0 %v1774, 32
    %v1869 = vpop.permute.xlu0 %1868
    %1870 = vrot.lane.b32.xlu0 %v1775, 32
    %v1871 = vpop.permute.xlu0 %1870
    %1888 = vrot.lane.b32.xlu0 %v1760, 48
    %v1889 = vpop.permute.xlu0 %1888
    %1890 = vrot.lane.b32.xlu0 %v1761, 48
    %v1891 = vpop.permute.xlu0 %1890
    %1892 = vrot.lane.b32.xlu0 %v1762, 48
    %v1893 = vpop.permute.xlu0 %1892
    %1894 = vrot.lane.b32.xlu0 %v1763, 48
    %v1895 = vpop.permute.xlu0 %1894
    %1896 = vrot.lane.b32.xlu0 %v1764, 48
    %v1897 = vpop.permute.xlu0 %1896
    %1898 = vrot.lane.b32.xlu0 %v1765, 48
    %v1899 = vpop.permute.xlu0 %1898
    %1900 = vrot.lane.b32.xlu0 %v1766, 48
    %v1901 = vpop.permute.xlu0 %1900
    %1902 = vrot.lane.b32.xlu0 %v1767, 48
    %v1903 = vpop.permute.xlu0 %1902
    %1904 = vrot.lane.b32.xlu0 %v1768, 48
    %v1905 = vpop.permute.xlu0 %1904
    %1906 = vrot.lane.b32.xlu0 %v1769, 48
    %v1907 = vpop.permute.xlu0 %1906
    %1908 = vrot.lane.b32.xlu0 %v1770, 48
    %v1909 = vpop.permute.xlu0 %1908
    %1910 = vrot.lane.b32.xlu0 %v1771, 48
    %v1911 = vpop.permute.xlu0 %1910
    %1912 = vrot.lane.b32.xlu0 %v1772, 48
    %v1913 = vpop.permute.xlu0 %1912
    %1914 = vrot.lane.b32.xlu0 %v1773, 48
    %v1915 = vpop.permute.xlu0 %1914
    %1916 = vrot.lane.b32.xlu0 %v1774, 48
    %v1917 = vpop.permute.xlu0 %1916
    %1918 = vrot.lane.b32.xlu0 %v1775, 48
    %v1919 = vpop.permute.xlu0 %1918
    %1936 = vrot.lane.b32.xlu0 %v1760, 64
    %v1937 = vpop.permute.xlu0 %1936
    %1938 = vrot.lane.b32.xlu0 %v1761, 64
    %v1939 = vpop.permute.xlu0 %1938
    %1940 = vrot.lane.b32.xlu0 %v1762, 64
    %v1941 = vpop.permute.xlu0 %1940
    %1942 = vrot.lane.b32.xlu0 %v1763, 64
    %v1943 = vpop.permute.xlu0 %1942
    %1944 = vrot.lane.b32.xlu0 %v1764, 64
    %v1945 = vpop.permute.xlu0 %1944
    %1946 = vrot.lane.b32.xlu0 %v1765, 64
    %v1947 = vpop.permute.xlu0 %1946
    %1948 = vrot.lane.b32.xlu0 %v1766, 64
    %v1949 = vpop.permute.xlu0 %1948
    %1950 = vrot.lane.b32.xlu0 %v1767, 64
    %v1951 = vpop.permute.xlu0 %1950
    %1952 = vrot.lane.b32.xlu0 %v1768, 64
    %v1953 = vpop.permute.xlu0 %1952
    %1954 = vrot.lane.b32.xlu0 %v1769, 64
    %v1955 = vpop.permute.xlu0 %1954
    %1956 = vrot.lane.b32.xlu0 %v1770, 64
    %v1957 = vpop.permute.xlu0 %1956
    %1958 = vrot.lane.b32.xlu0 %v1771, 64
    %v1959 = vpop.permute.xlu0 %1958
    %1960 = vrot.lane.b32.xlu0 %v1772, 64
    %v1961 = vpop.permute.xlu0 %1960
    %1962 = vrot.lane.b32.xlu0 %v1773, 64
    %v1963 = vpop.permute.xlu0 %1962
    %1964 = vrot.lane.b32.xlu0 %v1774, 64
    %v1965 = vpop.permute.xlu0 %1964
    %1966 = vrot.lane.b32.xlu0 %v1775, 64
    %v1967 = vpop.permute.xlu0 %1966
    %1984 = vrot.lane.b32.xlu0 %v1760, 80
    %v1985 = vpop.permute.xlu0 %1984
    %1986 = vrot.lane.b32.xlu0 %v1761, 80
    %v1987 = vpop.permute.xlu0 %1986
    %1988 = vrot.lane.b32.xlu0 %v1762, 80
    %v1989 = vpop.permute.xlu0 %1988
    %1990 = vrot.lane.b32.xlu0 %v1763, 80
    %v1991 = vpop.permute.xlu0 %1990
    %1992 = vrot.lane.b32.xlu0 %v1764, 80
    %v1993 = vpop.permute.xlu0 %1992
    %1994 = vrot.lane.b32.xlu0 %v1765, 80
    %v1995 = vpop.permute.xlu0 %1994
    %1996 = vrot.lane.b32.xlu0 %v1766, 80
    %v1997 = vpop.permute.xlu0 %1996
    %1998 = vrot.lane.b32.xlu0 %v1767, 80
    %v1999 = vpop.permute.xlu0 %1998
    %2000 = vrot.lane.b32.xlu0 %v1768, 80
    %v2001 = vpop.permute.xlu0 %2000
    %2002 = vrot.lane.b32.xlu0 %v1769, 80
    %v2003 = vpop.permute.xlu0 %2002
    %2004 = vrot.lane.b32.xlu0 %v1770, 80
    %v2005 = vpop.permute.xlu0 %2004
    %2006 = vrot.lane.b32.xlu0 %v1771, 80
    %v2007 = vpop.permute.xlu0 %2006
    %2008 = vrot.lane.b32.xlu0 %v1772, 80
    %v2009 = vpop.permute.xlu0 %2008
    %2010 = vrot.lane.b32.xlu0 %v1773, 80
    %v2011 = vpop.permute.xlu0 %2010
    %2012 = vrot.lane.b32.xlu0 %v1774, 80
    %v2013 = vpop.permute.xlu0 %2012
    %2014 = vrot.lane.b32.xlu0 %v1775, 80
    %v2015 = vpop.permute.xlu0 %2014
    %2032 = vrot.lane.b32.xlu0 %v1760, 96
    %v2033 = vpop.permute.xlu0 %2032
    %2034 = vrot.lane.b32.xlu0 %v1761, 96
    %v2035 = vpop.permute.xlu0 %2034
    %2036 = vrot.lane.b32.xlu0 %v1762, 96
    %v2037 = vpop.permute.xlu0 %2036
    %2038 = vrot.lane.b32.xlu0 %v1763, 96
    %v2039 = vpop.permute.xlu0 %2038
    %2040 = vrot.lane.b32.xlu0 %v1764, 96
    %v2041 = vpop.permute.xlu0 %2040
    %2042 = vrot.lane.b32.xlu0 %v1765, 96
    %v2043 = vpop.permute.xlu0 %2042
    %2044 = vrot.lane.b32.xlu0 %v1766, 96
    %v2045 = vpop.permute.xlu0 %2044
    %2046 = vrot.lane.b32.xlu0 %v1767, 96
    %v2047 = vpop.permute.xlu0 %2046
    %2048 = vrot.lane.b32.xlu0 %v1768, 96
    %v2049 = vpop.permute.xlu0 %2048
    %2050 = vrot.lane.b32.xlu0 %v1769, 96
    %v2051 = vpop.permute.xlu0 %2050
    %2052 = vrot.lane.b32.xlu0 %v1770, 96
    %v2053 = vpop.permute.xlu0 %2052
    %2054 = vrot.lane.b32.xlu0 %v1771, 96
    %v2055 = vpop.permute.xlu0 %2054
    %2056 = vrot.lane.b32.xlu0 %v1772, 96
    %v2057 = vpop.permute.xlu0 %2056
    %2058 = vrot.lane.b32.xlu0 %v1773, 96
    %v2059 = vpop.permute.xlu0 %2058
    %2060 = vrot.lane.b32.xlu0 %v1774, 96
    %v2061 = vpop.permute.xlu0 %2060
    %2062 = vrot.lane.b32.xlu0 %v1775, 96
    %v2063 = vpop.permute.xlu0 %2062
    %2080 = vrot.lane.b32.xlu0 %v1760, 112
    %v2081 = vpop.permute.xlu0 %2080
    %2082 = vrot.lane.b32.xlu0 %v1761, 112
    %v2083 = vpop.permute.xlu0 %2082
    %2084 = vrot.lane.b32.xlu0 %v1762, 112
    %v2085 = vpop.permute.xlu0 %2084
    %2086 = vrot.lane.b32.xlu0 %v1763, 112
    %v2087 = vpop.permute.xlu0 %2086
    %2088 = vrot.lane.b32.xlu0 %v1764, 112
    %v2089 = vpop.permute.xlu0 %2088
    %2090 = vrot.lane.b32.xlu0 %v1765, 112
    %v2091 = vpop.permute.xlu0 %2090
    %2092 = vrot.lane.b32.xlu0 %v1766, 112
    %v2093 = vpop.permute.xlu0 %2092
    %2094 = vrot.lane.b32.xlu0 %v1767, 112
    %v2095 = vpop.permute.xlu0 %2094
    %2096 = vrot.lane.b32.xlu0 %v1768, 112
    %v2097 = vpop.permute.xlu0 %2096
    %2098 = vrot.lane.b32.xlu0 %v1769, 112
    %v2099 = vpop.permute.xlu0 %2098
    %2100 = vrot.lane.b32.xlu0 %v1770, 112
    %v2101 = vpop.permute.xlu0 %2100
    %2102 = vrot.lane.b32.xlu0 %v1771, 112
    %v2103 = vpop.permute.xlu0 %2102
    %2104 = vrot.lane.b32.xlu0 %v1772, 112
    %v2105 = vpop.permute.xlu0 %2104
    %2106 = vrot.lane.b32.xlu0 %v1773, 112
    %v2107 = vpop.permute.xlu0 %2106
    %2108 = vrot.lane.b32.xlu0 %v1774, 112
    %v2109 = vpop.permute.xlu0 %2108
    %2110 = vrot.lane.b32.xlu0 %v1775, 112
    %v2111 = vpop.permute.xlu0 %2110
    %vm2128 = vcmask 130048
    %v2129 = vsel %vm2128, %v1760, %v1793
    %v2130 = vsel %vm2128, %v1761, %v1795
    %v2131 = vsel %vm2128, %v1762, %v1797
    %v2132 = vsel %vm2128, %v1763, %v1799
    %v2133 = vsel %vm2128, %v1764, %v1801
    %v2134 = vsel %vm2128, %v1765, %v1803
    %v2135 = vsel %vm2128, %v1766, %v1805
    %v2136 = vsel %vm2128, %v1767, %v1807
    %v2137 = vsel %vm2128, %v1768, %v1809
    %v2138 = vsel %vm2128, %v1769, %v1811
    %v2139 = vsel %vm2128, %v1770, %v1813
    %v2140 = vsel %vm2128, %v1771, %v1815
    %v2141 = vsel %vm2128, %v1772, %v1817
    %v2142 = vsel %vm2128, %v1773, %v1819
    %v2143 = vsel %vm2128, %v1774, %v1821
    %v2144 = vsel %vm2128, %v1775, %v1823
    %vm2145 = vcmask 261120
    %v2146 = vsel %vm2145, %v2129, %v1841
    %v2147 = vsel %vm2145, %v2130, %v1843
    %v2148 = vsel %vm2145, %v2131, %v1845
    %v2149 = vsel %vm2145, %v2132, %v1847
    %v2150 = vsel %vm2145, %v2133, %v1849
    %v2151 = vsel %vm2145, %v2134, %v1851
    %v2152 = vsel %vm2145, %v2135, %v1853
    %v2153 = vsel %vm2145, %v2136, %v1855
    %v2154 = vsel %vm2145, %v2137, %v1857
    %v2155 = vsel %vm2145, %v2138, %v1859
    %v2156 = vsel %vm2145, %v2139, %v1861
    %v2157 = vsel %vm2145, %v2140, %v1863
    %v2158 = vsel %vm2145, %v2141, %v1865
    %v2159 = vsel %vm2145, %v2142, %v1867
    %v2160 = vsel %vm2145, %v2143, %v1869
    %v2161 = vsel %vm2145, %v2144, %v1871
    %vm2162 = vcmask 392192
    %v2163 = vsel %vm2162, %v2146, %v1889
    %v2164 = vsel %vm2162, %v2147, %v1891
    %v2165 = vsel %vm2162, %v2148, %v1893
    %v2166 = vsel %vm2162, %v2149, %v1895
    %v2167 = vsel %vm2162, %v2150, %v1897
    %v2168 = vsel %vm2162, %v2151, %v1899
    %v2169 = vsel %vm2162, %v2152, %v1901
    %v2170 = vsel %vm2162, %v2153, %v1903
    %v2171 = vsel %vm2162, %v2154, %v1905
    %v2172 = vsel %vm2162, %v2155, %v1907
    %v2173 = vsel %vm2162, %v2156, %v1909
    %v2174 = vsel %vm2162, %v2157, %v1911
    %v2175 = vsel %vm2162, %v2158, %v1913
    %v2176 = vsel %vm2162, %v2159, %v1915
    %v2177 = vsel %vm2162, %v2160, %v1917
    %v2178 = vsel %vm2162, %v2161, %v1919
    %vm2179 = vcmask 523264
    %v2180 = vsel %vm2179, %v2163, %v1937
    %v2181 = vsel %vm2179, %v2164, %v1939
    %v2182 = vsel %vm2179, %v2165, %v1941
    %v2183 = vsel %vm2179, %v2166, %v1943
    %v2184 = vsel %vm2179, %v2167, %v1945
    %v2185 = vsel %vm2179, %v2168, %v1947
    %v2186 = vsel %vm2179, %v2169, %v1949
    %v2187 = vsel %vm2179, %v2170, %v1951
    %v2188 = vsel %vm2179, %v2171, %v1953
    %v2189 = vsel %vm2179, %v2172, %v1955
    %v2190 = vsel %vm2179, %v2173, %v1957
    %v2191 = vsel %vm2179, %v2174, %v1959
    %v2192 = vsel %vm2179, %v2175, %v1961
    %v2193 = vsel %vm2179, %v2176, %v1963
    %v2194 = vsel %vm2179, %v2177, %v1965
    %v2195 = vsel %vm2179, %v2178, %v1967
    %vm2196 = vcmask 654336
    %v2197 = vsel %vm2196, %v2180, %v1985
    %v2198 = vsel %vm2196, %v2181, %v1987
    %v2199 = vsel %vm2196, %v2182, %v1989
    %v2200 = vsel %vm2196, %v2183, %v1991
    %v2201 = vsel %vm2196, %v2184, %v1993
    %v2202 = vsel %vm2196, %v2185, %v1995
    %v2203 = vsel %vm2196, %v2186, %v1997
    %v2204 = vsel %vm2196, %v2187, %v1999
    %v2205 = vsel %vm2196, %v2188, %v2001
    %v2206 = vsel %vm2196, %v2189, %v2003
    %v2207 = vsel %vm2196, %v2190, %v2005
    %v2208 = vsel %vm2196, %v2191, %v2007
    %v2209 = vsel %vm2196, %v2192, %v2009
    %v2210 = vsel %vm2196, %v2193, %v2011
    %v2211 = vsel %vm2196, %v2194, %v2013
    %v2212 = vsel %vm2196, %v2195, %v2015
    %vm2213 = vcmask 785408
    %v2214 = vsel %vm2213, %v2197, %v2033
    %v2215 = vsel %vm2213, %v2198, %v2035
    %v2216 = vsel %vm2213, %v2199, %v2037
    %v2217 = vsel %vm2213, %v2200, %v2039
    %v2218 = vsel %vm2213, %v2201, %v2041
    %v2219 = vsel %vm2213, %v2202, %v2043
    %v2220 = vsel %vm2213, %v2203, %v2045
    %v2221 = vsel %vm2213, %v2204, %v2047
    %v2222 = vsel %vm2213, %v2205, %v2049
    %v2223 = vsel %vm2213, %v2206, %v2051
    %v2224 = vsel %vm2213, %v2207, %v2053
    %v2225 = vsel %vm2213, %v2208, %v2055
    %v2226 = vsel %vm2213, %v2209, %v2057
    %v2227 = vsel %vm2213, %v2210, %v2059
    %v2228 = vsel %vm2213, %v2211, %v2061
    %v2229 = vsel %vm2213, %v2212, %v2063
    %vm2230 = vcmask 916480
    %v2231 = vsel %vm2230, %v2214, %v2081
    %v2232 = vsel %vm2230, %v2215, %v2083
    %v2233 = vsel %vm2230, %v2216, %v2085
    %v2234 = vsel %vm2230, %v2217, %v2087
    %v2235 = vsel %vm2230, %v2218, %v2089
    %v2236 = vsel %vm2230, %v2219, %v2091
    %v2237 = vsel %vm2230, %v2220, %v2093
    %v2238 = vsel %vm2230, %v2221, %v2095
    %v2239 = vsel %vm2230, %v2222, %v2097
    %v2240 = vsel %vm2230, %v2223, %v2099
    %v2241 = vsel %vm2230, %v2224, %v2101
    %v2242 = vsel %vm2230, %v2225, %v2103
    %v2243 = vsel %vm2230, %v2226, %v2105
    %v2244 = vsel %vm2230, %v2227, %v2107
    %v2245 = vsel %vm2230, %v2228, %v2109
    %v2246 = vsel %vm2230, %v2229, %v2111
    %v2247 = vld [vmem:[#allocation8] sm:$0xff]
    %v2248 = vld [vmem:[#allocation8 + $0x8] sm:$0xff]
    %v2249 = vld [vmem:[#allocation8 + $0x10] sm:$0xff]
    %v2250 = vld [vmem:[#allocation8 + $0x18] sm:$0xff]
    %v2251 = vld [vmem:[#allocation8 + $0x20] sm:$0xff]
    %v2252 = vld [vmem:[#allocation8 + $0x28] sm:$0xff]
    %v2253 = vld [vmem:[#allocation8 + $0x30] sm:$0xff]
    %v2254 = vld [vmem:[#allocation8 + $0x38] sm:$0xff]
    %v2255 = vld [vmem:[#allocation8 + $0x40] sm:$0xff]
    %v2256 = vld [vmem:[#allocation8 + $0x48] sm:$0xff]
    %v2257 = vld [vmem:[#allocation8 + $0x50] sm:$0xff]
    %v2258 = vld [vmem:[#allocation8 + $0x58] sm:$0xff]
    %v2259 = vld [vmem:[#allocation8 + $0x60] sm:$0xff]
    %v2260 = vld [vmem:[#allocation8 + $0x68] sm:$0xff]
    %v2261 = vld [vmem:[#allocation8 + $0x70] sm:$0xff]
    %v2262 = vld [vmem:[#allocation8 + $0x78] sm:$0xff]
    %v2263 = vmul.f32 %v2231, %v2247
    %v2264 = vmul.f32 %v2232, %v2248
    %v2265 = vmul.f32 %v2233, %v2249
    %v2266 = vmul.f32 %v2234, %v2250
    %v2267 = vmul.f32 %v2235, %v2251
    %v2268 = vmul.f32 %v2236, %v2252
    %v2269 = vmul.f32 %v2237, %v2253
    %v2270 = vmul.f32 %v2238, %v2254
    %v2271 = vmul.f32 %v2239, %v2255
    %v2272 = vmul.f32 %v2240, %v2256
    %v2273 = vmul.f32 %v2241, %v2257
    %v2274 = vmul.f32 %v2242, %v2258
    %v2275 = vmul.f32 %v2243, %v2259
    %v2276 = vmul.f32 %v2244, %v2260
    %v2277 = vmul.f32 %v2245, %v2261
    %v2278 = vmul.f32 %v2246, %v2262
    %2279 = vmatprep.subr.mxu0 0.0
    %v2280 = vand.u32 %v2278, 4294901760
    %2281 = vmatpush1.msra.mxu0 %v2280
    %2282 = vmatprep.subr.mxu0 0.0
    %v2283 = vand.u32 %v2277, 4294901760
    %2284 = vmatpush1.msra.mxu0 %v2283
    %2285 = vmatprep.subr.mxu0 0.0
    %v2286 = vand.u32 %v2276, 4294901760
    %2287 = vmatpush1.msra.mxu0 %v2286
    %2288 = vmatprep.subr.mxu0 0.0
    %v2289 = vand.u32 %v2275, 4294901760
    %2290 = vmatpush1.msra.mxu0 %v2289
    %2291 = vmatprep.subr.mxu0 0.0
    %v2292 = vand.u32 %v2274, 4294901760
    %2293 = vmatpush1.msra.mxu0 %v2292
    %2294 = vmatprep.subr.mxu0 0.0
    %v2295 = vand.u32 %v2273, 4294901760
    %2296 = vmatpush1.msra.mxu0 %v2295
    %2297 = vmatprep.subr.mxu0 0.0
    %v2298 = vand.u32 %v2272, 4294901760
    %2299 = vmatpush1.msra.mxu0 %v2298
    %2300 = vmatprep.subr.mxu0 0.0
    %v2301 = vand.u32 %v2271, 4294901760
    %2302 = vmatpush1.msra.mxu0 %v2301
    %2303 = vmatprep.subr.mxu0 0.0
    %v2304 = vand.u32 %v2270, 4294901760
    %2305 = vmatpush1.msra.mxu0 %v2304
    %2306 = vmatprep.subr.mxu0 0.0
    %v2307 = vand.u32 %v2269, 4294901760
    %2308 = vmatpush1.msra.mxu0 %v2307
    %2309 = vmatprep.subr.mxu0 0.0
    %v2310 = vand.u32 %v2268, 4294901760
    %2311 = vmatpush1.msra.mxu0 %v2310
    %2312 = vmatprep.subr.mxu0 0.0
    %v2313 = vand.u32 %v2267, 4294901760
    %2314 = vmatpush1.msra.mxu0 %v2313
    %2315 = vmatprep.subr.mxu0 0.0
    %v2316 = vand.u32 %v2266, 4294901760
    %2317 = vmatpush1.msra.mxu0 %v2316
    %2318 = vmatprep.subr.mxu0 0.0
    %v2319 = vand.u32 %v2265, 4294901760
    %2320 = vmatpush1.msra.mxu0 %v2319
    %2321 = vmatprep.subr.mxu0 0.0
    %v2322 = vand.u32 %v2264, 4294901760
    %2323 = vmatpush1.msra.mxu0 %v2322
    %2324 = vmatprep.subr.mxu0 0.0
    %v2325 = vand.u32 %v2263, 4294901760
    %2326 = vmatpush1.msra.mxu0 %v2325
    %2327 = vmatprep.subr.mxu0 0.0
    %2328 = vmatpush2.msra.mxu0 0.0
    %2329 = vmatprep.subr.mxu0 0.0
    %2330 = vmatpush2.msra.mxu0 0.0
    %2331 = vmatprep.subr.mxu0 0.0
    %2332 = vmatpush2.msra.mxu0 0.0
    %2333 = vmatprep.subr.mxu0 0.0
    %2334 = vmatpush2.msra.mxu0 0.0
    %2335 = vmatprep.subr.mxu0 0.0
    %2336 = vmatpush2.msra.mxu0 0.0
    %2337 = vmatprep.subr.mxu0 0.0
    %2338 = vmatpush2.msra.mxu0 0.0
    %2339 = vmatprep.subr.mxu0 0.0
    %2340 = vmatpush2.msra.mxu0 0.0
    %2341 = vmatprep.subr.mxu0 0.0
    %2342 = vmatpush2.msra.mxu0 0.0
    %2343 = vmatprep.subr.mxu0 0.0
    %2344 = vmatpush2.msra.mxu0 0.0
    %2345 = vmatprep.subr.mxu0 0.0
    %2346 = vmatpush2.msra.mxu0 0.0
    %2347 = vmatprep.subr.mxu0 0.0
    %2348 = vmatpush2.msra.mxu0 0.0
    %2349 = vmatprep.subr.mxu0 0.0
    %2350 = vmatpush2.msra.mxu0 0.0
    %2351 = vmatprep.subr.mxu0 0.0
    %2352 = vmatpush2.msra.mxu0 0.0
    %2353 = vmatprep.subr.mxu0 0.0
    %2354 = vmatpush2.msra.mxu0 0.0
    %2355 = vmatprep.subr.mxu0 0.0
    %2356 = vmatpush2.msra.mxu0 0.0
    %2357 = vmatprep.subr.mxu0 0.0
    %2358 = vmatpush2.msra.mxu0 0.0
    %2359 = vmatprep.mubr.f32.mxu0 0.0
    %v2360 = vand.u32 %v1049, 4294901760
    %v2361 = vsub.f32 %v1049, %v2360
    %v2362 = vand.u32 %v2361, 4294901760
    %v2363 = vsub.f32 %v2361, %v2362
    %v2364 = vand.u32 %v2363, 4294901760
    %2365 = vmatmul.mubr.f32.gmra.mxu0 %v2364
    %v2366 = vpop.f32.mrf.mxu0
    %v2367 = vadd.f32 0.0, %v2366
    %v2368 = vpop.f32.mrf.mxu0
    %2369 = vmatprep.mubr.f32.mxu0 0.0
    %v2370 = vand.u32 %v1056, 4294901760
    %v2371 = vsub.f32 %v1056, %v2370
    %v2372 = vand.u32 %v2371, 4294901760
    %v2373 = vsub.f32 %v2371, %v2372
    %v2374 = vand.u32 %v2373, 4294901760
    %2375 = vmatmul.mubr.f32.gmra.mxu0 %v2374
    %v2376 = vpop.f32.mrf.mxu0
    %v2377 = vadd.f32 0.0, %v2376
    %v2378 = vpop.f32.mrf.mxu0
    %2379 = vdwg.mxu0
    %2380 = vmatprep.subr.mxu0 0.0
    %v2381 = vand.u32 %v2278, 4294901760
    %v2382 = vsub.f32 %v2278, %v2381
    %v2383 = vand.u32 %v2382, 4294901760
    %v2384 = vsub.f32 %v2382, %v2383
    %v2385 = vand.u32 %v2384, 4294901760
    %2386 = vmatpush1.msra.mxu0 %v2385
    %2387 = vmatprep.subr.mxu0 0.0
    %v2388 = vand.u32 %v2277, 4294901760
    %v2389 = vsub.f32 %v2277, %v2388
    %v2390 = vand.u32 %v2389, 4294901760
    %v2391 = vsub.f32 %v2389, %v2390
    %v2392 = vand.u32 %v2391, 4294901760
    %2393 = vmatpush1.msra.mxu0 %v2392
    %2394 = vmatprep.subr.mxu0 0.0
    %v2395 = vand.u32 %v2276, 4294901760
    %v2396 = vsub.f32 %v2276, %v2395
    %v2397 = vand.u32 %v2396, 4294901760
    %v2398 = vsub.f32 %v2396, %v2397
    %v2399 = vand.u32 %v2398, 4294901760
    %2400 = vmatpush1.msra.mxu0 %v2399
    %2401 = vmatprep.subr.mxu0 0.0
    %v2402 = vand.u32 %v2275, 4294901760
    %v2403 = vsub.f32 %v2275, %v2402
    %v2404 = vand.u32 %v2403, 4294901760
    %v2405 = vsub.f32 %v2403, %v2404
    %v2406 = vand.u32 %v2405, 4294901760
    %2407 = vmatpush1.msra.mxu0 %v2406
    %2408 = vmatprep.subr.mxu0 0.0
    %v2409 = vand.u32 %v2274, 4294901760
    %v2410 = vsub.f32 %v2274, %v2409
    %v2411 = vand.u32 %v2410, 4294901760
    %v2412 = vsub.f32 %v2410, %v2411
    %v2413 = vand.u32 %v2412, 4294901760
    %2414 = vmatpush1.msra.mxu0 %v2413
    %2415 = vmatprep.subr.mxu0 0.0
    %v2416 = vand.u32 %v2273, 4294901760
    %v2417 = vsub.f32 %v2273, %v2416
    %v2418 = vand.u32 %v2417, 4294901760
    %v2419 = vsub.f32 %v2417, %v2418
    %v2420 = vand.u32 %v2419, 4294901760
    %2421 = vmatpush1.msra.mxu0 %v2420
    %2422 = vmatprep.subr.mxu0 0.0
    %v2423 = vand.u32 %v2272, 4294901760
    %v2424 = vsub.f32 %v2272, %v2423
    %v2425 = vand.u32 %v2424, 4294901760
    %v2426 = vsub.f32 %v2424, %v2425
    %v2427 = vand.u32 %v2426, 4294901760
    %2428 = vmatpush1.msra.mxu0 %v2427
    %2429 = vmatprep.subr.mxu0 0.0
    %v2430 = vand.u32 %v2271, 4294901760
    %v2431 = vsub.f32 %v2271, %v2430
    %v2432 = vand.u32 %v2431, 4294901760
    %v2433 = vsub.f32 %v2431, %v2432
    %v2434 = vand.u32 %v2433, 4294901760
    %2435 = vmatpush1.msra.mxu0 %v2434
    %2436 = vmatprep.subr.mxu0 0.0
    %v2437 = vand.u32 %v2270, 4294901760
    %v2438 = vsub.f32 %v2270, %v2437
    %v2439 = vand.u32 %v2438, 4294901760
    %v2440 = vsub.f32 %v2438, %v2439
    %v2441 = vand.u32 %v2440, 4294901760
    %2442 = vmatpush1.msra.mxu0 %v2441
    %2443 = vmatprep.subr.mxu0 0.0
    %v2444 = vand.u32 %v2269, 4294901760
    %v2445 = vsub.f32 %v2269, %v2444
    %v2446 = vand.u32 %v2445, 4294901760
    %v2447 = vsub.f32 %v2445, %v2446
    %v2448 = vand.u32 %v2447, 4294901760
    %2449 = vmatpush1.msra.mxu0 %v2448
    %2450 = vmatprep.subr.mxu0 0.0
    %v2451 = vand.u32 %v2268, 4294901760
    %v2452 = vsub.f32 %v2268, %v2451
    %v2453 = vand.u32 %v2452, 4294901760
    %v2454 = vsub.f32 %v2452, %v2453
    %v2455 = vand.u32 %v2454, 4294901760
    %2456 = vmatpush1.msra.mxu0 %v2455
    %2457 = vmatprep.subr.mxu0 0.0
    %v2458 = vand.u32 %v2267, 4294901760
    %v2459 = vsub.f32 %v2267, %v2458
    %v2460 = vand.u32 %v2459, 4294901760
    %v2461 = vsub.f32 %v2459, %v2460
    %v2462 = vand.u32 %v2461, 4294901760
    %2463 = vmatpush1.msra.mxu0 %v2462
    %2464 = vmatprep.subr.mxu0 0.0
    %v2465 = vand.u32 %v2266, 4294901760
    %v2466 = vsub.f32 %v2266, %v2465
    %v2467 = vand.u32 %v2466, 4294901760
    %v2468 = vsub.f32 %v2466, %v2467
    %v2469 = vand.u32 %v2468, 4294901760
    %2470 = vmatpush1.msra.mxu0 %v2469
    %2471 = vmatprep.subr.mxu0 0.0
    %v2472 = vand.u32 %v2265, 4294901760
    %v2473 = vsub.f32 %v2265, %v2472
    %v2474 = vand.u32 %v2473, 4294901760
    %v2475 = vsub.f32 %v2473, %v2474
    %v2476 = vand.u32 %v2475, 4294901760
    %2477 = vmatpush1.msra.mxu0 %v2476
    %2478 = vmatprep.subr.mxu0 0.0
    %v2479 = vand.u32 %v2264, 4294901760
    %v2480 = vsub.f32 %v2264, %v2479
    %v2481 = vand.u32 %v2480, 4294901760
    %v2482 = vsub.f32 %v2480, %v2481
    %v2483 = vand.u32 %v2482, 4294901760
    %2484 = vmatpush1.msra.mxu0 %v2483
    %2485 = vmatprep.subr.mxu0 0.0
    %v2486 = vand.u32 %v2263, 4294901760
    %v2487 = vsub.f32 %v2263, %v2486
    %v2488 = vand.u32 %v2487, 4294901760
    %v2489 = vsub.f32 %v2487, %v2488
    %v2490 = vand.u32 %v2489, 4294901760
    %2491 = vmatpush1.msra.mxu0 %v2490
    %2492 = vmatprep.subr.mxu0 0.0
    %2493 = vmatpush2.msra.mxu0 0.0
    %2494 = vmatprep.subr.mxu0 0.0
    %2495 = vmatpush2.msra.mxu0 0.0
    %2496 = vmatprep.subr.mxu0 0.0
    %2497 = vmatpush2.msra.mxu0 0.0
    %2498 = vmatprep.subr.mxu0 0.0
    %2499 = vmatpush2.msra.mxu0 0.0
    %2500 = vmatprep.subr.mxu0 0.0
    %2501 = vmatpush2.msra.mxu0 0.0
    %2502 = vmatprep.subr.mxu0 0.0
    %2503 = vmatpush2.msra.mxu0 0.0
    %2504 = vmatprep.subr.mxu0 0.0
    %2505 = vmatpush2.msra.mxu0 0.0
    %2506 = vmatprep.subr.mxu0 0.0
    %2507 = vmatpush2.msra.mxu0 0.0
    %2508 = vmatprep.subr.mxu0 0.0
    %2509 = vmatpush2.msra.mxu0 0.0
    %2510 = vmatprep.subr.mxu0 0.0
    %2511 = vmatpush2.msra.mxu0 0.0
    %2512 = vmatprep.subr.mxu0 0.0
    %2513 = vmatpush2.msra.mxu0 0.0
    %2514 = vmatprep.subr.mxu0 0.0
    %2515 = vmatpush2.msra.mxu0 0.0
    %2516 = vmatprep.subr.mxu0 0.0
    %2517 = vmatpush2.msra.mxu0 0.0
    %2518 = vmatprep.subr.mxu0 0.0
    %2519 = vmatpush2.msra.mxu0 0.0
    %2520 = vmatprep.subr.mxu0 0.0
    %2521 = vmatpush2.msra.mxu0 0.0
    %2522 = vmatprep.subr.mxu0 0.0
    %2523 = vmatpush2.msra.mxu0 0.0
    %2524 = vmatprep.mubr.f32.mxu0 0.0
    %v2525 = vand.u32 %v1049, 4294901760
    %2526 = vmatmul.mubr.f32.gmra.mxu0 %v2525
    %v2527 = vpop.f32.mrf.mxu0
    %v2528 = vadd.f32 %v2367, %v2527
    %v2529 = vpop.f32.mrf.mxu0
    %2530 = vmatprep.mubr.f32.mxu0 0.0
    %v2531 = vand.u32 %v1056, 4294901760
    %2532 = vmatmul.mubr.f32.gmra.mxu0 %v2531
    %v2533 = vpop.f32.mrf.mxu0
    %v2534 = vadd.f32 %v2377, %v2533
    %v2535 = vpop.f32.mrf.mxu0
    %2536 = vdwg.mxu0
    %2537 = vmatprep.subr.mxu0 0.0
    %v2538 = vand.u32 %v2278, 4294901760
    %v2539 = vsub.f32 %v2278, %v2538
    %2540 = vmatpush1.msra.mxu0 %v2539
    %2541 = vmatprep.subr.mxu0 0.0
    %v2542 = vand.u32 %v2277, 4294901760
    %v2543 = vsub.f32 %v2277, %v2542
    %2544 = vmatpush1.msra.mxu0 %v2543
    %2545 = vmatprep.subr.mxu0 0.0
    %v2546 = vand.u32 %v2276, 4294901760
    %v2547 = vsub.f32 %v2276, %v2546
    %2548 = vmatpush1.msra.mxu0 %v2547
    %2549 = vmatprep.subr.mxu0 0.0
    %v2550 = vand.u32 %v2275, 4294901760
    %v2551 = vsub.f32 %v2275, %v2550
    %2552 = vmatpush1.msra.mxu0 %v2551
    %2553 = vmatprep.subr.mxu0 0.0
    %v2554 = vand.u32 %v2274, 4294901760
    %v2555 = vsub.f32 %v2274, %v2554
    %2556 = vmatpush1.msra.mxu0 %v2555
    %2557 = vmatprep.subr.mxu0 0.0
    %v2558 = vand.u32 %v2273, 4294901760
    %v2559 = vsub.f32 %v2273, %v2558
    %2560 = vmatpush1.msra.mxu0 %v2559
    %2561 = vmatprep.subr.mxu0 0.0
    %v2562 = vand.u32 %v2272, 4294901760
    %v2563 = vsub.f32 %v2272, %v2562
    %2564 = vmatpush1.msra.mxu0 %v2563
    %2565 = vmatprep.subr.mxu0 0.0
    %v2566 = vand.u32 %v2271, 4294901760
    %v2567 = vsub.f32 %v2271, %v2566
    %2568 = vmatpush1.msra.mxu0 %v2567
    %2569 = vmatprep.subr.mxu0 0.0
    %v2570 = vand.u32 %v2270, 4294901760
    %v2571 = vsub.f32 %v2270, %v2570
    %2572 = vmatpush1.msra.mxu0 %v2571
    %2573 = vmatprep.subr.mxu0 0.0
    %v2574 = vand.u32 %v2269, 4294901760
    %v2575 = vsub.f32 %v2269, %v2574
    %2576 = vmatpush1.msra.mxu0 %v2575
    %2577 = vmatprep.subr.mxu0 0.0
    %v2578 = vand.u32 %v2268, 4294901760
    %v2579 = vsub.f32 %v2268, %v2578
    %2580 = vmatpush1.msra.mxu0 %v2579
    %2581 = vmatprep.subr.mxu0 0.0
    %v2582 = vand.u32 %v2267, 4294901760
    %v2583 = vsub.f32 %v2267, %v2582
    %2584 = vmatpush1.msra.mxu0 %v2583
    %2585 = vmatprep.subr.mxu0 0.0
    %v2586 = vand.u32 %v2266, 4294901760
    %v2587 = vsub.f32 %v2266, %v2586
    %2588 = vmatpush1.msra.mxu0 %v2587
    %2589 = vmatprep.subr.mxu0 0.0
    %v2590 = vand.u32 %v2265, 4294901760
    %v2591 = vsub.f32 %v2265, %v2590
    %2592 = vmatpush1.msra.mxu0 %v2591
    %2593 = vmatprep.subr.mxu0 0.0
    %v2594 = vand.u32 %v2264, 4294901760
    %v2595 = vsub.f32 %v2264, %v2594
    %2596 = vmatpush1.msra.mxu0 %v2595
    %2597 = vmatprep.subr.mxu0 0.0
    %v2598 = vand.u32 %v2263, 4294901760
    %v2599 = vsub.f32 %v2263, %v2598
    %2600 = vmatpush1.msra.mxu0 %v2599
    %2601 = vmatprep.subr.mxu0 0.0
    %2602 = vmatpush2.msra.mxu0 0.0
    %2603 = vmatprep.subr.mxu0 0.0
    %2604 = vmatpush2.msra.mxu0 0.0
    %2605 = vmatprep.subr.mxu0 0.0
    %2606 = vmatpush2.msra.mxu0 0.0
    %2607 = vmatprep.subr.mxu0 0.0
    %2608 = vmatpush2.msra.mxu0 0.0
    %2609 = vmatprep.subr.mxu0 0.0
    %2610 = vmatpush2.msra.mxu0 0.0
    %2611 = vmatprep.subr.mxu0 0.0
    %2612 = vmatpush2.msra.mxu0 0.0
    %2613 = vmatprep.subr.mxu0 0.0
    %2614 = vmatpush2.msra.mxu0 0.0
    %2615 = vmatprep.subr.mxu0 0.0
    %2616 = vmatpush2.msra.mxu0 0.0
    %2617 = vmatprep.subr.mxu0 0.0
    %2618 = vmatpush2.msra.mxu0 0.0
    %2619 = vmatprep.subr.mxu0 0.0
    %2620 = vmatpush2.msra.mxu0 0.0
    %2621 = vmatprep.subr.mxu0 0.0
    %2622 = vmatpush2.msra.mxu0 0.0
    %2623 = vmatprep.subr.mxu0 0.0
    %2624 = vmatpush2.msra.mxu0 0.0
    %2625 = vmatprep.subr.mxu0 0.0
    %2626 = vmatpush2.msra.mxu0 0.0
    %2627 = vmatprep.subr.mxu0 0.0
    %2628 = vmatpush2.msra.mxu0 0.0
    %2629 = vmatprep.subr.mxu0 0.0
    %2630 = vmatpush2.msra.mxu0 0.0
    %2631 = vmatprep.subr.mxu0 0.0
    %2632 = vmatpush2.msra.mxu0 0.0
    %2633 = vmatprep.mubr.f32.mxu0 0.0
    %v2634 = vand.u32 %v1049, 4294901760
    %v2635 = vsub.f32 %v1049, %v2634
    %2636 = vmatmul.mubr.f32.gmra.mxu0 %v2635
    %v2637 = vpop.f32.mrf.mxu0
    %v2638 = vadd.f32 %v2528, %v2637
    %v2639 = vpop.f32.mrf.mxu0
    %2640 = vmatprep.mubr.f32.mxu0 0.0
    %v2641 = vand.u32 %v1056, 4294901760
    %v2642 = vsub.f32 %v1056, %v2641
    %2643 = vmatmul.mubr.f32.gmra.mxu0 %v2642
    %v2644 = vpop.f32.mrf.mxu0
    %v2645 = vadd.f32 %v2534, %v2644
    %v2646 = vpop.f32.mrf.mxu0
    %2647 = vdwg.mxu0
    %2648 = vmatprep.subr.mxu0 0.0
    %v2649 = vand.u32 %v2278, 4294901760
    %2650 = vmatpush1.msra.mxu0 %v2649
    %2651 = vmatprep.subr.mxu0 0.0
    %v2652 = vand.u32 %v2277, 4294901760
    %2653 = vmatpush1.msra.mxu0 %v2652
    %2654 = vmatprep.subr.mxu0 0.0
    %v2655 = vand.u32 %v2276, 4294901760
    %2656 = vmatpush1.msra.mxu0 %v2655
    %2657 = vmatprep.subr.mxu0 0.0
    %v2658 = vand.u32 %v2275, 4294901760
    %2659 = vmatpush1.msra.mxu0 %v2658
    %2660 = vmatprep.subr.mxu0 0.0
    %v2661 = vand.u32 %v2274, 4294901760
    %2662 = vmatpush1.msra.mxu0 %v2661
    %2663 = vmatprep.subr.mxu0 0.0
    %v2664 = vand.u32 %v2273, 4294901760
    %2665 = vmatpush1.msra.mxu0 %v2664
    %2666 = vmatprep.subr.mxu0 0.0
    %v2667 = vand.u32 %v2272, 4294901760
    %2668 = vmatpush1.msra.mxu0 %v2667
    %2669 = vmatprep.subr.mxu0 0.0
    %v2670 = vand.u32 %v2271, 4294901760
    %2671 = vmatpush1.msra.mxu0 %v2670
    %2672 = vmatprep.subr.mxu0 0.0
    %v2673 = vand.u32 %v2270, 4294901760
    %2674 = vmatpush1.msra.mxu0 %v2673
    %2675 = vmatprep.subr.mxu0 0.0
    %v2676 = vand.u32 %v2269, 4294901760
    %2677 = vmatpush1.msra.mxu0 %v2676
    %2678 = vmatprep.subr.mxu0 0.0
    %v2679 = vand.u32 %v2268, 4294901760
    %2680 = vmatpush1.msra.mxu0 %v2679
    %2681 = vmatprep.subr.mxu0 0.0
    %v2682 = vand.u32 %v2267, 4294901760
    %2683 = vmatpush1.msra.mxu0 %v2682
    %2684 = vmatprep.subr.mxu0 0.0
    %v2685 = vand.u32 %v2266, 4294901760
    %2686 = vmatpush1.msra.mxu0 %v2685
    %2687 = vmatprep.subr.mxu0 0.0
    %v2688 = vand.u32 %v2265, 4294901760
    %2689 = vmatpush1.msra.mxu0 %v2688
    %2690 = vmatprep.subr.mxu0 0.0
    %v2691 = vand.u32 %v2264, 4294901760
    %2692 = vmatpush1.msra.mxu0 %v2691
    %2693 = vmatprep.subr.mxu0 0.0
    %v2694 = vand.u32 %v2263, 4294901760
    %2695 = vmatpush1.msra.mxu0 %v2694
    %2696 = vmatprep.subr.mxu0 0.0
    %2697 = vmatpush2.msra.mxu0 0.0
    %2698 = vmatprep.subr.mxu0 0.0
    %2699 = vmatpush2.msra.mxu0 0.0
    %2700 = vmatprep.subr.mxu0 0.0
    %2701 = vmatpush2.msra.mxu0 0.0
    %2702 = vmatprep.subr.mxu0 0.0
    %2703 = vmatpush2.msra.mxu0 0.0
    %2704 = vmatprep.subr.mxu0 0.0
    %2705 = vmatpush2.msra.mxu0 0.0
    %2706 = vmatprep.subr.mxu0 0.0
    %2707 = vmatpush2.msra.mxu0 0.0
    %2708 = vmatprep.subr.mxu0 0.0
    %2709 = vmatpush2.msra.mxu0 0.0
    %2710 = vmatprep.subr.mxu0 0.0
    %2711 = vmatpush2.msra.mxu0 0.0
    %2712 = vmatprep.subr.mxu0 0.0
    %2713 = vmatpush2.msra.mxu0 0.0
    %2714 = vmatprep.subr.mxu0 0.0
    %2715 = vmatpush2.msra.mxu0 0.0
    %2716 = vmatprep.subr.mxu0 0.0
    %2717 = vmatpush2.msra.mxu0 0.0
    %2718 = vmatprep.subr.mxu0 0.0
    %2719 = vmatpush2.msra.mxu0 0.0
    %2720 = vmatprep.subr.mxu0 0.0
    %2721 = vmatpush2.msra.mxu0 0.0
    %2722 = vmatprep.subr.mxu0 0.0
    %2723 = vmatpush2.msra.mxu0 0.0
    %2724 = vmatprep.subr.mxu0 0.0
    %2725 = vmatpush2.msra.mxu0 0.0
    %2726 = vmatprep.subr.mxu0 0.0
    %2727 = vmatpush2.msra.mxu0 0.0
    %2728 = vmatprep.mubr.f32.mxu0 0.0
    %v2729 = vand.u32 %v1049, 4294901760
    %v2730 = vsub.f32 %v1049, %v2729
    %v2731 = vand.u32 %v2730, 4294901760
    %2732 = vmatmul.mubr.f32.gmra.mxu0 %v2731
    %v2733 = vpop.f32.mrf.mxu0
    %v2734 = vadd.f32 %v2638, %v2733
    %v2735 = vpop.f32.mrf.mxu0
    %2736 = vmatprep.mubr.f32.mxu0 0.0
    %v2737 = vand.u32 %v1056, 4294901760
    %v2738 = vsub.f32 %v1056, %v2737
    %v2739 = vand.u32 %v2738, 4294901760
    %2740 = vmatmul.mubr.f32.gmra.mxu0 %v2739
    %v2741 = vpop.f32.mrf.mxu0
    %v2742 = vadd.f32 %v2645, %v2741
    %v2743 = vpop.f32.mrf.mxu0
    %2744 = vdwg.mxu0
    %2745 = vmatprep.subr.mxu0 0.0
    %v2746 = vand.u32 %v2278, 4294901760
    %v2747 = vsub.f32 %v2278, %v2746
    %v2748 = vand.u32 %v2747, 4294901760
    %2749 = vmatpush1.msra.mxu0 %v2748
    %2750 = vmatprep.subr.mxu0 0.0
    %v2751 = vand.u32 %v2277, 4294901760
    %v2752 = vsub.f32 %v2277, %v2751
    %v2753 = vand.u32 %v2752, 4294901760
    %2754 = vmatpush1.msra.mxu0 %v2753
    %2755 = vmatprep.subr.mxu0 0.0
    %v2756 = vand.u32 %v2276, 4294901760
    %v2757 = vsub.f32 %v2276, %v2756
    %v2758 = vand.u32 %v2757, 4294901760
    %2759 = vmatpush1.msra.mxu0 %v2758
    %2760 = vmatprep.subr.mxu0 0.0
    %v2761 = vand.u32 %v2275, 4294901760
    %v2762 = vsub.f32 %v2275, %v2761
    %v2763 = vand.u32 %v2762, 4294901760
    %2764 = vmatpush1.msra.mxu0 %v2763
    %2765 = vmatprep.subr.mxu0 0.0
    %v2766 = vand.u32 %v2274, 4294901760
    %v2767 = vsub.f32 %v2274, %v2766
    %v2768 = vand.u32 %v2767, 4294901760
    %2769 = vmatpush1.msra.mxu0 %v2768
    %2770 = vmatprep.subr.mxu0 0.0
    %v2771 = vand.u32 %v2273, 4294901760
    %v2772 = vsub.f32 %v2273, %v2771
    %v2773 = vand.u32 %v2772, 4294901760
    %2774 = vmatpush1.msra.mxu0 %v2773
    %2775 = vmatprep.subr.mxu0 0.0
    %v2776 = vand.u32 %v2272, 4294901760
    %v2777 = vsub.f32 %v2272, %v2776
    %v2778 = vand.u32 %v2777, 4294901760
    %2779 = vmatpush1.msra.mxu0 %v2778
    %2780 = vmatprep.subr.mxu0 0.0
    %v2781 = vand.u32 %v2271, 4294901760
    %v2782 = vsub.f32 %v2271, %v2781
    %v2783 = vand.u32 %v2782, 4294901760
    %2784 = vmatpush1.msra.mxu0 %v2783
    %2785 = vmatprep.subr.mxu0 0.0
    %v2786 = vand.u32 %v2270, 4294901760
    %v2787 = vsub.f32 %v2270, %v2786
    %v2788 = vand.u32 %v2787, 4294901760
    %2789 = vmatpush1.msra.mxu0 %v2788
    %2790 = vmatprep.subr.mxu0 0.0
    %v2791 = vand.u32 %v2269, 4294901760
    %v2792 = vsub.f32 %v2269, %v2791
    %v2793 = vand.u32 %v2792, 4294901760
    %2794 = vmatpush1.msra.mxu0 %v2793
    %2795 = vmatprep.subr.mxu0 0.0
    %v2796 = vand.u32 %v2268, 4294901760
    %v2797 = vsub.f32 %v2268, %v2796
    %v2798 = vand.u32 %v2797, 4294901760
    %2799 = vmatpush1.msra.mxu0 %v2798
    %2800 = vmatprep.subr.mxu0 0.0
    %v2801 = vand.u32 %v2267, 4294901760
    %v2802 = vsub.f32 %v2267, %v2801
    %v2803 = vand.u32 %v2802, 4294901760
    %2804 = vmatpush1.msra.mxu0 %v2803
    %2805 = vmatprep.subr.mxu0 0.0
    %v2806 = vand.u32 %v2266, 4294901760
    %v2807 = vsub.f32 %v2266, %v2806
    %v2808 = vand.u32 %v2807, 4294901760
    %2809 = vmatpush1.msra.mxu0 %v2808
    %2810 = vmatprep.subr.mxu0 0.0
    %v2811 = vand.u32 %v2265, 4294901760
    %v2812 = vsub.f32 %v2265, %v2811
    %v2813 = vand.u32 %v2812, 4294901760
    %2814 = vmatpush1.msra.mxu0 %v2813
    %2815 = vmatprep.subr.mxu0 0.0
    %v2816 = vand.u32 %v2264, 4294901760
    %v2817 = vsub.f32 %v2264, %v2816
    %v2818 = vand.u32 %v2817, 4294901760
    %2819 = vmatpush1.msra.mxu0 %v2818
    %2820 = vmatprep.subr.mxu0 0.0
    %v2821 = vand.u32 %v2263, 4294901760
    %v2822 = vsub.f32 %v2263, %v2821
    %v2823 = vand.u32 %v2822, 4294901760
    %2824 = vmatpush1.msra.mxu0 %v2823
    %2825 = vmatprep.subr.mxu0 0.0
    %2826 = vmatpush2.msra.mxu0 0.0
    %2827 = vmatprep.subr.mxu0 0.0
    %2828 = vmatpush2.msra.mxu0 0.0
    %2829 = vmatprep.subr.mxu0 0.0
    %2830 = vmatpush2.msra.mxu0 0.0
    %2831 = vmatprep.subr.mxu0 0.0
    %2832 = vmatpush2.msra.mxu0 0.0
    %2833 = vmatprep.subr.mxu0 0.0
    %2834 = vmatpush2.msra.mxu0 0.0
    %2835 = vmatprep.subr.mxu0 0.0
    %2836 = vmatpush2.msra.mxu0 0.0
    %2837 = vmatprep.subr.mxu0 0.0
    %2838 = vmatpush2.msra.mxu0 0.0
    %2839 = vmatprep.subr.mxu0 0.0
    %2840 = vmatpush2.msra.mxu0 0.0
    %2841 = vmatprep.subr.mxu0 0.0
    %2842 = vmatpush2.msra.mxu0 0.0
    %2843 = vmatprep.subr.mxu0 0.0
    %2844 = vmatpush2.msra.mxu0 0.0
    %2845 = vmatprep.subr.mxu0 0.0
    %2846 = vmatpush2.msra.mxu0 0.0
    %2847 = vmatprep.subr.mxu0 0.0
    %2848 = vmatpush2.msra.mxu0 0.0
    %2849 = vmatprep.subr.mxu0 0.0
    %2850 = vmatpush2.msra.mxu0 0.0
    %2851 = vmatprep.subr.mxu0 0.0
    %2852 = vmatpush2.msra.mxu0 0.0
    %2853 = vmatprep.subr.mxu0 0.0
    %2854 = vmatpush2.msra.mxu0 0.0
    %2855 = vmatprep.subr.mxu0 0.0
    %2856 = vmatpush2.msra.mxu0 0.0
    %2857 = vmatprep.mubr.f32.mxu0 0.0
    %v2858 = vand.u32 %v1049, 4294901760
    %2859 = vmatmul.mubr.f32.gmra.mxu0 %v2858
    %v2860 = vpop.f32.mrf.mxu0
    %v2861 = vadd.f32 %v2734, %v2860
    %v2862 = vpop.f32.mrf.mxu0
    %2863 = vmatprep.mubr.f32.mxu0 0.0
    %v2864 = vand.u32 %v1056, 4294901760
    %2865 = vmatmul.mubr.f32.gmra.mxu0 %v2864
    %v2866 = vpop.f32.mrf.mxu0
    %v2867 = vadd.f32 %v2742, %v2866
    %v2868 = vpop.f32.mrf.mxu0
    %2869 = vdwg.mxu0
    %2870 = vmatprep.subr.mxu0 0.0
    %v2871 = vand.u32 %v2278, 4294901760
    %2872 = vmatpush1.msra.mxu0 %v2871
    %2873 = vmatprep.subr.mxu0 0.0
    %v2874 = vand.u32 %v2277, 4294901760
    %2875 = vmatpush1.msra.mxu0 %v2874
    %2876 = vmatprep.subr.mxu0 0.0
    %v2877 = vand.u32 %v2276, 4294901760
    %2878 = vmatpush1.msra.mxu0 %v2877
    %2879 = vmatprep.subr.mxu0 0.0
    %v2880 = vand.u32 %v2275, 4294901760
    %2881 = vmatpush1.msra.mxu0 %v2880
    %2882 = vmatprep.subr.mxu0 0.0
    %v2883 = vand.u32 %v2274, 4294901760
    %2884 = vmatpush1.msra.mxu0 %v2883
    %2885 = vmatprep.subr.mxu0 0.0
    %v2886 = vand.u32 %v2273, 4294901760
    %2887 = vmatpush1.msra.mxu0 %v2886
    %2888 = vmatprep.subr.mxu0 0.0
    %v2889 = vand.u32 %v2272, 4294901760
    %2890 = vmatpush1.msra.mxu0 %v2889
    %2891 = vmatprep.subr.mxu0 0.0
    %v2892 = vand.u32 %v2271, 4294901760
    %2893 = vmatpush1.msra.mxu0 %v2892
    %2894 = vmatprep.subr.mxu0 0.0
    %v2895 = vand.u32 %v2270, 4294901760
    %2896 = vmatpush1.msra.mxu0 %v2895
    %2897 = vmatprep.subr.mxu0 0.0
    %v2898 = vand.u32 %v2269, 4294901760
    %2899 = vmatpush1.msra.mxu0 %v2898
    %2900 = vmatprep.subr.mxu0 0.0
    %v2901 = vand.u32 %v2268, 4294901760
    %2902 = vmatpush1.msra.mxu0 %v2901
    %2903 = vmatprep.subr.mxu0 0.0
    %v2904 = vand.u32 %v2267, 4294901760
    %2905 = vmatpush1.msra.mxu0 %v2904
    %2906 = vmatprep.subr.mxu0 0.0
    %v2907 = vand.u32 %v2266, 4294901760
    %2908 = vmatpush1.msra.mxu0 %v2907
    %2909 = vmatprep.subr.mxu0 0.0
    %v2910 = vand.u32 %v2265, 4294901760
    %2911 = vmatpush1.msra.mxu0 %v2910
    %2912 = vmatprep.subr.mxu0 0.0
    %v2913 = vand.u32 %v2264, 4294901760
    %2914 = vmatpush1.msra.mxu0 %v2913
    %2915 = vmatprep.subr.mxu0 0.0
    %v2916 = vand.u32 %v2263, 4294901760
    %2917 = vmatpush1.msra.mxu0 %v2916
    %2918 = vmatprep.subr.mxu0 0.0
    %2919 = vmatpush2.msra.mxu0 0.0
    %2920 = vmatprep.subr.mxu0 0.0
    %2921 = vmatpush2.msra.mxu0 0.0
    %2922 = vmatprep.subr.mxu0 0.0
    %2923 = vmatpush2.msra.mxu0 0.0
    %2924 = vmatprep.subr.mxu0 0.0
    %2925 = vmatpush2.msra.mxu0 0.0
    %2926 = vmatprep.subr.mxu0 0.0
    %2927 = vmatpush2.msra.mxu0 0.0
    %2928 = vmatprep.subr.mxu0 0.0
    %2929 = vmatpush2.msra.mxu0 0.0
    %2930 = vmatprep.subr.mxu0 0.0
    %2931 = vmatpush2.msra.mxu0 0.0
    %2932 = vmatprep.subr.mxu0 0.0
    %2933 = vmatpush2.msra.mxu0 0.0
    %2934 = vmatprep.subr.mxu0 0.0
    %2935 = vmatpush2.msra.mxu0 0.0
    %2936 = vmatprep.subr.mxu0 0.0
    %2937 = vmatpush2.msra.mxu0 0.0
    %2938 = vmatprep.subr.mxu0 0.0
    %2939 = vmatpush2.msra.mxu0 0.0
    %2940 = vmatprep.subr.mxu0 0.0
    %2941 = vmatpush2.msra.mxu0 0.0
    %2942 = vmatprep.subr.mxu0 0.0
    %2943 = vmatpush2.msra.mxu0 0.0
    %2944 = vmatprep.subr.mxu0 0.0
    %2945 = vmatpush2.msra.mxu0 0.0
    %2946 = vmatprep.subr.mxu0 0.0
    %2947 = vmatpush2.msra.mxu0 0.0
    %2948 = vmatprep.subr.mxu0 0.0
    %2949 = vmatpush2.msra.mxu0 0.0
    %2950 = vmatprep.mubr.f32.mxu0 0.0
    %v2951 = vand.u32 %v1049, 4294901760
    %2952 = vmatmul.mubr.f32.gmra.mxu0 %v2951
    %v2953 = vpop.f32.mrf.mxu0
    %v2954 = vadd.f32 %v2861, %v2953
    %v2955 = vpop.f32.mrf.mxu0
    %2956 = vmatprep.mubr.f32.mxu0 0.0
    %v2957 = vand.u32 %v1056, 4294901760
    %2958 = vmatmul.mubr.f32.gmra.mxu0 %v2957
    %v2959 = vpop.f32.mrf.mxu0
    %v2960 = vadd.f32 %v2867, %v2959
    %v2961 = vpop.f32.mrf.mxu0
    %2962 = vdwg.mxu0
    %v2963 = vld [vmem:[#allocation11] sm:$0xff]
    %v2964 = vld [vmem:[#allocation11 + $0x8] sm:$0xff]
    %v2965 = vmul.f32 %v2954, %v2963
    %v2966 = vmul.f32 %v2960, %v2964
    %v2967 = vld [vmem:[#allocation10] sm:$0xff]
    %v2968 = vld [vmem:[#allocation10 + $0x8] sm:$0xff]
    %v2969 = vld [vmem:[#allocation10 + $0x10] sm:$0xff]
    %v2970 = vld [vmem:[#allocation10 + $0x18] sm:$0xff]
    %v2971 = vld [vmem:[#allocation10 + $0x20] sm:$0xff]
    %v2972 = vld [vmem:[#allocation10 + $0x28] sm:$0xff]
    %v2973 = vld [vmem:[#allocation10 + $0x30] sm:$0xff]
    %v2974 = vld [vmem:[#allocation10 + $0x38] sm:$0xff]
    %v2975 = vld [vmem:[#allocation10 + $0x40] sm:$0xff]
    %v2976 = vld [vmem:[#allocation10 + $0x48] sm:$0xff]
    %v2977 = vld [vmem:[#allocation10 + $0x50] sm:$0xff]
    %v2978 = vld [vmem:[#allocation10 + $0x58] sm:$0xff]
    %v2979 = vld [vmem:[#allocation10 + $0x60] sm:$0xff]
    %v2980 = vld [vmem:[#allocation10 + $0x68] sm:$0xff]
    %v2981 = vld [vmem:[#allocation10 + $0x70] sm:$0xff]
    %v2982 = vld [vmem:[#allocation10 + $0x78] sm:$0xff]
    %v2983 = vmul.f32 %v1735, %v2967
    %v2984 = vmul.f32 %v1741, %v2968
    %v2985 = vmul.f32 %v1735, %v2969
    %v2986 = vmul.f32 %v1741, %v2970
    %v2987 = vmul.f32 %v1735, %v2971
    %v2988 = vmul.f32 %v1741, %v2972
    %v2989 = vmul.f32 %v1735, %v2973
    %v2990 = vmul.f32 %v1741, %v2974
    %v2991 = vmul.f32 %v1735, %v2975
    %v2992 = vmul.f32 %v1741, %v2976
    %v2993 = vmul.f32 %v1735, %v2977
    %v2994 = vmul.f32 %v1741, %v2978
    %v2995 = vmul.f32 %v1735, %v2979
    %v2996 = vmul.f32 %v1741, %v2980
    %v2997 = vmul.f32 %v1735, %v2981
    %v2998 = vmul.f32 %v1741, %v2982
    %2999 = vmatprep.subr.mxu0 0.0
    %v3000 = vand.u32 %v2998, 4294901760
    %3001 = vmatpush1.msra.mxu0 %v3000
    %3002 = vmatprep.subr.mxu0 0.0
    %v3003 = vand.u32 %v2997, 4294901760
    %3004 = vmatpush1.msra.mxu0 %v3003
    %3005 = vmatprep.subr.mxu0 0.0
    %v3006 = vand.u32 %v2996, 4294901760
    %3007 = vmatpush1.msra.mxu0 %v3006
    %3008 = vmatprep.subr.mxu0 0.0
    %v3009 = vand.u32 %v2995, 4294901760
    %3010 = vmatpush1.msra.mxu0 %v3009
    %3011 = vmatprep.subr.mxu0 0.0
    %v3012 = vand.u32 %v2994, 4294901760
    %3013 = vmatpush1.msra.mxu0 %v3012
    %3014 = vmatprep.subr.mxu0 0.0
    %v3015 = vand.u32 %v2993, 4294901760
    %3016 = vmatpush1.msra.mxu0 %v3015
    %3017 = vmatprep.subr.mxu0 0.0
    %v3018 = vand.u32 %v2992, 4294901760
    %3019 = vmatpush1.msra.mxu0 %v3018
    %3020 = vmatprep.subr.mxu0 0.0
    %v3021 = vand.u32 %v2991, 4294901760
    %3022 = vmatpush1.msra.mxu0 %v3021
    %3023 = vmatprep.subr.mxu0 0.0
    %v3024 = vand.u32 %v2990, 4294901760
    %3025 = vmatpush1.msra.mxu0 %v3024
    %3026 = vmatprep.subr.mxu0 0.0
    %v3027 = vand.u32 %v2989, 4294901760
    %3028 = vmatpush1.msra.mxu0 %v3027
    %3029 = vmatprep.subr.mxu0 0.0
    %v3030 = vand.u32 %v2988, 4294901760
    %3031 = vmatpush1.msra.mxu0 %v3030
    %3032 = vmatprep.subr.mxu0 0.0
    %v3033 = vand.u32 %v2987, 4294901760
    %3034 = vmatpush1.msra.mxu0 %v3033
    %3035 = vmatprep.subr.mxu0 0.0
    %v3036 = vand.u32 %v2986, 4294901760
    %3037 = vmatpush1.msra.mxu0 %v3036
    %3038 = vmatprep.subr.mxu0 0.0
    %v3039 = vand.u32 %v2985, 4294901760
    %3040 = vmatpush1.msra.mxu0 %v3039
    %3041 = vmatprep.subr.mxu0 0.0
    %v3042 = vand.u32 %v2984, 4294901760
    %3043 = vmatpush1.msra.mxu0 %v3042
    %3044 = vmatprep.subr.mxu0 0.0
    %v3045 = vand.u32 %v2983, 4294901760
    %3046 = vmatpush1.msra.mxu0 %v3045
    %3047 = vmatprep.subr.mxu0 0.0
    %3048 = vmatpush2.msra.mxu0 0.0
    %3049 = vmatprep.subr.mxu0 0.0
    %3050 = vmatpush2.msra.mxu0 0.0
    %3051 = vmatprep.subr.mxu0 0.0
    %3052 = vmatpush2.msra.mxu0 0.0
    %3053 = vmatprep.subr.mxu0 0.0
    %3054 = vmatpush2.msra.mxu0 0.0
    %3055 = vmatprep.subr.mxu0 0.0
    %3056 = vmatpush2.msra.mxu0 0.0
    %3057 = vmatprep.subr.mxu0 0.0
    %3058 = vmatpush2.msra.mxu0 0.0
    %3059 = vmatprep.subr.mxu0 0.0
    %3060 = vmatpush2.msra.mxu0 0.0
    %3061 = vmatprep.subr.mxu0 0.0
    %3062 = vmatpush2.msra.mxu0 0.0
    %3063 = vmatprep.subr.mxu0 0.0
    %3064 = vmatpush2.msra.mxu0 0.0
    %3065 = vmatprep.subr.mxu0 0.0
    %3066 = vmatpush2.msra.mxu0 0.0
    %3067 = vmatprep.subr.mxu0 0.0
    %3068 = vmatpush2.msra.mxu0 0.0
    %3069 = vmatprep.subr.mxu0 0.0
    %3070 = vmatpush2.msra.mxu0 0.0
    %3071 = vmatprep.subr.mxu0 0.0
    %3072 = vmatpush2.msra.mxu0 0.0
    %3073 = vmatprep.subr.mxu0 0.0
    %3074 = vmatpush2.msra.mxu0 0.0
    %3075 = vmatprep.subr.mxu0 0.0
    %3076 = vmatpush2.msra.mxu0 0.0
    %3077 = vmatprep.subr.mxu0 0.0
    %3078 = vmatpush2.msra.mxu0 0.0
    %3079 = vmatprep.mubr.f32.mxu0 0.0
    %v3080 = vand.u32 %v2965, 4294901760
    %v3081 = vsub.f32 %v2965, %v3080
    %v3082 = vand.u32 %v3081, 4294901760
    %v3083 = vsub.f32 %v3081, %v3082
    %v3084 = vand.u32 %v3083, 4294901760
    %3085 = vmatmul.mubr.f32.gmra.mxu0 %v3084
    %v3086 = vpop.f32.mrf.mxu0
    %v3087 = vadd.f32 0.0, %v3086
    %v3088 = vpop.f32.mrf.mxu0
    %3089 = vmatprep.mubr.f32.mxu0 0.0
    %v3090 = vand.u32 %v2966, 4294901760
    %v3091 = vsub.f32 %v2966, %v3090
    %v3092 = vand.u32 %v3091, 4294901760
    %v3093 = vsub.f32 %v3091, %v3092
    %v3094 = vand.u32 %v3093, 4294901760
    %3095 = vmatmul.mubr.f32.gmra.mxu0 %v3094
    %v3096 = vpop.f32.mrf.mxu0
    %v3097 = vadd.f32 0.0, %v3096
    %v3098 = vpop.f32.mrf.mxu0
    %3099 = vdwg.mxu0
    %3100 = vmatprep.subr.mxu0 0.0
    %v3101 = vand.u32 %v2998, 4294901760
    %v3102 = vsub.f32 %v2998, %v3101
    %v3103 = vand.u32 %v3102, 4294901760
    %v3104 = vsub.f32 %v3102, %v3103
    %v3105 = vand.u32 %v3104, 4294901760
    %3106 = vmatpush1.msra.mxu0 %v3105
    %3107 = vmatprep.subr.mxu0 0.0
    %v3108 = vand.u32 %v2997, 4294901760
    %v3109 = vsub.f32 %v2997, %v3108
    %v3110 = vand.u32 %v3109, 4294901760
    %v3111 = vsub.f32 %v3109, %v3110
    %v3112 = vand.u32 %v3111, 4294901760
    %3113 = vmatpush1.msra.mxu0 %v3112
    %3114 = vmatprep.subr.mxu0 0.0
    %v3115 = vand.u32 %v2996, 4294901760
    %v3116 = vsub.f32 %v2996, %v3115
    %v3117 = vand.u32 %v3116, 4294901760
    %v3118 = vsub.f32 %v3116, %v3117
    %v3119 = vand.u32 %v3118, 4294901760
    %3120 = vmatpush1.msra.mxu0 %v3119
    %3121 = vmatprep.subr.mxu0 0.0
    %v3122 = vand.u32 %v2995, 4294901760
    %v3123 = vsub.f32 %v2995, %v3122
    %v3124 = vand.u32 %v3123, 4294901760
    %v3125 = vsub.f32 %v3123, %v3124
    %v3126 = vand.u32 %v3125, 4294901760
    %3127 = vmatpush1.msra.mxu0 %v3126
    %3128 = vmatprep.subr.mxu0 0.0
    %v3129 = vand.u32 %v2994, 4294901760
    %v3130 = vsub.f32 %v2994, %v3129
    %v3131 = vand.u32 %v3130, 4294901760
    %v3132 = vsub.f32 %v3130, %v3131
    %v3133 = vand.u32 %v3132, 4294901760
    %3134 = vmatpush1.msra.mxu0 %v3133
    %3135 = vmatprep.subr.mxu0 0.0
    %v3136 = vand.u32 %v2993, 4294901760
    %v3137 = vsub.f32 %v2993, %v3136
    %v3138 = vand.u32 %v3137, 4294901760
    %v3139 = vsub.f32 %v3137, %v3138
    %v3140 = vand.u32 %v3139, 4294901760
    %3141 = vmatpush1.msra.mxu0 %v3140
    %3142 = vmatprep.subr.mxu0 0.0
    %v3143 = vand.u32 %v2992, 4294901760
    %v3144 = vsub.f32 %v2992, %v3143
    %v3145 = vand.u32 %v3144, 4294901760
    %v3146 = vsub.f32 %v3144, %v3145
    %v3147 = vand.u32 %v3146, 4294901760
    %3148 = vmatpush1.msra.mxu0 %v3147
    %3149 = vmatprep.subr.mxu0 0.0
    %v3150 = vand.u32 %v2991, 4294901760
    %v3151 = vsub.f32 %v2991, %v3150
    %v3152 = vand.u32 %v3151, 4294901760
    %v3153 = vsub.f32 %v3151, %v3152
    %v3154 = vand.u32 %v3153, 4294901760
    %3155 = vmatpush1.msra.mxu0 %v3154
    %3156 = vmatprep.subr.mxu0 0.0
    %v3157 = vand.u32 %v2990, 4294901760
    %v3158 = vsub.f32 %v2990, %v3157
    %v3159 = vand.u32 %v3158, 4294901760
    %v3160 = vsub.f32 %v3158, %v3159
    %v3161 = vand.u32 %v3160, 4294901760
    %3162 = vmatpush1.msra.mxu0 %v3161
    %3163 = vmatprep.subr.mxu0 0.0
    %v3164 = vand.u32 %v2989, 4294901760
    %v3165 = vsub.f32 %v2989, %v3164
    %v3166 = vand.u32 %v3165, 4294901760
    %v3167 = vsub.f32 %v3165, %v3166
    %v3168 = vand.u32 %v3167, 4294901760
    %3169 = vmatpush1.msra.mxu0 %v3168
    %3170 = vmatprep.subr.mxu0 0.0
    %v3171 = vand.u32 %v2988, 4294901760
    %v3172 = vsub.f32 %v2988, %v3171
    %v3173 = vand.u32 %v3172, 4294901760
    %v3174 = vsub.f32 %v3172, %v3173
    %v3175 = vand.u32 %v3174, 4294901760
    %3176 = vmatpush1.msra.mxu0 %v3175
    %3177 = vmatprep.subr.mxu0 0.0
    %v3178 = vand.u32 %v2987, 4294901760
    %v3179 = vsub.f32 %v2987, %v3178
    %v3180 = vand.u32 %v3179, 4294901760
    %v3181 = vsub.f32 %v3179, %v3180
    %v3182 = vand.u32 %v3181, 4294901760
    %3183 = vmatpush1.msra.mxu0 %v3182
    %3184 = vmatprep.subr.mxu0 0.0
    %v3185 = vand.u32 %v2986, 4294901760
    %v3186 = vsub.f32 %v2986, %v3185
    %v3187 = vand.u32 %v3186, 4294901760
    %v3188 = vsub.f32 %v3186, %v3187
    %v3189 = vand.u32 %v3188, 4294901760
    %3190 = vmatpush1.msra.mxu0 %v3189
    %3191 = vmatprep.subr.mxu0 0.0
    %v3192 = vand.u32 %v2985, 4294901760
    %v3193 = vsub.f32 %v2985, %v3192
    %v3194 = vand.u32 %v3193, 4294901760
    %v3195 = vsub.f32 %v3193, %v3194
    %v3196 = vand.u32 %v3195, 4294901760
    %3197 = vmatpush1.msra.mxu0 %v3196
    %3198 = vmatprep.subr.mxu0 0.0
    %v3199 = vand.u32 %v2984, 4294901760
    %v3200 = vsub.f32 %v2984, %v3199
    %v3201 = vand.u32 %v3200, 4294901760
    %v3202 = vsub.f32 %v3200, %v3201
    %v3203 = vand.u32 %v3202, 4294901760
    %3204 = vmatpush1.msra.mxu0 %v3203
    %3205 = vmatprep.subr.mxu0 0.0
    %v3206 = vand.u32 %v2983, 4294901760
    %v3207 = vsub.f32 %v2983, %v3206
    %v3208 = vand.u32 %v3207, 4294901760
    %v3209 = vsub.f32 %v3207, %v3208
    %v3210 = vand.u32 %v3209, 4294901760
    %3211 = vmatpush1.msra.mxu0 %v3210
    %3212 = vmatprep.subr.mxu0 0.0
    %3213 = vmatpush2.msra.mxu0 0.0
    %3214 = vmatprep.subr.mxu0 0.0
    %3215 = vmatpush2.msra.mxu0 0.0
    %3216 = vmatprep.subr.mxu0 0.0
    %3217 = vmatpush2.msra.mxu0 0.0
    %3218 = vmatprep.subr.mxu0 0.0
    %3219 = vmatpush2.msra.mxu0 0.0
    %3220 = vmatprep.subr.mxu0 0.0
    %3221 = vmatpush2.msra.mxu0 0.0
    %3222 = vmatprep.subr.mxu0 0.0
    %3223 = vmatpush2.msra.mxu0 0.0
    %3224 = vmatprep.subr.mxu0 0.0
    %3225 = vmatpush2.msra.mxu0 0.0
    %3226 = vmatprep.subr.mxu0 0.0
    %3227 = vmatpush2.msra.mxu0 0.0
    %3228 = vmatprep.subr.mxu0 0.0
    %3229 = vmatpush2.msra.mxu0 0.0
    %3230 = vmatprep.subr.mxu0 0.0
    %3231 = vmatpush2.msra.mxu0 0.0
    %3232 = vmatprep.subr.mxu0 0.0
    %3233 = vmatpush2.msra.mxu0 0.0
    %3234 = vmatprep.subr.mxu0 0.0
    %3235 = vmatpush2.msra.mxu0 0.0
    %3236 = vmatprep.subr.mxu0 0.0
    %3237 = vmatpush2.msra.mxu0 0.0
    %3238 = vmatprep.subr.mxu0 0.0
    %3239 = vmatpush2.msra.mxu0 0.0
    %3240 = vmatprep.subr.mxu0 0.0
    %3241 = vmatpush2.msra.mxu0 0.0
    %3242 = vmatprep.subr.mxu0 0.0
    %3243 = vmatpush2.msra.mxu0 0.0
    %3244 = vmatprep.mubr.f32.mxu0 0.0
    %v3245 = vand.u32 %v2965, 4294901760
    %3246 = vmatmul.mubr.f32.gmra.mxu0 %v3245
    %v3247 = vpop.f32.mrf.mxu0
    %v3248 = vadd.f32 %v3087, %v3247
    %v3249 = vpop.f32.mrf.mxu0
    %3250 = vmatprep.mubr.f32.mxu0 0.0
    %v3251 = vand.u32 %v2966, 4294901760
    %3252 = vmatmul.mubr.f32.gmra.mxu0 %v3251
    %v3253 = vpop.f32.mrf.mxu0
    %v3254 = vadd.f32 %v3097, %v3253
    %v3255 = vpop.f32.mrf.mxu0
    %3256 = vdwg.mxu0
    %3257 = vmatprep.subr.mxu0 0.0
    %v3258 = vand.u32 %v2998, 4294901760
    %v3259 = vsub.f32 %v2998, %v3258
    %3260 = vmatpush1.msra.mxu0 %v3259
    %3261 = vmatprep.subr.mxu0 0.0
    %v3262 = vand.u32 %v2997, 4294901760
    %v3263 = vsub.f32 %v2997, %v3262
    %3264 = vmatpush1.msra.mxu0 %v3263
    %3265 = vmatprep.subr.mxu0 0.0
    %v3266 = vand.u32 %v2996, 4294901760
    %v3267 = vsub.f32 %v2996, %v3266
    %3268 = vmatpush1.msra.mxu0 %v3267
    %3269 = vmatprep.subr.mxu0 0.0
    %v3270 = vand.u32 %v2995, 4294901760
    %v3271 = vsub.f32 %v2995, %v3270
    %3272 = vmatpush1.msra.mxu0 %v3271
    %3273 = vmatprep.subr.mxu0 0.0
    %v3274 = vand.u32 %v2994, 4294901760
    %v3275 = vsub.f32 %v2994, %v3274
    %3276 = vmatpush1.msra.mxu0 %v3275
    %3277 = vmatprep.subr.mxu0 0.0
    %v3278 = vand.u32 %v2993, 4294901760
    %v3279 = vsub.f32 %v2993, %v3278
    %3280 = vmatpush1.msra.mxu0 %v3279
    %3281 = vmatprep.subr.mxu0 0.0
    %v3282 = vand.u32 %v2992, 4294901760
    %v3283 = vsub.f32 %v2992, %v3282
    %3284 = vmatpush1.msra.mxu0 %v3283
    %3285 = vmatprep.subr.mxu0 0.0
    %v3286 = vand.u32 %v2991, 4294901760
    %v3287 = vsub.f32 %v2991, %v3286
    %3288 = vmatpush1.msra.mxu0 %v3287
    %3289 = vmatprep.subr.mxu0 0.0
    %v3290 = vand.u32 %v2990, 4294901760
    %v3291 = vsub.f32 %v2990, %v3290
    %3292 = vmatpush1.msra.mxu0 %v3291
    %3293 = vmatprep.subr.mxu0 0.0
    %v3294 = vand.u32 %v2989, 4294901760
    %v3295 = vsub.f32 %v2989, %v3294
    %3296 = vmatpush1.msra.mxu0 %v3295
    %3297 = vmatprep.subr.mxu0 0.0
    %v3298 = vand.u32 %v2988, 4294901760
    %v3299 = vsub.f32 %v2988, %v3298
    %3300 = vmatpush1.msra.mxu0 %v3299
    %3301 = vmatprep.subr.mxu0 0.0
    %v3302 = vand.u32 %v2987, 4294901760
    %v3303 = vsub.f32 %v2987, %v3302
    %3304 = vmatpush1.msra.mxu0 %v3303
    %3305 = vmatprep.subr.mxu0 0.0
    %v3306 = vand.u32 %v2986, 4294901760
    %v3307 = vsub.f32 %v2986, %v3306
    %3308 = vmatpush1.msra.mxu0 %v3307
    %3309 = vmatprep.subr.mxu0 0.0
    %v3310 = vand.u32 %v2985, 4294901760
    %v3311 = vsub.f32 %v2985, %v3310
    %3312 = vmatpush1.msra.mxu0 %v3311
    %3313 = vmatprep.subr.mxu0 0.0
    %v3314 = vand.u32 %v2984, 4294901760
    %v3315 = vsub.f32 %v2984, %v3314
    %3316 = vmatpush1.msra.mxu0 %v3315
    %3317 = vmatprep.subr.mxu0 0.0
    %v3318 = vand.u32 %v2983, 4294901760
    %v3319 = vsub.f32 %v2983, %v3318
    %3320 = vmatpush1.msra.mxu0 %v3319
    %3321 = vmatprep.subr.mxu0 0.0
    %3322 = vmatpush2.msra.mxu0 0.0
    %3323 = vmatprep.subr.mxu0 0.0
    %3324 = vmatpush2.msra.mxu0 0.0
    %3325 = vmatprep.subr.mxu0 0.0
    %3326 = vmatpush2.msra.mxu0 0.0
    %3327 = vmatprep.subr.mxu0 0.0
    %3328 = vmatpush2.msra.mxu0 0.0
    %3329 = vmatprep.subr.mxu0 0.0
    %3330 = vmatpush2.msra.mxu0 0.0
    %3331 = vmatprep.subr.mxu0 0.0
    %3332 = vmatpush2.msra.mxu0 0.0
    %3333 = vmatprep.subr.mxu0 0.0
    %3334 = vmatpush2.msra.mxu0 0.0
    %3335 = vmatprep.subr.mxu0 0.0
    %3336 = vmatpush2.msra.mxu0 0.0
    %3337 = vmatprep.subr.mxu0 0.0
    %3338 = vmatpush2.msra.mxu0 0.0
    %3339 = vmatprep.subr.mxu0 0.0
    %3340 = vmatpush2.msra.mxu0 0.0
    %3341 = vmatprep.subr.mxu0 0.0
    %3342 = vmatpush2.msra.mxu0 0.0
    %3343 = vmatprep.subr.mxu0 0.0
    %3344 = vmatpush2.msra.mxu0 0.0
    %3345 = vmatprep.subr.mxu0 0.0
    %3346 = vmatpush2.msra.mxu0 0.0
    %3347 = vmatprep.subr.mxu0 0.0
    %3348 = vmatpush2.msra.mxu0 0.0
    %3349 = vmatprep.subr.mxu0 0.0
    %3350 = vmatpush2.msra.mxu0 0.0
    %3351 = vmatprep.subr.mxu0 0.0
    %3352 = vmatpush2.msra.mxu0 0.0
    %3353 = vmatprep.mubr.f32.mxu0 0.0
    %v3354 = vand.u32 %v2965, 4294901760
    %v3355 = vsub.f32 %v2965, %v3354
    %3356 = vmatmul.mubr.f32.gmra.mxu0 %v3355
    %v3357 = vpop.f32.mrf.mxu0
    %v3358 = vadd.f32 %v3248, %v3357
    %v3359 = vpop.f32.mrf.mxu0
    %3360 = vmatprep.mubr.f32.mxu0 0.0
    %v3361 = vand.u32 %v2966, 4294901760
    %v3362 = vsub.f32 %v2966, %v3361
    %3363 = vmatmul.mubr.f32.gmra.mxu0 %v3362
    %v3364 = vpop.f32.mrf.mxu0
    %v3365 = vadd.f32 %v3254, %v3364
    %v3366 = vpop.f32.mrf.mxu0
    %3367 = vdwg.mxu0
    %3368 = vmatprep.subr.mxu0 0.0
    %v3369 = vand.u32 %v2998, 4294901760
    %3370 = vmatpush1.msra.mxu0 %v3369
    %3371 = vmatprep.subr.mxu0 0.0
    %v3372 = vand.u32 %v2997, 4294901760
    %3373 = vmatpush1.msra.mxu0 %v3372
    %3374 = vmatprep.subr.mxu0 0.0
    %v3375 = vand.u32 %v2996, 4294901760
    %3376 = vmatpush1.msra.mxu0 %v3375
    %3377 = vmatprep.subr.mxu0 0.0
    %v3378 = vand.u32 %v2995, 4294901760
    %3379 = vmatpush1.msra.mxu0 %v3378
    %3380 = vmatprep.subr.mxu0 0.0
    %v3381 = vand.u32 %v2994, 4294901760
    %3382 = vmatpush1.msra.mxu0 %v3381
    %3383 = vmatprep.subr.mxu0 0.0
    %v3384 = vand.u32 %v2993, 4294901760
    %3385 = vmatpush1.msra.mxu0 %v3384
    %3386 = vmatprep.subr.mxu0 0.0
    %v3387 = vand.u32 %v2992, 4294901760
    %3388 = vmatpush1.msra.mxu0 %v3387
    %3389 = vmatprep.subr.mxu0 0.0
    %v3390 = vand.u32 %v2991, 4294901760
    %3391 = vmatpush1.msra.mxu0 %v3390
    %3392 = vmatprep.subr.mxu0 0.0
    %v3393 = vand.u32 %v2990, 4294901760
    %3394 = vmatpush1.msra.mxu0 %v3393
    %3395 = vmatprep.subr.mxu0 0.0
    %v3396 = vand.u32 %v2989, 4294901760
    %3397 = vmatpush1.msra.mxu0 %v3396
    %3398 = vmatprep.subr.mxu0 0.0
    %v3399 = vand.u32 %v2988, 4294901760
    %3400 = vmatpush1.msra.mxu0 %v3399
    %3401 = vmatprep.subr.mxu0 0.0
    %v3402 = vand.u32 %v2987, 4294901760
    %3403 = vmatpush1.msra.mxu0 %v3402
    %3404 = vmatprep.subr.mxu0 0.0
    %v3405 = vand.u32 %v2986, 4294901760
    %3406 = vmatpush1.msra.mxu0 %v3405
    %3407 = vmatprep.subr.mxu0 0.0
    %v3408 = vand.u32 %v2985, 4294901760
    %3409 = vmatpush1.msra.mxu0 %v3408
    %3410 = vmatprep.subr.mxu0 0.0
    %v3411 = vand.u32 %v2984, 4294901760
    %3412 = vmatpush1.msra.mxu0 %v3411
    %3413 = vmatprep.subr.mxu0 0.0
    %v3414 = vand.u32 %v2983, 4294901760
    %3415 = vmatpush1.msra.mxu0 %v3414
    %3416 = vmatprep.subr.mxu0 0.0
    %3417 = vmatpush2.msra.mxu0 0.0
    %3418 = vmatprep.subr.mxu0 0.0
    %3419 = vmatpush2.msra.mxu0 0.0
    %3420 = vmatprep.subr.mxu0 0.0
    %3421 = vmatpush2.msra.mxu0 0.0
    %3422 = vmatprep.subr.mxu0 0.0
    %3423 = vmatpush2.msra.mxu0 0.0
    %3424 = vmatprep.subr.mxu0 0.0
    %3425 = vmatpush2.msra.mxu0 0.0
    %3426 = vmatprep.subr.mxu0 0.0
    %3427 = vmatpush2.msra.mxu0 0.0
    %3428 = vmatprep.subr.mxu0 0.0
    %3429 = vmatpush2.msra.mxu0 0.0
    %3430 = vmatprep.subr.mxu0 0.0
    %3431 = vmatpush2.msra.mxu0 0.0
    %3432 = vmatprep.subr.mxu0 0.0
    %3433 = vmatpush2.msra.mxu0 0.0
    %3434 = vmatprep.subr.mxu0 0.0
    %3435 = vmatpush2.msra.mxu0 0.0
    %3436 = vmatprep.subr.mxu0 0.0
    %3437 = vmatpush2.msra.mxu0 0.0
    %3438 = vmatprep.subr.mxu0 0.0
    %3439 = vmatpush2.msra.mxu0 0.0
    %3440 = vmatprep.subr.mxu0 0.0
    %3441 = vmatpush2.msra.mxu0 0.0
    %3442 = vmatprep.subr.mxu0 0.0
    %3443 = vmatpush2.msra.mxu0 0.0
    %3444 = vmatprep.subr.mxu0 0.0
    %3445 = vmatpush2.msra.mxu0 0.0
    %3446 = vmatprep.subr.mxu0 0.0
    %3447 = vmatpush2.msra.mxu0 0.0
    %3448 = vmatprep.mubr.f32.mxu0 0.0
    %v3449 = vand.u32 %v2965, 4294901760
    %v3450 = vsub.f32 %v2965, %v3449
    %v3451 = vand.u32 %v3450, 4294901760
    %3452 = vmatmul.mubr.f32.gmra.mxu0 %v3451
    %v3453 = vpop.f32.mrf.mxu0
    %v3454 = vadd.f32 %v3358, %v3453
    %v3455 = vpop.f32.mrf.mxu0
    %3456 = vmatprep.mubr.f32.mxu0 0.0
    %v3457 = vand.u32 %v2966, 4294901760
    %v3458 = vsub.f32 %v2966, %v3457
    %v3459 = vand.u32 %v3458, 4294901760
    %3460 = vmatmul.mubr.f32.gmra.mxu0 %v3459
    %v3461 = vpop.f32.mrf.mxu0
    %v3462 = vadd.f32 %v3365, %v3461
    %v3463 = vpop.f32.mrf.mxu0
    %3464 = vdwg.mxu0
    %3465 = vmatprep.subr.mxu0 0.0
    %v3466 = vand.u32 %v2998, 4294901760
    %v3467 = vsub.f32 %v2998, %v3466
    %v3468 = vand.u32 %v3467, 4294901760
    %3469 = vmatpush1.msra.mxu0 %v3468
    %3470 = vmatprep.subr.mxu0 0.0
    %v3471 = vand.u32 %v2997, 4294901760
    %v3472 = vsub.f32 %v2997, %v3471
    %v3473 = vand.u32 %v3472, 4294901760
    %3474 = vmatpush1.msra.mxu0 %v3473
    %3475 = vmatprep.subr.mxu0 0.0
    %v3476 = vand.u32 %v2996, 4294901760
    %v3477 = vsub.f32 %v2996, %v3476
    %v3478 = vand.u32 %v3477, 4294901760
    %3479 = vmatpush1.msra.mxu0 %v3478
    %3480 = vmatprep.subr.mxu0 0.0
    %v3481 = vand.u32 %v2995, 4294901760
    %v3482 = vsub.f32 %v2995, %v3481
    %v3483 = vand.u32 %v3482, 4294901760
    %3484 = vmatpush1.msra.mxu0 %v3483
    %3485 = vmatprep.subr.mxu0 0.0
    %v3486 = vand.u32 %v2994, 4294901760
    %v3487 = vsub.f32 %v2994, %v3486
    %v3488 = vand.u32 %v3487, 4294901760
    %3489 = vmatpush1.msra.mxu0 %v3488
    %3490 = vmatprep.subr.mxu0 0.0
    %v3491 = vand.u32 %v2993, 4294901760
    %v3492 = vsub.f32 %v2993, %v3491
    %v3493 = vand.u32 %v3492, 4294901760
    %3494 = vmatpush1.msra.mxu0 %v3493
    %3495 = vmatprep.subr.mxu0 0.0
    %v3496 = vand.u32 %v2992, 4294901760
    %v3497 = vsub.f32 %v2992, %v3496
    %v3498 = vand.u32 %v3497, 4294901760
    %3499 = vmatpush1.msra.mxu0 %v3498
    %3500 = vmatprep.subr.mxu0 0.0
    %v3501 = vand.u32 %v2991, 4294901760
    %v3502 = vsub.f32 %v2991, %v3501
    %v3503 = vand.u32 %v3502, 4294901760
    %3504 = vmatpush1.msra.mxu0 %v3503
    %3505 = vmatprep.subr.mxu0 0.0
    %v3506 = vand.u32 %v2990, 4294901760
    %v3507 = vsub.f32 %v2990, %v3506
    %v3508 = vand.u32 %v3507, 4294901760
    %3509 = vmatpush1.msra.mxu0 %v3508
    %3510 = vmatprep.subr.mxu0 0.0
    %v3511 = vand.u32 %v2989, 4294901760
    %v3512 = vsub.f32 %v2989, %v3511
    %v3513 = vand.u32 %v3512, 4294901760
    %3514 = vmatpush1.msra.mxu0 %v3513
    %3515 = vmatprep.subr.mxu0 0.0
    %v3516 = vand.u32 %v2988, 4294901760
    %v3517 = vsub.f32 %v2988, %v3516
    %v3518 = vand.u32 %v3517, 4294901760
    %3519 = vmatpush1.msra.mxu0 %v3518
    %3520 = vmatprep.subr.mxu0 0.0
    %v3521 = vand.u32 %v2987, 4294901760
    %v3522 = vsub.f32 %v2987, %v3521
    %v3523 = vand.u32 %v3522, 4294901760
    %3524 = vmatpush1.msra.mxu0 %v3523
    %3525 = vmatprep.subr.mxu0 0.0
    %v3526 = vand.u32 %v2986, 4294901760
    %v3527 = vsub.f32 %v2986, %v3526
    %v3528 = vand.u32 %v3527, 4294901760
    %3529 = vmatpush1.msra.mxu0 %v3528
    %3530 = vmatprep.subr.mxu0 0.0
    %v3531 = vand.u32 %v2985, 4294901760
    %v3532 = vsub.f32 %v2985, %v3531
    %v3533 = vand.u32 %v3532, 4294901760
    %3534 = vmatpush1.msra.mxu0 %v3533
    %3535 = vmatprep.subr.mxu0 0.0
    %v3536 = vand.u32 %v2984, 4294901760
    %v3537 = vsub.f32 %v2984, %v3536
    %v3538 = vand.u32 %v3537, 4294901760
    %3539 = vmatpush1.msra.mxu0 %v3538
    %3540 = vmatprep.subr.mxu0 0.0
    %v3541 = vand.u32 %v2983, 4294901760
    %v3542 = vsub.f32 %v2983, %v3541
    %v3543 = vand.u32 %v3542, 4294901760
    %3544 = vmatpush1.msra.mxu0 %v3543
    %3545 = vmatprep.subr.mxu0 0.0
    %3546 = vmatpush2.msra.mxu0 0.0
    %3547 = vmatprep.subr.mxu0 0.0
    %3548 = vmatpush2.msra.mxu0 0.0
    %3549 = vmatprep.subr.mxu0 0.0
    %3550 = vmatpush2.msra.mxu0 0.0
    %3551 = vmatprep.subr.mxu0 0.0
    %3552 = vmatpush2.msra.mxu0 0.0
    %3553 = vmatprep.subr.mxu0 0.0
    %3554 = vmatpush2.msra.mxu0 0.0
    %3555 = vmatprep.subr.mxu0 0.0
    %3556 = vmatpush2.msra.mxu0 0.0
    %3557 = vmatprep.subr.mxu0 0.0
    %3558 = vmatpush2.msra.mxu0 0.0
    %3559 = vmatprep.subr.mxu0 0.0
    %3560 = vmatpush2.msra.mxu0 0.0
    %3561 = vmatprep.subr.mxu0 0.0
    %3562 = vmatpush2.msra.mxu0 0.0
    %3563 = vmatprep.subr.mxu0 0.0
    %3564 = vmatpush2.msra.mxu0 0.0
    %3565 = vmatprep.subr.mxu0 0.0
    %3566 = vmatpush2.msra.mxu0 0.0
    %3567 = vmatprep.subr.mxu0 0.0
    %3568 = vmatpush2.msra.mxu0 0.0
    %3569 = vmatprep.subr.mxu0 0.0
    %3570 = vmatpush2.msra.mxu0 0.0
    %3571 = vmatprep.subr.mxu0 0.0
    %3572 = vmatpush2.msra.mxu0 0.0
    %3573 = vmatprep.subr.mxu0 0.0
    %3574 = vmatpush2.msra.mxu0 0.0
    %3575 = vmatprep.subr.mxu0 0.0
    %3576 = vmatpush2.msra.mxu0 0.0
    %3577 = vmatprep.mubr.f32.mxu0 0.0
    %v3578 = vand.u32 %v2965, 4294901760
    %3579 = vmatmul.mubr.f32.gmra.mxu0 %v3578
    %v3580 = vpop.f32.mrf.mxu0
    %v3581 = vadd.f32 %v3454, %v3580
    %v3582 = vpop.f32.mrf.mxu0
    %3583 = vmatprep.mubr.f32.mxu0 0.0
    %v3584 = vand.u32 %v2966, 4294901760
    %3585 = vmatmul.mubr.f32.gmra.mxu0 %v3584
    %v3586 = vpop.f32.mrf.mxu0
    %v3587 = vadd.f32 %v3462, %v3586
    %v3588 = vpop.f32.mrf.mxu0
    %3589 = vdwg.mxu0
    %3590 = vmatprep.subr.mxu0 0.0
    %v3591 = vand.u32 %v2998, 4294901760
    %3592 = vmatpush1.msra.mxu0 %v3591
    %3593 = vmatprep.subr.mxu0 0.0
    %v3594 = vand.u32 %v2997, 4294901760
    %3595 = vmatpush1.msra.mxu0 %v3594
    %3596 = vmatprep.subr.mxu0 0.0
    %v3597 = vand.u32 %v2996, 4294901760
    %3598 = vmatpush1.msra.mxu0 %v3597
    %3599 = vmatprep.subr.mxu0 0.0
    %v3600 = vand.u32 %v2995, 4294901760
    %3601 = vmatpush1.msra.mxu0 %v3600
    %3602 = vmatprep.subr.mxu0 0.0
    %v3603 = vand.u32 %v2994, 4294901760
    %3604 = vmatpush1.msra.mxu0 %v3603
    %3605 = vmatprep.subr.mxu0 0.0
    %v3606 = vand.u32 %v2993, 4294901760
    %3607 = vmatpush1.msra.mxu0 %v3606
    %3608 = vmatprep.subr.mxu0 0.0
    %v3609 = vand.u32 %v2992, 4294901760
    %3610 = vmatpush1.msra.mxu0 %v3609
    %3611 = vmatprep.subr.mxu0 0.0
    %v3612 = vand.u32 %v2991, 4294901760
    %3613 = vmatpush1.msra.mxu0 %v3612
    %3614 = vmatprep.subr.mxu0 0.0
    %v3615 = vand.u32 %v2990, 4294901760
    %3616 = vmatpush1.msra.mxu0 %v3615
    %3617 = vmatprep.subr.mxu0 0.0
    %v3618 = vand.u32 %v2989, 4294901760
    %3619 = vmatpush1.msra.mxu0 %v3618
    %3620 = vmatprep.subr.mxu0 0.0
    %v3621 = vand.u32 %v2988, 4294901760
    %3622 = vmatpush1.msra.mxu0 %v3621
    %3623 = vmatprep.subr.mxu0 0.0
    %v3624 = vand.u32 %v2987, 4294901760
    %3625 = vmatpush1.msra.mxu0 %v3624
    %3626 = vmatprep.subr.mxu0 0.0
    %v3627 = vand.u32 %v2986, 4294901760
    %3628 = vmatpush1.msra.mxu0 %v3627
    %3629 = vmatprep.subr.mxu0 0.0
    %v3630 = vand.u32 %v2985, 4294901760
    %3631 = vmatpush1.msra.mxu0 %v3630
    %3632 = vmatprep.subr.mxu0 0.0
    %v3633 = vand.u32 %v2984, 4294901760
    %3634 = vmatpush1.msra.mxu0 %v3633
    %3635 = vmatprep.subr.mxu0 0.0
    %v3636 = vand.u32 %v2983, 4294901760
    %3637 = vmatpush1.msra.mxu0 %v3636
    %3638 = vmatprep.subr.mxu0 0.0
    %3639 = vmatpush2.msra.mxu0 0.0
    %3640 = vmatprep.subr.mxu0 0.0
    %3641 = vmatpush2.msra.mxu0 0.0
    %3642 = vmatprep.subr.mxu0 0.0
    %3643 = vmatpush2.msra.mxu0 0.0
    %3644 = vmatprep.subr.mxu0 0.0
    %3645 = vmatpush2.msra.mxu0 0.0
    %3646 = vmatprep.subr.mxu0 0.0
    %3647 = vmatpush2.msra.mxu0 0.0
    %3648 = vmatprep.subr.mxu0 0.0
    %3649 = vmatpush2.msra.mxu0 0.0
    %3650 = vmatprep.subr.mxu0 0.0
    %3651 = vmatpush2.msra.mxu0 0.0
    %3652 = vmatprep.subr.mxu0 0.0
    %3653 = vmatpush2.msra.mxu0 0.0
    %3654 = vmatprep.subr.mxu0 0.0
    %3655 = vmatpush2.msra.mxu0 0.0
    %3656 = vmatprep.subr.mxu0 0.0
    %3657 = vmatpush2.msra.mxu0 0.0
    %3658 = vmatprep.subr.mxu0 0.0
    %3659 = vmatpush2.msra.mxu0 0.0
    %3660 = vmatprep.subr.mxu0 0.0
    %3661 = vmatpush2.msra.mxu0 0.0
    %3662 = vmatprep.subr.mxu0 0.0
    %3663 = vmatpush2.msra.mxu0 0.0
    %3664 = vmatprep.subr.mxu0 0.0
    %3665 = vmatpush2.msra.mxu0 0.0
    %3666 = vmatprep.subr.mxu0 0.0
    %3667 = vmatpush2.msra.mxu0 0.0
    %3668 = vmatprep.subr.mxu0 0.0
    %3669 = vmatpush2.msra.mxu0 0.0
    %3670 = vmatprep.mubr.f32.mxu0 0.0
    %v3671 = vand.u32 %v2965, 4294901760
    %3672 = vmatmul.mubr.f32.gmra.mxu0 %v3671
    %v3673 = vpop.f32.mrf.mxu0
    %v3674 = vadd.f32 %v3581, %v3673
    %v3675 = vpop.f32.mrf.mxu0
    %3676 = vmatprep.mubr.f32.mxu0 0.0
    %v3677 = vand.u32 %v2966, 4294901760
    %3678 = vmatmul.mubr.f32.gmra.mxu0 %v3677
    %v3679 = vpop.f32.mrf.mxu0
    %v3680 = vadd.f32 %v3587, %v3679
    %v3681 = vpop.f32.mrf.mxu0
    %3682 = vdwg.mxu0
    %3683 = vmatprep.subr.mxu0 0.0
    %v3684 = vand.u32 %v2982, 4294901760
    %3685 = vmatpush1.msra.mxu0 %v3684
    %3686 = vmatprep.subr.mxu0 0.0
    %v3687 = vand.u32 %v2981, 4294901760
    %3688 = vmatpush1.msra.mxu0 %v3687
    %3689 = vmatprep.subr.mxu0 0.0
    %v3690 = vand.u32 %v2980, 4294901760
    %3691 = vmatpush1.msra.mxu0 %v3690
    %3692 = vmatprep.subr.mxu0 0.0
    %v3693 = vand.u32 %v2979, 4294901760
    %3694 = vmatpush1.msra.mxu0 %v3693
    %3695 = vmatprep.subr.mxu0 0.0
    %v3696 = vand.u32 %v2978, 4294901760
    %3697 = vmatpush1.msra.mxu0 %v3696
    %3698 = vmatprep.subr.mxu0 0.0
    %v3699 = vand.u32 %v2977, 4294901760
    %3700 = vmatpush1.msra.mxu0 %v3699
    %3701 = vmatprep.subr.mxu0 0.0
    %v3702 = vand.u32 %v2976, 4294901760
    %3703 = vmatpush1.msra.mxu0 %v3702
    %3704 = vmatprep.subr.mxu0 0.0
    %v3705 = vand.u32 %v2975, 4294901760
    %3706 = vmatpush1.msra.mxu0 %v3705
    %3707 = vmatprep.subr.mxu0 0.0
    %v3708 = vand.u32 %v2974, 4294901760
    %3709 = vmatpush1.msra.mxu0 %v3708
    %3710 = vmatprep.subr.mxu0 0.0
    %v3711 = vand.u32 %v2973, 4294901760
    %3712 = vmatpush1.msra.mxu0 %v3711
    %3713 = vmatprep.subr.mxu0 0.0
    %v3714 = vand.u32 %v2972, 4294901760
    %3715 = vmatpush1.msra.mxu0 %v3714
    %3716 = vmatprep.subr.mxu0 0.0
    %v3717 = vand.u32 %v2971, 4294901760
    %3718 = vmatpush1.msra.mxu0 %v3717
    %3719 = vmatprep.subr.mxu0 0.0
    %v3720 = vand.u32 %v2970, 4294901760
    %3721 = vmatpush1.msra.mxu0 %v3720
    %3722 = vmatprep.subr.mxu0 0.0
    %v3723 = vand.u32 %v2969, 4294901760
    %3724 = vmatpush1.msra.mxu0 %v3723
    %3725 = vmatprep.subr.mxu0 0.0
    %v3726 = vand.u32 %v2968, 4294901760
    %3727 = vmatpush1.msra.mxu0 %v3726
    %3728 = vmatprep.subr.mxu0 0.0
    %v3729 = vand.u32 %v2967, 4294901760
    %3730 = vmatpush1.msra.mxu0 %v3729
    %3731 = vmatprep.subr.mxu0 0.0
    %3732 = vmatpush2.msra.mxu0 0.0
    %3733 = vmatprep.subr.mxu0 0.0
    %3734 = vmatpush2.msra.mxu0 0.0
    %3735 = vmatprep.subr.mxu0 0.0
    %3736 = vmatpush2.msra.mxu0 0.0
    %3737 = vmatprep.subr.mxu0 0.0
    %3738 = vmatpush2.msra.mxu0 0.0
    %3739 = vmatprep.subr.mxu0 0.0
    %3740 = vmatpush2.msra.mxu0 0.0
    %3741 = vmatprep.subr.mxu0 0.0
    %3742 = vmatpush2.msra.mxu0 0.0
    %3743 = vmatprep.subr.mxu0 0.0
    %3744 = vmatpush2.msra.mxu0 0.0
    %3745 = vmatprep.subr.mxu0 0.0
    %3746 = vmatpush2.msra.mxu0 0.0
    %3747 = vmatprep.subr.mxu0 0.0
    %3748 = vmatpush2.msra.mxu0 0.0
    %3749 = vmatprep.subr.mxu0 0.0
    %3750 = vmatpush2.msra.mxu0 0.0
    %3751 = vmatprep.subr.mxu0 0.0
    %3752 = vmatpush2.msra.mxu0 0.0
    %3753 = vmatprep.subr.mxu0 0.0
    %3754 = vmatpush2.msra.mxu0 0.0
    %3755 = vmatprep.subr.mxu0 0.0
    %3756 = vmatpush2.msra.mxu0 0.0
    %3757 = vmatprep.subr.mxu0 0.0
    %3758 = vmatpush2.msra.mxu0 0.0
    %3759 = vmatprep.subr.mxu0 0.0
    %3760 = vmatpush2.msra.mxu0 0.0
    %3761 = vmatprep.subr.mxu0 0.0
    %3762 = vmatpush2.msra.mxu0 0.0
    %3763 = vmatprep.mubr.f32.mxu0 0.0
    %v3764 = vand.u32 %v2965, 4294901760
    %v3765 = vsub.f32 %v2965, %v3764
    %v3766 = vand.u32 %v3765, 4294901760
    %v3767 = vsub.f32 %v3765, %v3766
    %v3768 = vand.u32 %v3767, 4294901760
    %3769 = vmatmul.mubr.f32.gmra.mxu0 %v3768
    %v3770 = vpop.f32.mrf.mxu0
    %v3771 = vadd.f32 1e-12, %v3770
    %v3772 = vpop.f32.mrf.mxu0
    %3773 = vmatprep.mubr.f32.mxu0 0.0
    %v3774 = vand.u32 %v2966, 4294901760
    %v3775 = vsub.f32 %v2966, %v3774
    %v3776 = vand.u32 %v3775, 4294901760
    %v3777 = vsub.f32 %v3775, %v3776
    %v3778 = vand.u32 %v3777, 4294901760
    %3779 = vmatmul.mubr.f32.gmra.mxu0 %v3778
    %v3780 = vpop.f32.mrf.mxu0
    %v3781 = vadd.f32 1e-12, %v3780
    %v3782 = vpop.f32.mrf.mxu0
    %3783 = vdwg.mxu0
    %3784 = vmatprep.subr.mxu0 0.0
    %v3785 = vand.u32 %v2982, 4294901760
    %v3786 = vsub.f32 %v2982, %v3785
    %v3787 = vand.u32 %v3786, 4294901760
    %v3788 = vsub.f32 %v3786, %v3787
    %v3789 = vand.u32 %v3788, 4294901760
    %3790 = vmatpush1.msra.mxu0 %v3789
    %3791 = vmatprep.subr.mxu0 0.0
    %v3792 = vand.u32 %v2981, 4294901760
    %v3793 = vsub.f32 %v2981, %v3792
    %v3794 = vand.u32 %v3793, 4294901760
    %v3795 = vsub.f32 %v3793, %v3794
    %v3796 = vand.u32 %v3795, 4294901760
    %3797 = vmatpush1.msra.mxu0 %v3796
    %3798 = vmatprep.subr.mxu0 0.0
    %v3799 = vand.u32 %v2980, 4294901760
    %v3800 = vsub.f32 %v2980, %v3799
    %v3801 = vand.u32 %v3800, 4294901760
    %v3802 = vsub.f32 %v3800, %v3801
    %v3803 = vand.u32 %v3802, 4294901760
    %3804 = vmatpush1.msra.mxu0 %v3803
    %3805 = vmatprep.subr.mxu0 0.0
    %v3806 = vand.u32 %v2979, 4294901760
    %v3807 = vsub.f32 %v2979, %v3806
    %v3808 = vand.u32 %v3807, 4294901760
    %v3809 = vsub.f32 %v3807, %v3808
    %v3810 = vand.u32 %v3809, 4294901760
    %3811 = vmatpush1.msra.mxu0 %v3810
    %3812 = vmatprep.subr.mxu0 0.0
    %v3813 = vand.u32 %v2978, 4294901760
    %v3814 = vsub.f32 %v2978, %v3813
    %v3815 = vand.u32 %v3814, 4294901760
    %v3816 = vsub.f32 %v3814, %v3815
    %v3817 = vand.u32 %v3816, 4294901760
    %3818 = vmatpush1.msra.mxu0 %v3817
    %3819 = vmatprep.subr.mxu0 0.0
    %v3820 = vand.u32 %v2977, 4294901760
    %v3821 = vsub.f32 %v2977, %v3820
    %v3822 = vand.u32 %v3821, 4294901760
    %v3823 = vsub.f32 %v3821, %v3822
    %v3824 = vand.u32 %v3823, 4294901760
    %3825 = vmatpush1.msra.mxu0 %v3824
    %3826 = vmatprep.subr.mxu0 0.0
    %v3827 = vand.u32 %v2976, 4294901760
    %v3828 = vsub.f32 %v2976, %v3827
    %v3829 = vand.u32 %v3828, 4294901760
    %v3830 = vsub.f32 %v3828, %v3829
    %v3831 = vand.u32 %v3830, 4294901760
    %3832 = vmatpush1.msra.mxu0 %v3831
    %3833 = vmatprep.subr.mxu0 0.0
    %v3834 = vand.u32 %v2975, 4294901760
    %v3835 = vsub.f32 %v2975, %v3834
    %v3836 = vand.u32 %v3835, 4294901760
    %v3837 = vsub.f32 %v3835, %v3836
    %v3838 = vand.u32 %v3837, 4294901760
    %3839 = vmatpush1.msra.mxu0 %v3838
    %3840 = vmatprep.subr.mxu0 0.0
    %v3841 = vand.u32 %v2974, 4294901760
    %v3842 = vsub.f32 %v2974, %v3841
    %v3843 = vand.u32 %v3842, 4294901760
    %v3844 = vsub.f32 %v3842, %v3843
    %v3845 = vand.u32 %v3844, 4294901760
    %3846 = vmatpush1.msra.mxu0 %v3845
    %3847 = vmatprep.subr.mxu0 0.0
    %v3848 = vand.u32 %v2973, 4294901760
    %v3849 = vsub.f32 %v2973, %v3848
    %v3850 = vand.u32 %v3849, 4294901760
    %v3851 = vsub.f32 %v3849, %v3850
    %v3852 = vand.u32 %v3851, 4294901760
    %3853 = vmatpush1.msra.mxu0 %v3852
    %3854 = vmatprep.subr.mxu0 0.0
    %v3855 = vand.u32 %v2972, 4294901760
    %v3856 = vsub.f32 %v2972, %v3855
    %v3857 = vand.u32 %v3856, 4294901760
    %v3858 = vsub.f32 %v3856, %v3857
    %v3859 = vand.u32 %v3858, 4294901760
    %3860 = vmatpush1.msra.mxu0 %v3859
    %3861 = vmatprep.subr.mxu0 0.0
    %v3862 = vand.u32 %v2971, 4294901760
    %v3863 = vsub.f32 %v2971, %v3862
    %v3864 = vand.u32 %v3863, 4294901760
    %v3865 = vsub.f32 %v3863, %v3864
    %v3866 = vand.u32 %v3865, 4294901760
    %3867 = vmatpush1.msra.mxu0 %v3866
    %3868 = vmatprep.subr.mxu0 0.0
    %v3869 = vand.u32 %v2970, 4294901760
    %v3870 = vsub.f32 %v2970, %v3869
    %v3871 = vand.u32 %v3870, 4294901760
    %v3872 = vsub.f32 %v3870, %v3871
    %v3873 = vand.u32 %v3872, 4294901760
    %3874 = vmatpush1.msra.mxu0 %v3873
    %3875 = vmatprep.subr.mxu0 0.0
    %v3876 = vand.u32 %v2969, 4294901760
    %v3877 = vsub.f32 %v2969, %v3876
    %v3878 = vand.u32 %v3877, 4294901760
    %v3879 = vsub.f32 %v3877, %v3878
    %v3880 = vand.u32 %v3879, 4294901760
    %3881 = vmatpush1.msra.mxu0 %v3880
    %3882 = vmatprep.subr.mxu0 0.0
    %v3883 = vand.u32 %v2968, 4294901760
    %v3884 = vsub.f32 %v2968, %v3883
    %v3885 = vand.u32 %v3884, 4294901760
    %v3886 = vsub.f32 %v3884, %v3885
    %v3887 = vand.u32 %v3886, 4294901760
    %3888 = vmatpush1.msra.mxu0 %v3887
    %3889 = vmatprep.subr.mxu0 0.0
    %v3890 = vand.u32 %v2967, 4294901760
    %v3891 = vsub.f32 %v2967, %v3890
    %v3892 = vand.u32 %v3891, 4294901760
    %v3893 = vsub.f32 %v3891, %v3892
    %v3894 = vand.u32 %v3893, 4294901760
    %3895 = vmatpush1.msra.mxu0 %v3894
    %3896 = vmatprep.subr.mxu0 0.0
    %3897 = vmatpush2.msra.mxu0 0.0
    %3898 = vmatprep.subr.mxu0 0.0
    %3899 = vmatpush2.msra.mxu0 0.0
    %3900 = vmatprep.subr.mxu0 0.0
    %3901 = vmatpush2.msra.mxu0 0.0
    %3902 = vmatprep.subr.mxu0 0.0
    %3903 = vmatpush2.msra.mxu0 0.0
    %3904 = vmatprep.subr.mxu0 0.0
    %3905 = vmatpush2.msra.mxu0 0.0
    %3906 = vmatprep.subr.mxu0 0.0
    %3907 = vmatpush2.msra.mxu0 0.0
    %3908 = vmatprep.subr.mxu0 0.0
    %3909 = vmatpush2.msra.mxu0 0.0
    %3910 = vmatprep.subr.mxu0 0.0
    %3911 = vmatpush2.msra.mxu0 0.0
    %3912 = vmatprep.subr.mxu0 0.0
    %3913 = vmatpush2.msra.mxu0 0.0
    %3914 = vmatprep.subr.mxu0 0.0
    %3915 = vmatpush2.msra.mxu0 0.0
    %3916 = vmatprep.subr.mxu0 0.0
    %3917 = vmatpush2.msra.mxu0 0.0
    %3918 = vmatprep.subr.mxu0 0.0
    %3919 = vmatpush2.msra.mxu0 0.0
    %3920 = vmatprep.subr.mxu0 0.0
    %3921 = vmatpush2.msra.mxu0 0.0
    %3922 = vmatprep.subr.mxu0 0.0
    %3923 = vmatpush2.msra.mxu0 0.0
    %3924 = vmatprep.subr.mxu0 0.0
    %3925 = vmatpush2.msra.mxu0 0.0
    %3926 = vmatprep.subr.mxu0 0.0
    %3927 = vmatpush2.msra.mxu0 0.0
    %3928 = vmatprep.mubr.f32.mxu0 0.0
    %v3929 = vand.u32 %v2965, 4294901760
    %3930 = vmatmul.mubr.f32.gmra.mxu0 %v3929
    %v3931 = vpop.f32.mrf.mxu0
    %v3932 = vadd.f32 %v3771, %v3931
    %v3933 = vpop.f32.mrf.mxu0
    %3934 = vmatprep.mubr.f32.mxu0 0.0
    %v3935 = vand.u32 %v2966, 4294901760
    %3936 = vmatmul.mubr.f32.gmra.mxu0 %v3935
    %v3937 = vpop.f32.mrf.mxu0
    %v3938 = vadd.f32 %v3781, %v3937
    %v3939 = vpop.f32.mrf.mxu0
    %3940 = vdwg.mxu0
    %3941 = vmatprep.subr.mxu0 0.0
    %v3942 = vand.u32 %v2982, 4294901760
    %v3943 = vsub.f32 %v2982, %v3942
    %3944 = vmatpush1.msra.mxu0 %v3943
    %3945 = vmatprep.subr.mxu0 0.0
    %v3946 = vand.u32 %v2981, 4294901760
    %v3947 = vsub.f32 %v2981, %v3946
    %3948 = vmatpush1.msra.mxu0 %v3947
    %3949 = vmatprep.subr.mxu0 0.0
    %v3950 = vand.u32 %v2980, 4294901760
    %v3951 = vsub.f32 %v2980, %v3950
    %3952 = vmatpush1.msra.mxu0 %v3951
    %3953 = vmatprep.subr.mxu0 0.0
    %v3954 = vand.u32 %v2979, 4294901760
    %v3955 = vsub.f32 %v2979, %v3954
    %3956 = vmatpush1.msra.mxu0 %v3955
    %3957 = vmatprep.subr.mxu0 0.0
    %v3958 = vand.u32 %v2978, 4294901760
    %v3959 = vsub.f32 %v2978, %v3958
    %3960 = vmatpush1.msra.mxu0 %v3959
    %3961 = vmatprep.subr.mxu0 0.0
    %v3962 = vand.u32 %v2977, 4294901760
    %v3963 = vsub.f32 %v2977, %v3962
    %3964 = vmatpush1.msra.mxu0 %v3963
    %3965 = vmatprep.subr.mxu0 0.0
    %v3966 = vand.u32 %v2976, 4294901760
    %v3967 = vsub.f32 %v2976, %v3966
    %3968 = vmatpush1.msra.mxu0 %v3967
    %3969 = vmatprep.subr.mxu0 0.0
    %v3970 = vand.u32 %v2975, 4294901760
    %v3971 = vsub.f32 %v2975, %v3970
    %3972 = vmatpush1.msra.mxu0 %v3971
    %3973 = vmatprep.subr.mxu0 0.0
    %v3974 = vand.u32 %v2974, 4294901760
    %v3975 = vsub.f32 %v2974, %v3974
    %3976 = vmatpush1.msra.mxu0 %v3975
    %3977 = vmatprep.subr.mxu0 0.0
    %v3978 = vand.u32 %v2973, 4294901760
    %v3979 = vsub.f32 %v2973, %v3978
    %3980 = vmatpush1.msra.mxu0 %v3979
    %3981 = vmatprep.subr.mxu0 0.0
    %v3982 = vand.u32 %v2972, 4294901760
    %v3983 = vsub.f32 %v2972, %v3982
    %3984 = vmatpush1.msra.mxu0 %v3983
    %3985 = vmatprep.subr.mxu0 0.0
    %v3986 = vand.u32 %v2971, 4294901760
    %v3987 = vsub.f32 %v2971, %v3986
    %3988 = vmatpush1.msra.mxu0 %v3987
    %3989 = vmatprep.subr.mxu0 0.0
    %v3990 = vand.u32 %v2970, 4294901760
    %v3991 = vsub.f32 %v2970, %v3990
    %3992 = vmatpush1.msra.mxu0 %v3991
    %3993 = vmatprep.subr.mxu0 0.0
    %v3994 = vand.u32 %v2969, 4294901760
    %v3995 = vsub.f32 %v2969, %v3994
    %3996 = vmatpush1.msra.mxu0 %v3995
    %3997 = vmatprep.subr.mxu0 0.0
    %v3998 = vand.u32 %v2968, 4294901760
    %v3999 = vsub.f32 %v2968, %v3998
    %4000 = vmatpush1.msra.mxu0 %v3999
    %4001 = vmatprep.subr.mxu0 0.0
    %v4002 = vand.u32 %v2967, 4294901760
    %v4003 = vsub.f32 %v2967, %v4002
    %4004 = vmatpush1.msra.mxu0 %v4003
    %4005 = vmatprep.subr.mxu0 0.0
    %4006 = vmatpush2.msra.mxu0 0.0
    %4007 = vmatprep.subr.mxu0 0.0
    %4008 = vmatpush2.msra.mxu0 0.0
    %4009 = vmatprep.subr.mxu0 0.0
    %4010 = vmatpush2.msra.mxu0 0.0
    %4011 = vmatprep.subr.mxu0 0.0
    %4012 = vmatpush2.msra.mxu0 0.0
    %4013 = vmatprep.subr.mxu0 0.0
    %4014 = vmatpush2.msra.mxu0 0.0
    %4015 = vmatprep.subr.mxu0 0.0
    %4016 = vmatpush2.msra.mxu0 0.0
    %4017 = vmatprep.subr.mxu0 0.0
    %4018 = vmatpush2.msra.mxu0 0.0
    %4019 = vmatprep.subr.mxu0 0.0
    %4020 = vmatpush2.msra.mxu0 0.0
    %4021 = vmatprep.subr.mxu0 0.0
    %4022 = vmatpush2.msra.mxu0 0.0
    %4023 = vmatprep.subr.mxu0 0.0
    %4024 = vmatpush2.msra.mxu0 0.0
    %4025 = vmatprep.subr.mxu0 0.0
    %4026 = vmatpush2.msra.mxu0 0.0
    %4027 = vmatprep.subr.mxu0 0.0
    %4028 = vmatpush2.msra.mxu0 0.0
    %4029 = vmatprep.subr.mxu0 0.0
    %4030 = vmatpush2.msra.mxu0 0.0
    %4031 = vmatprep.subr.mxu0 0.0
    %4032 = vmatpush2.msra.mxu0 0.0
    %4033 = vmatprep.subr.mxu0 0.0
    %4034 = vmatpush2.msra.mxu0 0.0
    %4035 = vmatprep.subr.mxu0 0.0
    %4036 = vmatpush2.msra.mxu0 0.0
    %4037 = vmatprep.mubr.f32.mxu0 0.0
    %v4038 = vand.u32 %v2965, 4294901760
    %v4039 = vsub.f32 %v2965, %v4038
    %4040 = vmatmul.mubr.f32.gmra.mxu0 %v4039
    %v4041 = vpop.f32.mrf.mxu0
    %v4042 = vadd.f32 %v3932, %v4041
    %v4043 = vpop.f32.mrf.mxu0
    %4044 = vmatprep.mubr.f32.mxu0 0.0
    %v4045 = vand.u32 %v2966, 4294901760
    %v4046 = vsub.f32 %v2966, %v4045
    %4047 = vmatmul.mubr.f32.gmra.mxu0 %v4046
    %v4048 = vpop.f32.mrf.mxu0
    %v4049 = vadd.f32 %v3938, %v4048
    %v4050 = vpop.f32.mrf.mxu0
    %4051 = vdwg.mxu0
    %4052 = vmatprep.subr.mxu0 0.0
    %v4053 = vand.u32 %v2982, 4294901760
    %4054 = vmatpush1.msra.mxu0 %v4053
    %4055 = vmatprep.subr.mxu0 0.0
    %v4056 = vand.u32 %v2981, 4294901760
    %4057 = vmatpush1.msra.mxu0 %v4056
    %4058 = vmatprep.subr.mxu0 0.0
    %v4059 = vand.u32 %v2980, 4294901760
    %4060 = vmatpush1.msra.mxu0 %v4059
    %4061 = vmatprep.subr.mxu0 0.0
    %v4062 = vand.u32 %v2979, 4294901760
    %4063 = vmatpush1.msra.mxu0 %v4062
    %4064 = vmatprep.subr.mxu0 0.0
    %v4065 = vand.u32 %v2978, 4294901760
    %4066 = vmatpush1.msra.mxu0 %v4065
    %4067 = vmatprep.subr.mxu0 0.0
    %v4068 = vand.u32 %v2977, 4294901760
    %4069 = vmatpush1.msra.mxu0 %v4068
    %4070 = vmatprep.subr.mxu0 0.0
    %v4071 = vand.u32 %v2976, 4294901760
    %4072 = vmatpush1.msra.mxu0 %v4071
    %4073 = vmatprep.subr.mxu0 0.0
    %v4074 = vand.u32 %v2975, 4294901760
    %4075 = vmatpush1.msra.mxu0 %v4074
    %4076 = vmatprep.subr.mxu0 0.0
    %v4077 = vand.u32 %v2974, 4294901760
    %4078 = vmatpush1.msra.mxu0 %v4077
    %4079 = vmatprep.subr.mxu0 0.0
    %v4080 = vand.u32 %v2973, 4294901760
    %4081 = vmatpush1.msra.mxu0 %v4080
    %4082 = vmatprep.subr.mxu0 0.0
    %v4083 = vand.u32 %v2972, 4294901760
    %4084 = vmatpush1.msra.mxu0 %v4083
    %4085 = vmatprep.subr.mxu0 0.0
    %v4086 = vand.u32 %v2971, 4294901760
    %4087 = vmatpush1.msra.mxu0 %v4086
    %4088 = vmatprep.subr.mxu0 0.0
    %v4089 = vand.u32 %v2970, 4294901760
    %4090 = vmatpush1.msra.mxu0 %v4089
    %4091 = vmatprep.subr.mxu0 0.0
    %v4092 = vand.u32 %v2969, 4294901760
    %4093 = vmatpush1.msra.mxu0 %v4092
    %4094 = vmatprep.subr.mxu0 0.0
    %v4095 = vand.u32 %v2968, 4294901760
    %4096 = vmatpush1.msra.mxu0 %v4095
    %4097 = vmatprep.subr.mxu0 0.0
    %v4098 = vand.u32 %v2967, 4294901760
    %4099 = vmatpush1.msra.mxu0 %v4098
    %4100 = vmatprep.subr.mxu0 0.0
    %4101 = vmatpush2.msra.mxu0 0.0
    %4102 = vmatprep.subr.mxu0 0.0
    %4103 = vmatpush2.msra.mxu0 0.0
    %4104 = vmatprep.subr.mxu0 0.0
    %4105 = vmatpush2.msra.mxu0 0.0
    %4106 = vmatprep.subr.mxu0 0.0
    %4107 = vmatpush2.msra.mxu0 0.0
    %4108 = vmatprep.subr.mxu0 0.0
    %4109 = vmatpush2.msra.mxu0 0.0
    %4110 = vmatprep.subr.mxu0 0.0
    %4111 = vmatpush2.msra.mxu0 0.0
    %4112 = vmatprep.subr.mxu0 0.0
    %4113 = vmatpush2.msra.mxu0 0.0
    %4114 = vmatprep.subr.mxu0 0.0
    %4115 = vmatpush2.msra.mxu0 0.0
    %4116 = vmatprep.subr.mxu0 0.0
    %4117 = vmatpush2.msra.mxu0 0.0
    %4118 = vmatprep.subr.mxu0 0.0
    %4119 = vmatpush2.msra.mxu0 0.0
    %4120 = vmatprep.subr.mxu0 0.0
    %4121 = vmatpush2.msra.mxu0 0.0
    %4122 = vmatprep.subr.mxu0 0.0
    %4123 = vmatpush2.msra.mxu0 0.0
    %4124 = vmatprep.subr.mxu0 0.0
    %4125 = vmatpush2.msra.mxu0 0.0
    %4126 = vmatprep.subr.mxu0 0.0
    %4127 = vmatpush2.msra.mxu0 0.0
    %4128 = vmatprep.subr.mxu0 0.0
    %4129 = vmatpush2.msra.mxu0 0.0
    %4130 = vmatprep.subr.mxu0 0.0
    %4131 = vmatpush2.msra.mxu0 0.0
    %4132 = vmatprep.mubr.f32.mxu0 0.0
    %v4133 = vand.u32 %v2965, 4294901760
    %v4134 = vsub.f32 %v2965, %v4133
    %v4135 = vand.u32 %v4134, 4294901760
    %4136 = vmatmul.mubr.f32.gmra.mxu0 %v4135
    %v4137 = vpop.f32.mrf.mxu0
    %v4138 = vadd.f32 %v4042, %v4137
    %v4139 = vpop.f32.mrf.mxu0
    %4140 = vmatprep.mubr.f32.mxu0 0.0
    %v4141 = vand.u32 %v2966, 4294901760
    %v4142 = vsub.f32 %v2966, %v4141
    %v4143 = vand.u32 %v4142, 4294901760
    %4144 = vmatmul.mubr.f32.gmra.mxu0 %v4143
    %v4145 = vpop.f32.mrf.mxu0
    %v4146 = vadd.f32 %v4049, %v4145
    %v4147 = vpop.f32.mrf.mxu0
    %4148 = vdwg.mxu0
    %4149 = vmatprep.subr.mxu0 0.0
    %v4150 = vand.u32 %v2982, 4294901760
    %v4151 = vsub.f32 %v2982, %v4150
    %v4152 = vand.u32 %v4151, 4294901760
    %4153 = vmatpush1.msra.mxu0 %v4152
    %4154 = vmatprep.subr.mxu0 0.0
    %v4155 = vand.u32 %v2981, 4294901760
    %v4156 = vsub.f32 %v2981, %v4155
    %v4157 = vand.u32 %v4156, 4294901760
    %4158 = vmatpush1.msra.mxu0 %v4157
    %4159 = vmatprep.subr.mxu0 0.0
    %v4160 = vand.u32 %v2980, 4294901760
    %v4161 = vsub.f32 %v2980, %v4160
    %v4162 = vand.u32 %v4161, 4294901760
    %4163 = vmatpush1.msra.mxu0 %v4162
    %4164 = vmatprep.subr.mxu0 0.0
    %v4165 = vand.u32 %v2979, 4294901760
    %v4166 = vsub.f32 %v2979, %v4165
    %v4167 = vand.u32 %v4166, 4294901760
    %4168 = vmatpush1.msra.mxu0 %v4167
    %4169 = vmatprep.subr.mxu0 0.0
    %v4170 = vand.u32 %v2978, 4294901760
    %v4171 = vsub.f32 %v2978, %v4170
    %v4172 = vand.u32 %v4171, 4294901760
    %4173 = vmatpush1.msra.mxu0 %v4172
    %4174 = vmatprep.subr.mxu0 0.0
    %v4175 = vand.u32 %v2977, 4294901760
    %v4176 = vsub.f32 %v2977, %v4175
    %v4177 = vand.u32 %v4176, 4294901760
    %4178 = vmatpush1.msra.mxu0 %v4177
    %4179 = vmatprep.subr.mxu0 0.0
    %v4180 = vand.u32 %v2976, 4294901760
    %v4181 = vsub.f32 %v2976, %v4180
    %v4182 = vand.u32 %v4181, 4294901760
    %4183 = vmatpush1.msra.mxu0 %v4182
    %4184 = vmatprep.subr.mxu0 0.0
    %v4185 = vand.u32 %v2975, 4294901760
    %v4186 = vsub.f32 %v2975, %v4185
    %v4187 = vand.u32 %v4186, 4294901760
    %4188 = vmatpush1.msra.mxu0 %v4187
    %4189 = vmatprep.subr.mxu0 0.0
    %v4190 = vand.u32 %v2974, 4294901760
    %v4191 = vsub.f32 %v2974, %v4190
    %v4192 = vand.u32 %v4191, 4294901760
    %4193 = vmatpush1.msra.mxu0 %v4192
    %4194 = vmatprep.subr.mxu0 0.0
    %v4195 = vand.u32 %v2973, 4294901760
    %v4196 = vsub.f32 %v2973, %v4195
    %v4197 = vand.u32 %v4196, 4294901760
    %4198 = vmatpush1.msra.mxu0 %v4197
    %4199 = vmatprep.subr.mxu0 0.0
    %v4200 = vand.u32 %v2972, 4294901760
    %v4201 = vsub.f32 %v2972, %v4200
    %v4202 = vand.u32 %v4201, 4294901760
    %4203 = vmatpush1.msra.mxu0 %v4202
    %4204 = vmatprep.subr.mxu0 0.0
    %v4205 = vand.u32 %v2971, 4294901760
    %v4206 = vsub.f32 %v2971, %v4205
    %v4207 = vand.u32 %v4206, 4294901760
    %4208 = vmatpush1.msra.mxu0 %v4207
    %4209 = vmatprep.subr.mxu0 0.0
    %v4210 = vand.u32 %v2970, 4294901760
    %v4211 = vsub.f32 %v2970, %v4210
    %v4212 = vand.u32 %v4211, 4294901760
    %4213 = vmatpush1.msra.mxu0 %v4212
    %4214 = vmatprep.subr.mxu0 0.0
    %v4215 = vand.u32 %v2969, 4294901760
    %v4216 = vsub.f32 %v2969, %v4215
    %v4217 = vand.u32 %v4216, 4294901760
    %4218 = vmatpush1.msra.mxu0 %v4217
    %4219 = vmatprep.subr.mxu0 0.0
    %v4220 = vand.u32 %v2968, 4294901760
    %v4221 = vsub.f32 %v2968, %v4220
    %v4222 = vand.u32 %v4221, 4294901760
    %4223 = vmatpush1.msra.mxu0 %v4222
    %4224 = vmatprep.subr.mxu0 0.0
    %v4225 = vand.u32 %v2967, 4294901760
    %v4226 = vsub.f32 %v2967, %v4225
    %v4227 = vand.u32 %v4226, 4294901760
    %4228 = vmatpush1.msra.mxu0 %v4227
    %4229 = vmatprep.subr.mxu0 0.0
    %4230 = vmatpush2.msra.mxu0 0.0
    %4231 = vmatprep.subr.mxu0 0.0
    %4232 = vmatpush2.msra.mxu0 0.0
    %4233 = vmatprep.subr.mxu0 0.0
    %4234 = vmatpush2.msra.mxu0 0.0
    %4235 = vmatprep.subr.mxu0 0.0
    %4236 = vmatpush2.msra.mxu0 0.0
    %4237 = vmatprep.subr.mxu0 0.0
    %4238 = vmatpush2.msra.mxu0 0.0
    %4239 = vmatprep.subr.mxu0 0.0
    %4240 = vmatpush2.msra.mxu0 0.0
    %4241 = vmatprep.subr.mxu0 0.0
    %4242 = vmatpush2.msra.mxu0 0.0
    %4243 = vmatprep.subr.mxu0 0.0
    %4244 = vmatpush2.msra.mxu0 0.0
    %4245 = vmatprep.subr.mxu0 0.0
    %4246 = vmatpush2.msra.mxu0 0.0
    %4247 = vmatprep.subr.mxu0 0.0
    %4248 = vmatpush2.msra.mxu0 0.0
    %4249 = vmatprep.subr.mxu0 0.0
    %4250 = vmatpush2.msra.mxu0 0.0
    %4251 = vmatprep.subr.mxu0 0.0
    %4252 = vmatpush2.msra.mxu0 0.0
    %4253 = vmatprep.subr.mxu0 0.0
    %4254 = vmatpush2.msra.mxu0 0.0
    %4255 = vmatprep.subr.mxu0 0.0
    %4256 = vmatpush2.msra.mxu0 0.0
    %4257 = vmatprep.subr.mxu0 0.0
    %4258 = vmatpush2.msra.mxu0 0.0
    %4259 = vmatprep.subr.mxu0 0.0
    %4260 = vmatpush2.msra.mxu0 0.0
    %4261 = vmatprep.mubr.f32.mxu0 0.0
    %v4262 = vand.u32 %v2965, 4294901760
    %4263 = vmatmul.mubr.f32.gmra.mxu0 %v4262
    %v4264 = vpop.f32.mrf.mxu0
    %v4265 = vadd.f32 %v4138, %v4264
    %v4266 = vpop.f32.mrf.mxu0
    %4267 = vmatprep.mubr.f32.mxu0 0.0
    %v4268 = vand.u32 %v2966, 4294901760
    %4269 = vmatmul.mubr.f32.gmra.mxu0 %v4268
    %v4270 = vpop.f32.mrf.mxu0
    %v4271 = vadd.f32 %v4146, %v4270
    %v4272 = vpop.f32.mrf.mxu0
    %4273 = vdwg.mxu0
    %4274 = vmatprep.subr.mxu0 0.0
    %v4275 = vand.u32 %v2982, 4294901760
    %4276 = vmatpush1.msra.mxu0 %v4275
    %4277 = vmatprep.subr.mxu0 0.0
    %v4278 = vand.u32 %v2981, 4294901760
    %4279 = vmatpush1.msra.mxu0 %v4278
    %4280 = vmatprep.subr.mxu0 0.0
    %v4281 = vand.u32 %v2980, 4294901760
    %4282 = vmatpush1.msra.mxu0 %v4281
    %4283 = vmatprep.subr.mxu0 0.0
    %v4284 = vand.u32 %v2979, 4294901760
    %4285 = vmatpush1.msra.mxu0 %v4284
    %4286 = vmatprep.subr.mxu0 0.0
    %v4287 = vand.u32 %v2978, 4294901760
    %4288 = vmatpush1.msra.mxu0 %v4287
    %4289 = vmatprep.subr.mxu0 0.0
    %v4290 = vand.u32 %v2977, 4294901760
    %4291 = vmatpush1.msra.mxu0 %v4290
    %4292 = vmatprep.subr.mxu0 0.0
    %v4293 = vand.u32 %v2976, 4294901760
    %4294 = vmatpush1.msra.mxu0 %v4293
    %4295 = vmatprep.subr.mxu0 0.0
    %v4296 = vand.u32 %v2975, 4294901760
    %4297 = vmatpush1.msra.mxu0 %v4296
    %4298 = vmatprep.subr.mxu0 0.0
    %v4299 = vand.u32 %v2974, 4294901760
    %4300 = vmatpush1.msra.mxu0 %v4299
    %4301 = vmatprep.subr.mxu0 0.0
    %v4302 = vand.u32 %v2973, 4294901760
    %4303 = vmatpush1.msra.mxu0 %v4302
    %4304 = vmatprep.subr.mxu0 0.0
    %v4305 = vand.u32 %v2972, 4294901760
    %4306 = vmatpush1.msra.mxu0 %v4305
    %4307 = vmatprep.subr.mxu0 0.0
    %v4308 = vand.u32 %v2971, 4294901760
    %4309 = vmatpush1.msra.mxu0 %v4308
    %4310 = vmatprep.subr.mxu0 0.0
    %v4311 = vand.u32 %v2970, 4294901760
    %4312 = vmatpush1.msra.mxu0 %v4311
    %4313 = vmatprep.subr.mxu0 0.0
    %v4314 = vand.u32 %v2969, 4294901760
    %4315 = vmatpush1.msra.mxu0 %v4314
    %4316 = vmatprep.subr.mxu0 0.0
    %v4317 = vand.u32 %v2968, 4294901760
    %4318 = vmatpush1.msra.mxu0 %v4317
    %4319 = vmatprep.subr.mxu0 0.0
    %v4320 = vand.u32 %v2967, 4294901760
    %4321 = vmatpush1.msra.mxu0 %v4320
    %4322 = vmatprep.subr.mxu0 0.0
    %4323 = vmatpush2.msra.mxu0 0.0
    %4324 = vmatprep.subr.mxu0 0.0
    %4325 = vmatpush2.msra.mxu0 0.0
    %4326 = vmatprep.subr.mxu0 0.0
    %4327 = vmatpush2.msra.mxu0 0.0
    %4328 = vmatprep.subr.mxu0 0.0
    %4329 = vmatpush2.msra.mxu0 0.0
    %4330 = vmatprep.subr.mxu0 0.0
    %4331 = vmatpush2.msra.mxu0 0.0
    %4332 = vmatprep.subr.mxu0 0.0
    %4333 = vmatpush2.msra.mxu0 0.0
    %4334 = vmatprep.subr.mxu0 0.0
    %4335 = vmatpush2.msra.mxu0 0.0
    %4336 = vmatprep.subr.mxu0 0.0
    %4337 = vmatpush2.msra.mxu0 0.0
    %4338 = vmatprep.subr.mxu0 0.0
    %4339 = vmatpush2.msra.mxu0 0.0
    %4340 = vmatprep.subr.mxu0 0.0
    %4341 = vmatpush2.msra.mxu0 0.0
    %4342 = vmatprep.subr.mxu0 0.0
    %4343 = vmatpush2.msra.mxu0 0.0
    %4344 = vmatprep.subr.mxu0 0.0
    %4345 = vmatpush2.msra.mxu0 0.0
    %4346 = vmatprep.subr.mxu0 0.0
    %4347 = vmatpush2.msra.mxu0 0.0
    %4348 = vmatprep.subr.mxu0 0.0
    %4349 = vmatpush2.msra.mxu0 0.0
    %4350 = vmatprep.subr.mxu0 0.0
    %4351 = vmatpush2.msra.mxu0 0.0
    %4352 = vmatprep.subr.mxu0 0.0
    %4353 = vmatpush2.msra.mxu0 0.0
    %4354 = vmatprep.mubr.f32.mxu0 0.0
    %v4355 = vand.u32 %v2965, 4294901760
    %4356 = vmatmul.mubr.f32.gmra.mxu0 %v4355
    %v4357 = vpop.f32.mrf.mxu0
    %v4358 = vadd.f32 %v4265, %v4357
    %v4359 = vpop.f32.mrf.mxu0
    %4360 = vmatprep.mubr.f32.mxu0 0.0
    %v4361 = vand.u32 %v2966, 4294901760
    %4362 = vmatmul.mubr.f32.gmra.mxu0 %v4361
    %v4363 = vpop.f32.mrf.mxu0
    %v4364 = vadd.f32 %v4271, %v4363
    %v4365 = vpop.f32.mrf.mxu0
    %4366 = vdwg.mxu0
    %v4367 = vrcp.pop %v4358
    %v4368 = vrcp.pop %v4364
    %v4369 = vmul.f32 %v3674, %v4367
    %v4370 = vmul.f32 %v3680, %v4368
    %v4371 = vld [vmem:[#allocation7] sm:$0xff]
    %v4372 = vld [vmem:[#allocation7 + $0x8] sm:$0xff]
    %v4373 = vld [vmem:[#allocation7 + $0x10] sm:$0xff]
    %v4374 = vld [vmem:[#allocation7 + $0x18] sm:$0xff]
    %v4375 = vld [vmem:[#allocation7 + $0x20] sm:$0xff]
    %v4376 = vld [vmem:[#allocation7 + $0x28] sm:$0xff]
    %v4377 = vld [vmem:[#allocation7 + $0x30] sm:$0xff]
    %v4378 = vld [vmem:[#allocation7 + $0x38] sm:$0xff]
    %v4379 = vld [vmem:[#allocation7 + $0x40] sm:$0xff]
    %v4380 = vld [vmem:[#allocation7 + $0x48] sm:$0xff]
    %v4381 = vld [vmem:[#allocation7 + $0x50] sm:$0xff]
    %v4382 = vld [vmem:[#allocation7 + $0x58] sm:$0xff]
    %v4383 = vld [vmem:[#allocation7 + $0x60] sm:$0xff]
    %v4384 = vld [vmem:[#allocation7 + $0x68] sm:$0xff]
    %v4385 = vld [vmem:[#allocation7 + $0x70] sm:$0xff]
    %v4386 = vld [vmem:[#allocation7 + $0x78] sm:$0xff]
    %4387 = vmatprep.subr.mxu0 0.0
    %v4388 = vand.u32 %v4386, 4294901760
    %4389 = vmatpush1.msra.mxu0 %v4388
    %4390 = vmatprep.subr.mxu0 0.0
    %v4391 = vand.u32 %v4385, 4294901760
    %4392 = vmatpush1.msra.mxu0 %v4391
    %4393 = vmatprep.subr.mxu0 0.0
    %v4394 = vand.u32 %v4384, 4294901760
    %4395 = vmatpush1.msra.mxu0 %v4394
    %4396 = vmatprep.subr.mxu0 0.0
    %v4397 = vand.u32 %v4383, 4294901760
    %4398 = vmatpush1.msra.mxu0 %v4397
    %4399 = vmatprep.subr.mxu0 0.0
    %v4400 = vand.u32 %v4382, 4294901760
    %4401 = vmatpush1.msra.mxu0 %v4400
    %4402 = vmatprep.subr.mxu0 0.0
    %v4403 = vand.u32 %v4381, 4294901760
    %4404 = vmatpush1.msra.mxu0 %v4403
    %4405 = vmatprep.subr.mxu0 0.0
    %v4406 = vand.u32 %v4380, 4294901760
    %4407 = vmatpush1.msra.mxu0 %v4406
    %4408 = vmatprep.subr.mxu0 0.0
    %v4409 = vand.u32 %v4379, 4294901760
    %4410 = vmatpush1.msra.mxu0 %v4409
    %4411 = vmatprep.subr.mxu0 0.0
    %v4412 = vand.u32 %v4378, 4294901760
    %4413 = vmatpush1.msra.mxu0 %v4412
    %4414 = vmatprep.subr.mxu0 0.0
    %v4415 = vand.u32 %v4377, 4294901760
    %4416 = vmatpush1.msra.mxu0 %v4415
    %4417 = vmatprep.subr.mxu0 0.0
    %v4418 = vand.u32 %v4376, 4294901760
    %4419 = vmatpush1.msra.mxu0 %v4418
    %4420 = vmatprep.subr.mxu0 0.0
    %v4421 = vand.u32 %v4375, 4294901760
    %4422 = vmatpush1.msra.mxu0 %v4421
    %4423 = vmatprep.subr.mxu0 0.0
    %v4424 = vand.u32 %v4374, 4294901760
    %4425 = vmatpush1.msra.mxu0 %v4424
    %4426 = vmatprep.subr.mxu0 0.0
    %v4427 = vand.u32 %v4373, 4294901760
    %4428 = vmatpush1.msra.mxu0 %v4427
    %4429 = vmatprep.subr.mxu0 0.0
    %v4430 = vand.u32 %v4372, 4294901760
    %4431 = vmatpush1.msra.mxu0 %v4430
    %4432 = vmatprep.subr.mxu0 0.0
    %v4433 = vand.u32 %v4371, 4294901760
    %4434 = vmatpush1.msra.mxu0 %v4433
    %4435 = vmatprep.subr.mxu0 0.0
    %4436 = vmatpush2.msra.mxu0 0.0
    %4437 = vmatprep.subr.mxu0 0.0
    %4438 = vmatpush2.msra.mxu0 0.0
    %4439 = vmatprep.subr.mxu0 0.0
    %4440 = vmatpush2.msra.mxu0 0.0
    %4441 = vmatprep.subr.mxu0 0.0
    %4442 = vmatpush2.msra.mxu0 0.0
    %4443 = vmatprep.subr.mxu0 0.0
    %4444 = vmatpush2.msra.mxu0 0.0
    %4445 = vmatprep.subr.mxu0 0.0
    %4446 = vmatpush2.msra.mxu0 0.0
    %4447 = vmatprep.subr.mxu0 0.0
    %4448 = vmatpush2.msra.mxu0 0.0
    %4449 = vmatprep.subr.mxu0 0.0
    %4450 = vmatpush2.msra.mxu0 0.0
    %4451 = vmatprep.subr.mxu0 0.0
    %4452 = vmatpush2.msra.mxu0 0.0
    %4453 = vmatprep.subr.mxu0 0.0
    %4454 = vmatpush2.msra.mxu0 0.0
    %4455 = vmatprep.subr.mxu0 0.0
    %4456 = vmatpush2.msra.mxu0 0.0
    %4457 = vmatprep.subr.mxu0 0.0
    %4458 = vmatpush2.msra.mxu0 0.0
    %4459 = vmatprep.subr.mxu0 0.0
    %4460 = vmatpush2.msra.mxu0 0.0
    %4461 = vmatprep.subr.mxu0 0.0
    %4462 = vmatpush2.msra.mxu0 0.0
    %4463 = vmatprep.subr.mxu0 0.0
    %4464 = vmatpush2.msra.mxu0 0.0
    %4465 = vmatprep.subr.mxu0 0.0
    %4466 = vmatpush2.msra.mxu0 0.0
    %4467 = vmatprep.mubr.f32.mxu0 0.0
    %v4468 = vand.u32 %v4369, 4294901760
    %v4469 = vsub.f32 %v4369, %v4468
    %v4470 = vand.u32 %v4469, 4294901760
    %v4471 = vsub.f32 %v4469, %v4470
    %v4472 = vand.u32 %v4471, 4294901760
    %4473 = vmatmul.mubr.f32.gmra.mxu0 %v4472
    %v4474 = vpop.f32.mrf.mxu0
    %v4475 = vadd.f32 0.0, %v4474
    %v4476 = vpop.f32.mrf.mxu0
    %4477 = vmatprep.mubr.f32.mxu0 0.0
    %v4478 = vand.u32 %v4370, 4294901760
    %v4479 = vsub.f32 %v4370, %v4478
    %v4480 = vand.u32 %v4479, 4294901760
    %v4481 = vsub.f32 %v4479, %v4480
    %v4482 = vand.u32 %v4481, 4294901760
    %4483 = vmatmul.mubr.f32.gmra.mxu0 %v4482
    %v4484 = vpop.f32.mrf.mxu0
    %v4485 = vadd.f32 0.0, %v4484
    %v4486 = vpop.f32.mrf.mxu0
    %4487 = vdwg.mxu0
    %4488 = vmatprep.subr.mxu0 0.0
    %v4489 = vand.u32 %v4386, 4294901760
    %v4490 = vsub.f32 %v4386, %v4489
    %v4491 = vand.u32 %v4490, 4294901760
    %v4492 = vsub.f32 %v4490, %v4491
    %v4493 = vand.u32 %v4492, 4294901760
    %4494 = vmatpush1.msra.mxu0 %v4493
    %4495 = vmatprep.subr.mxu0 0.0
    %v4496 = vand.u32 %v4385, 4294901760
    %v4497 = vsub.f32 %v4385, %v4496
    %v4498 = vand.u32 %v4497, 4294901760
    %v4499 = vsub.f32 %v4497, %v4498
    %v4500 = vand.u32 %v4499, 4294901760
    %4501 = vmatpush1.msra.mxu0 %v4500
    %4502 = vmatprep.subr.mxu0 0.0
    %v4503 = vand.u32 %v4384, 4294901760
    %v4504 = vsub.f32 %v4384, %v4503
    %v4505 = vand.u32 %v4504, 4294901760
    %v4506 = vsub.f32 %v4504, %v4505
    %v4507 = vand.u32 %v4506, 4294901760
    %4508 = vmatpush1.msra.mxu0 %v4507
    %4509 = vmatprep.subr.mxu0 0.0
    %v4510 = vand.u32 %v4383, 4294901760
    %v4511 = vsub.f32 %v4383, %v4510
    %v4512 = vand.u32 %v4511, 4294901760
    %v4513 = vsub.f32 %v4511, %v4512
    %v4514 = vand.u32 %v4513, 4294901760
    %4515 = vmatpush1.msra.mxu0 %v4514
    %4516 = vmatprep.subr.mxu0 0.0
    %v4517 = vand.u32 %v4382, 4294901760
    %v4518 = vsub.f32 %v4382, %v4517
    %v4519 = vand.u32 %v4518, 4294901760
    %v4520 = vsub.f32 %v4518, %v4519
    %v4521 = vand.u32 %v4520, 4294901760
    %4522 = vmatpush1.msra.mxu0 %v4521
    %4523 = vmatprep.subr.mxu0 0.0
    %v4524 = vand.u32 %v4381, 4294901760
    %v4525 = vsub.f32 %v4381, %v4524
    %v4526 = vand.u32 %v4525, 4294901760
    %v4527 = vsub.f32 %v4525, %v4526
    %v4528 = vand.u32 %v4527, 4294901760
    %4529 = vmatpush1.msra.mxu0 %v4528
    %4530 = vmatprep.subr.mxu0 0.0
    %v4531 = vand.u32 %v4380, 4294901760
    %v4532 = vsub.f32 %v4380, %v4531
    %v4533 = vand.u32 %v4532, 4294901760
    %v4534 = vsub.f32 %v4532, %v4533
    %v4535 = vand.u32 %v4534, 4294901760
    %4536 = vmatpush1.msra.mxu0 %v4535
    %4537 = vmatprep.subr.mxu0 0.0
    %v4538 = vand.u32 %v4379, 4294901760
    %v4539 = vsub.f32 %v4379, %v4538
    %v4540 = vand.u32 %v4539, 4294901760
    %v4541 = vsub.f32 %v4539, %v4540
    %v4542 = vand.u32 %v4541, 4294901760
    %4543 = vmatpush1.msra.mxu0 %v4542
    %4544 = vmatprep.subr.mxu0 0.0
    %v4545 = vand.u32 %v4378, 4294901760
    %v4546 = vsub.f32 %v4378, %v4545
    %v4547 = vand.u32 %v4546, 4294901760
    %v4548 = vsub.f32 %v4546, %v4547
    %v4549 = vand.u32 %v4548, 4294901760
    %4550 = vmatpush1.msra.mxu0 %v4549
    %4551 = vmatprep.subr.mxu0 0.0
    %v4552 = vand.u32 %v4377, 4294901760
    %v4553 = vsub.f32 %v4377, %v4552
    %v4554 = vand.u32 %v4553, 4294901760
    %v4555 = vsub.f32 %v4553, %v4554
    %v4556 = vand.u32 %v4555, 4294901760
    %4557 = vmatpush1.msra.mxu0 %v4556
    %4558 = vmatprep.subr.mxu0 0.0
    %v4559 = vand.u32 %v4376, 4294901760
    %v4560 = vsub.f32 %v4376, %v4559
    %v4561 = vand.u32 %v4560, 4294901760
    %v4562 = vsub.f32 %v4560, %v4561
    %v4563 = vand.u32 %v4562, 4294901760
    %4564 = vmatpush1.msra.mxu0 %v4563
    %4565 = vmatprep.subr.mxu0 0.0
    %v4566 = vand.u32 %v4375, 4294901760
    %v4567 = vsub.f32 %v4375, %v4566
    %v4568 = vand.u32 %v4567, 4294901760
    %v4569 = vsub.f32 %v4567, %v4568
    %v4570 = vand.u32 %v4569, 4294901760
    %4571 = vmatpush1.msra.mxu0 %v4570
    %4572 = vmatprep.subr.mxu0 0.0
    %v4573 = vand.u32 %v4374, 4294901760
    %v4574 = vsub.f32 %v4374, %v4573
    %v4575 = vand.u32 %v4574, 4294901760
    %v4576 = vsub.f32 %v4574, %v4575
    %v4577 = vand.u32 %v4576, 4294901760
    %4578 = vmatpush1.msra.mxu0 %v4577
    %4579 = vmatprep.subr.mxu0 0.0
    %v4580 = vand.u32 %v4373, 4294901760
    %v4581 = vsub.f32 %v4373, %v4580
    %v4582 = vand.u32 %v4581, 4294901760
    %v4583 = vsub.f32 %v4581, %v4582
    %v4584 = vand.u32 %v4583, 4294901760
    %4585 = vmatpush1.msra.mxu0 %v4584
    %4586 = vmatprep.subr.mxu0 0.0
    %v4587 = vand.u32 %v4372, 4294901760
    %v4588 = vsub.f32 %v4372, %v4587
    %v4589 = vand.u32 %v4588, 4294901760
    %v4590 = vsub.f32 %v4588, %v4589
    %v4591 = vand.u32 %v4590, 4294901760
    %4592 = vmatpush1.msra.mxu0 %v4591
    %4593 = vmatprep.subr.mxu0 0.0
    %v4594 = vand.u32 %v4371, 4294901760
    %v4595 = vsub.f32 %v4371, %v4594
    %v4596 = vand.u32 %v4595, 4294901760
    %v4597 = vsub.f32 %v4595, %v4596
    %v4598 = vand.u32 %v4597, 4294901760
    %4599 = vmatpush1.msra.mxu0 %v4598
    %4600 = vmatprep.subr.mxu0 0.0
    %4601 = vmatpush2.msra.mxu0 0.0
    %4602 = vmatprep.subr.mxu0 0.0
    %4603 = vmatpush2.msra.mxu0 0.0
    %4604 = vmatprep.subr.mxu0 0.0
    %4605 = vmatpush2.msra.mxu0 0.0
    %4606 = vmatprep.subr.mxu0 0.0
    %4607 = vmatpush2.msra.mxu0 0.0
    %4608 = vmatprep.subr.mxu0 0.0
    %4609 = vmatpush2.msra.mxu0 0.0
    %4610 = vmatprep.subr.mxu0 0.0
    %4611 = vmatpush2.msra.mxu0 0.0
    %4612 = vmatprep.subr.mxu0 0.0
    %4613 = vmatpush2.msra.mxu0 0.0
    %4614 = vmatprep.subr.mxu0 0.0
    %4615 = vmatpush2.msra.mxu0 0.0
    %4616 = vmatprep.subr.mxu0 0.0
    %4617 = vmatpush2.msra.mxu0 0.0
    %4618 = vmatprep.subr.mxu0 0.0
    %4619 = vmatpush2.msra.mxu0 0.0
    %4620 = vmatprep.subr.mxu0 0.0
    %4621 = vmatpush2.msra.mxu0 0.0
    %4622 = vmatprep.subr.mxu0 0.0
    %4623 = vmatpush2.msra.mxu0 0.0
    %4624 = vmatprep.subr.mxu0 0.0
    %4625 = vmatpush2.msra.mxu0 0.0
    %4626 = vmatprep.subr.mxu0 0.0
    %4627 = vmatpush2.msra.mxu0 0.0
    %4628 = vmatprep.subr.mxu0 0.0
    %4629 = vmatpush2.msra.mxu0 0.0
    %4630 = vmatprep.subr.mxu0 0.0
    %4631 = vmatpush2.msra.mxu0 0.0
    %4632 = vmatprep.mubr.f32.mxu0 0.0
    %v4633 = vand.u32 %v4369, 4294901760
    %4634 = vmatmul.mubr.f32.gmra.mxu0 %v4633
    %v4635 = vpop.f32.mrf.mxu0
    %v4636 = vadd.f32 %v4475, %v4635
    %v4637 = vpop.f32.mrf.mxu0
    %4638 = vmatprep.mubr.f32.mxu0 0.0
    %v4639 = vand.u32 %v4370, 4294901760
    %4640 = vmatmul.mubr.f32.gmra.mxu0 %v4639
    %v4641 = vpop.f32.mrf.mxu0
    %v4642 = vadd.f32 %v4485, %v4641
    %v4643 = vpop.f32.mrf.mxu0
    %4644 = vdwg.mxu0
    %4645 = vmatprep.subr.mxu0 0.0
    %v4646 = vand.u32 %v4386, 4294901760
    %v4647 = vsub.f32 %v4386, %v4646
    %4648 = vmatpush1.msra.mxu0 %v4647
    %4649 = vmatprep.subr.mxu0 0.0
    %v4650 = vand.u32 %v4385, 4294901760
    %v4651 = vsub.f32 %v4385, %v4650
    %4652 = vmatpush1.msra.mxu0 %v4651
    %4653 = vmatprep.subr.mxu0 0.0
    %v4654 = vand.u32 %v4384, 4294901760
    %v4655 = vsub.f32 %v4384, %v4654
    %4656 = vmatpush1.msra.mxu0 %v4655
    %4657 = vmatprep.subr.mxu0 0.0
    %v4658 = vand.u32 %v4383, 4294901760
    %v4659 = vsub.f32 %v4383, %v4658
    %4660 = vmatpush1.msra.mxu0 %v4659
    %4661 = vmatprep.subr.mxu0 0.0
    %v4662 = vand.u32 %v4382, 4294901760
    %v4663 = vsub.f32 %v4382, %v4662
    %4664 = vmatpush1.msra.mxu0 %v4663
    %4665 = vmatprep.subr.mxu0 0.0
    %v4666 = vand.u32 %v4381, 4294901760
    %v4667 = vsub.f32 %v4381, %v4666
    %4668 = vmatpush1.msra.mxu0 %v4667
    %4669 = vmatprep.subr.mxu0 0.0
    %v4670 = vand.u32 %v4380, 4294901760
    %v4671 = vsub.f32 %v4380, %v4670
    %4672 = vmatpush1.msra.mxu0 %v4671
    %4673 = vmatprep.subr.mxu0 0.0
    %v4674 = vand.u32 %v4379, 4294901760
    %v4675 = vsub.f32 %v4379, %v4674
    %4676 = vmatpush1.msra.mxu0 %v4675
    %4677 = vmatprep.subr.mxu0 0.0
    %v4678 = vand.u32 %v4378, 4294901760
    %v4679 = vsub.f32 %v4378, %v4678
    %4680 = vmatpush1.msra.mxu0 %v4679
    %4681 = vmatprep.subr.mxu0 0.0
    %v4682 = vand.u32 %v4377, 4294901760
    %v4683 = vsub.f32 %v4377, %v4682
    %4684 = vmatpush1.msra.mxu0 %v4683
    %4685 = vmatprep.subr.mxu0 0.0
    %v4686 = vand.u32 %v4376, 4294901760
    %v4687 = vsub.f32 %v4376, %v4686
    %4688 = vmatpush1.msra.mxu0 %v4687
    %4689 = vmatprep.subr.mxu0 0.0
    %v4690 = vand.u32 %v4375, 4294901760
    %v4691 = vsub.f32 %v4375, %v4690
    %4692 = vmatpush1.msra.mxu0 %v4691
    %4693 = vmatprep.subr.mxu0 0.0
    %v4694 = vand.u32 %v4374, 4294901760
    %v4695 = vsub.f32 %v4374, %v4694
    %4696 = vmatpush1.msra.mxu0 %v4695
    %4697 = vmatprep.subr.mxu0 0.0
    %v4698 = vand.u32 %v4373, 4294901760
    %v4699 = vsub.f32 %v4373, %v4698
    %4700 = vmatpush1.msra.mxu0 %v4699
    %4701 = vmatprep.subr.mxu0 0.0
    %v4702 = vand.u32 %v4372, 4294901760
    %v4703 = vsub.f32 %v4372, %v4702
    %4704 = vmatpush1.msra.mxu0 %v4703
    %4705 = vmatprep.subr.mxu0 0.0
    %v4706 = vand.u32 %v4371, 4294901760
    %v4707 = vsub.f32 %v4371, %v4706
    %4708 = vmatpush1.msra.mxu0 %v4707
    %4709 = vmatprep.subr.mxu0 0.0
    %4710 = vmatpush2.msra.mxu0 0.0
    %4711 = vmatprep.subr.mxu0 0.0
    %4712 = vmatpush2.msra.mxu0 0.0
    %4713 = vmatprep.subr.mxu0 0.0
    %4714 = vmatpush2.msra.mxu0 0.0
    %4715 = vmatprep.subr.mxu0 0.0
    %4716 = vmatpush2.msra.mxu0 0.0
    %4717 = vmatprep.subr.mxu0 0.0
    %4718 = vmatpush2.msra.mxu0 0.0
    %4719 = vmatprep.subr.mxu0 0.0
    %4720 = vmatpush2.msra.mxu0 0.0
    %4721 = vmatprep.subr.mxu0 0.0
    %4722 = vmatpush2.msra.mxu0 0.0
    %4723 = vmatprep.subr.mxu0 0.0
    %4724 = vmatpush2.msra.mxu0 0.0
    %4725 = vmatprep.subr.mxu0 0.0
    %4726 = vmatpush2.msra.mxu0 0.0
    %4727 = vmatprep.subr.mxu0 0.0
    %4728 = vmatpush2.msra.mxu0 0.0
    %4729 = vmatprep.subr.mxu0 0.0
    %4730 = vmatpush2.msra.mxu0 0.0
    %4731 = vmatprep.subr.mxu0 0.0
    %4732 = vmatpush2.msra.mxu0 0.0
    %4733 = vmatprep.subr.mxu0 0.0
    %4734 = vmatpush2.msra.mxu0 0.0
    %4735 = vmatprep.subr.mxu0 0.0
    %4736 = vmatpush2.msra.mxu0 0.0
    %4737 = vmatprep.subr.mxu0 0.0
    %4738 = vmatpush2.msra.mxu0 0.0
    %4739 = vmatprep.subr.mxu0 0.0
    %4740 = vmatpush2.msra.mxu0 0.0
    %4741 = vmatprep.mubr.f32.mxu0 0.0
    %v4742 = vand.u32 %v4369, 4294901760
    %v4743 = vsub.f32 %v4369, %v4742
    %4744 = vmatmul.mubr.f32.gmra.mxu0 %v4743
    %v4745 = vpop.f32.mrf.mxu0
    %v4746 = vadd.f32 %v4636, %v4745
    %v4747 = vpop.f32.mrf.mxu0
    %4748 = vmatprep.mubr.f32.mxu0 0.0
    %v4749 = vand.u32 %v4370, 4294901760
    %v4750 = vsub.f32 %v4370, %v4749
    %4751 = vmatmul.mubr.f32.gmra.mxu0 %v4750
    %v4752 = vpop.f32.mrf.mxu0
    %v4753 = vadd.f32 %v4642, %v4752
    %v4754 = vpop.f32.mrf.mxu0
    %4755 = vdwg.mxu0
    %4756 = vmatprep.subr.mxu0 0.0
    %v4757 = vand.u32 %v4386, 4294901760
    %4758 = vmatpush1.msra.mxu0 %v4757
    %4759 = vmatprep.subr.mxu0 0.0
    %v4760 = vand.u32 %v4385, 4294901760
    %4761 = vmatpush1.msra.mxu0 %v4760
    %4762 = vmatprep.subr.mxu0 0.0
    %v4763 = vand.u32 %v4384, 4294901760
    %4764 = vmatpush1.msra.mxu0 %v4763
    %4765 = vmatprep.subr.mxu0 0.0
    %v4766 = vand.u32 %v4383, 4294901760
    %4767 = vmatpush1.msra.mxu0 %v4766
    %4768 = vmatprep.subr.mxu0 0.0
    %v4769 = vand.u32 %v4382, 4294901760
    %4770 = vmatpush1.msra.mxu0 %v4769
    %4771 = vmatprep.subr.mxu0 0.0
    %v4772 = vand.u32 %v4381, 4294901760
    %4773 = vmatpush1.msra.mxu0 %v4772
    %4774 = vmatprep.subr.mxu0 0.0
    %v4775 = vand.u32 %v4380, 4294901760
    %4776 = vmatpush1.msra.mxu0 %v4775
    %4777 = vmatprep.subr.mxu0 0.0
    %v4778 = vand.u32 %v4379, 4294901760
    %4779 = vmatpush1.msra.mxu0 %v4778
    %4780 = vmatprep.subr.mxu0 0.0
    %v4781 = vand.u32 %v4378, 4294901760
    %4782 = vmatpush1.msra.mxu0 %v4781
    %4783 = vmatprep.subr.mxu0 0.0
    %v4784 = vand.u32 %v4377, 4294901760
    %4785 = vmatpush1.msra.mxu0 %v4784
    %4786 = vmatprep.subr.mxu0 0.0
    %v4787 = vand.u32 %v4376, 4294901760
    %4788 = vmatpush1.msra.mxu0 %v4787
    %4789 = vmatprep.subr.mxu0 0.0
    %v4790 = vand.u32 %v4375, 4294901760
    %4791 = vmatpush1.msra.mxu0 %v4790
    %4792 = vmatprep.subr.mxu0 0.0
    %v4793 = vand.u32 %v4374, 4294901760
    %4794 = vmatpush1.msra.mxu0 %v4793
    %4795 = vmatprep.subr.mxu0 0.0
    %v4796 = vand.u32 %v4373, 4294901760
    %4797 = vmatpush1.msra.mxu0 %v4796
    %4798 = vmatprep.subr.mxu0 0.0
    %v4799 = vand.u32 %v4372, 4294901760
    %4800 = vmatpush1.msra.mxu0 %v4799
    %4801 = vmatprep.subr.mxu0 0.0
    %v4802 = vand.u32 %v4371, 4294901760
    %4803 = vmatpush1.msra.mxu0 %v4802
    %4804 = vmatprep.subr.mxu0 0.0
    %4805 = vmatpush2.msra.mxu0 0.0
    %4806 = vmatprep.subr.mxu0 0.0
    %4807 = vmatpush2.msra.mxu0 0.0
    %4808 = vmatprep.subr.mxu0 0.0
    %4809 = vmatpush2.msra.mxu0 0.0
    %4810 = vmatprep.subr.mxu0 0.0
    %4811 = vmatpush2.msra.mxu0 0.0
    %4812 = vmatprep.subr.mxu0 0.0
    %4813 = vmatpush2.msra.mxu0 0.0
    %4814 = vmatprep.subr.mxu0 0.0
    %4815 = vmatpush2.msra.mxu0 0.0
    %4816 = vmatprep.subr.mxu0 0.0
    %4817 = vmatpush2.msra.mxu0 0.0
    %4818 = vmatprep.subr.mxu0 0.0
    %4819 = vmatpush2.msra.mxu0 0.0
    %4820 = vmatprep.subr.mxu0 0.0
    %4821 = vmatpush2.msra.mxu0 0.0
    %4822 = vmatprep.subr.mxu0 0.0
    %4823 = vmatpush2.msra.mxu0 0.0
    %4824 = vmatprep.subr.mxu0 0.0
    %4825 = vmatpush2.msra.mxu0 0.0
    %4826 = vmatprep.subr.mxu0 0.0
    %4827 = vmatpush2.msra.mxu0 0.0
    %4828 = vmatprep.subr.mxu0 0.0
    %4829 = vmatpush2.msra.mxu0 0.0
    %4830 = vmatprep.subr.mxu0 0.0
    %4831 = vmatpush2.msra.mxu0 0.0
    %4832 = vmatprep.subr.mxu0 0.0
    %4833 = vmatpush2.msra.mxu0 0.0
    %4834 = vmatprep.subr.mxu0 0.0
    %4835 = vmatpush2.msra.mxu0 0.0
    %4836 = vmatprep.mubr.f32.mxu0 0.0
    %v4837 = vand.u32 %v4369, 4294901760
    %v4838 = vsub.f32 %v4369, %v4837
    %v4839 = vand.u32 %v4838, 4294901760
    %4840 = vmatmul.mubr.f32.gmra.mxu0 %v4839
    %v4841 = vpop.f32.mrf.mxu0
    %v4842 = vadd.f32 %v4746, %v4841
    %v4843 = vpop.f32.mrf.mxu0
    %4844 = vmatprep.mubr.f32.mxu0 0.0
    %v4845 = vand.u32 %v4370, 4294901760
    %v4846 = vsub.f32 %v4370, %v4845
    %v4847 = vand.u32 %v4846, 4294901760
    %4848 = vmatmul.mubr.f32.gmra.mxu0 %v4847
    %v4849 = vpop.f32.mrf.mxu0
    %v4850 = vadd.f32 %v4753, %v4849
    %v4851 = vpop.f32.mrf.mxu0
    %4852 = vdwg.mxu0
    %4853 = vmatprep.subr.mxu0 0.0
    %v4854 = vand.u32 %v4386, 4294901760
    %v4855 = vsub.f32 %v4386, %v4854
    %v4856 = vand.u32 %v4855, 4294901760
    %4857 = vmatpush1.msra.mxu0 %v4856
    %4858 = vmatprep.subr.mxu0 0.0
    %v4859 = vand.u32 %v4385, 4294901760
    %v4860 = vsub.f32 %v4385, %v4859
    %v4861 = vand.u32 %v4860, 4294901760
    %4862 = vmatpush1.msra.mxu0 %v4861
    %4863 = vmatprep.subr.mxu0 0.0
    %v4864 = vand.u32 %v4384, 4294901760
    %v4865 = vsub.f32 %v4384, %v4864
    %v4866 = vand.u32 %v4865, 4294901760
    %4867 = vmatpush1.msra.mxu0 %v4866
    %4868 = vmatprep.subr.mxu0 0.0
    %v4869 = vand.u32 %v4383, 4294901760
    %v4870 = vsub.f32 %v4383, %v4869
    %v4871 = vand.u32 %v4870, 4294901760
    %4872 = vmatpush1.msra.mxu0 %v4871
    %4873 = vmatprep.subr.mxu0 0.0
    %v4874 = vand.u32 %v4382, 4294901760
    %v4875 = vsub.f32 %v4382, %v4874
    %v4876 = vand.u32 %v4875, 4294901760
    %4877 = vmatpush1.msra.mxu0 %v4876
    %4878 = vmatprep.subr.mxu0 0.0
    %v4879 = vand.u32 %v4381, 4294901760
    %v4880 = vsub.f32 %v4381, %v4879
    %v4881 = vand.u32 %v4880, 4294901760
    %4882 = vmatpush1.msra.mxu0 %v4881
    %4883 = vmatprep.subr.mxu0 0.0
    %v4884 = vand.u32 %v4380, 4294901760
    %v4885 = vsub.f32 %v4380, %v4884
    %v4886 = vand.u32 %v4885, 4294901760
    %4887 = vmatpush1.msra.mxu0 %v4886
    %4888 = vmatprep.subr.mxu0 0.0
    %v4889 = vand.u32 %v4379, 4294901760
    %v4890 = vsub.f32 %v4379, %v4889
    %v4891 = vand.u32 %v4890, 4294901760
    %4892 = vmatpush1.msra.mxu0 %v4891
    %4893 = vmatprep.subr.mxu0 0.0
    %v4894 = vand.u32 %v4378, 4294901760
    %v4895 = vsub.f32 %v4378, %v4894
    %v4896 = vand.u32 %v4895, 4294901760
    %4897 = vmatpush1.msra.mxu0 %v4896
    %4898 = vmatprep.subr.mxu0 0.0
    %v4899 = vand.u32 %v4377, 4294901760
    %v4900 = vsub.f32 %v4377, %v4899
    %v4901 = vand.u32 %v4900, 4294901760
    %4902 = vmatpush1.msra.mxu0 %v4901
    %4903 = vmatprep.subr.mxu0 0.0
    %v4904 = vand.u32 %v4376, 4294901760
    %v4905 = vsub.f32 %v4376, %v4904
    %v4906 = vand.u32 %v4905, 4294901760
    %4907 = vmatpush1.msra.mxu0 %v4906
    %4908 = vmatprep.subr.mxu0 0.0
    %v4909 = vand.u32 %v4375, 4294901760
    %v4910 = vsub.f32 %v4375, %v4909
    %v4911 = vand.u32 %v4910, 4294901760
    %4912 = vmatpush1.msra.mxu0 %v4911
    %4913 = vmatprep.subr.mxu0 0.0
    %v4914 = vand.u32 %v4374, 4294901760
    %v4915 = vsub.f32 %v4374, %v4914
    %v4916 = vand.u32 %v4915, 4294901760
    %4917 = vmatpush1.msra.mxu0 %v4916
    %4918 = vmatprep.subr.mxu0 0.0
    %v4919 = vand.u32 %v4373, 4294901760
    %v4920 = vsub.f32 %v4373, %v4919
    %v4921 = vand.u32 %v4920, 4294901760
    %4922 = vmatpush1.msra.mxu0 %v4921
    %4923 = vmatprep.subr.mxu0 0.0
    %v4924 = vand.u32 %v4372, 4294901760
    %v4925 = vsub.f32 %v4372, %v4924
    %v4926 = vand.u32 %v4925, 4294901760
    %4927 = vmatpush1.msra.mxu0 %v4926
    %4928 = vmatprep.subr.mxu0 0.0
    %v4929 = vand.u32 %v4371, 4294901760
    %v4930 = vsub.f32 %v4371, %v4929
    %v4931 = vand.u32 %v4930, 4294901760
    %4932 = vmatpush1.msra.mxu0 %v4931
    %4933 = vmatprep.subr.mxu0 0.0
    %4934 = vmatpush2.msra.mxu0 0.0
    %4935 = vmatprep.subr.mxu0 0.0
    %4936 = vmatpush2.msra.mxu0 0.0
    %4937 = vmatprep.subr.mxu0 0.0
    %4938 = vmatpush2.msra.mxu0 0.0
    %4939 = vmatprep.subr.mxu0 0.0
    %4940 = vmatpush2.msra.mxu0 0.0
    %4941 = vmatprep.subr.mxu0 0.0
    %4942 = vmatpush2.msra.mxu0 0.0
    %4943 = vmatprep.subr.mxu0 0.0
    %4944 = vmatpush2.msra.mxu0 0.0
    %4945 = vmatprep.subr.mxu0 0.0
    %4946 = vmatpush2.msra.mxu0 0.0
    %4947 = vmatprep.subr.mxu0 0.0
    %4948 = vmatpush2.msra.mxu0 0.0
    %4949 = vmatprep.subr.mxu0 0.0
    %4950 = vmatpush2.msra.mxu0 0.0
    %4951 = vmatprep.subr.mxu0 0.0
    %4952 = vmatpush2.msra.mxu0 0.0
    %4953 = vmatprep.subr.mxu0 0.0
    %4954 = vmatpush2.msra.mxu0 0.0
    %4955 = vmatprep.subr.mxu0 0.0
    %4956 = vmatpush2.msra.mxu0 0.0
    %4957 = vmatprep.subr.mxu0 0.0
    %4958 = vmatpush2.msra.mxu0 0.0
    %4959 = vmatprep.subr.mxu0 0.0
    %4960 = vmatpush2.msra.mxu0 0.0
    %4961 = vmatprep.subr.mxu0 0.0
    %4962 = vmatpush2.msra.mxu0 0.0
    %4963 = vmatprep.subr.mxu0 0.0
    %4964 = vmatpush2.msra.mxu0 0.0
    %4965 = vmatprep.mubr.f32.mxu0 0.0
    %v4966 = vand.u32 %v4369, 4294901760
    %4967 = vmatmul.mubr.f32.gmra.mxu0 %v4966
    %v4968 = vpop.f32.mrf.mxu0
    %v4969 = vadd.f32 %v4842, %v4968
    %v4970 = vpop.f32.mrf.mxu0
    %4971 = vmatprep.mubr.f32.mxu0 0.0
    %v4972 = vand.u32 %v4370, 4294901760
    %4973 = vmatmul.mubr.f32.gmra.mxu0 %v4972
    %v4974 = vpop.f32.mrf.mxu0
    %v4975 = vadd.f32 %v4850, %v4974
    %v4976 = vpop.f32.mrf.mxu0
    %4977 = vdwg.mxu0
    %4978 = vmatprep.subr.mxu0 0.0
    %v4979 = vand.u32 %v4386, 4294901760
    %4980 = vmatpush1.msra.mxu0 %v4979
    %4981 = vmatprep.subr.mxu0 0.0
    %v4982 = vand.u32 %v4385, 4294901760
    %4983 = vmatpush1.msra.mxu0 %v4982
    %4984 = vmatprep.subr.mxu0 0.0
    %v4985 = vand.u32 %v4384, 4294901760
    %4986 = vmatpush1.msra.mxu0 %v4985
    %4987 = vmatprep.subr.mxu0 0.0
    %v4988 = vand.u32 %v4383, 4294901760
    %4989 = vmatpush1.msra.mxu0 %v4988
    %4990 = vmatprep.subr.mxu0 0.0
    %v4991 = vand.u32 %v4382, 4294901760
    %4992 = vmatpush1.msra.mxu0 %v4991
    %4993 = vmatprep.subr.mxu0 0.0
    %v4994 = vand.u32 %v4381, 4294901760
    %4995 = vmatpush1.msra.mxu0 %v4994
    %4996 = vmatprep.subr.mxu0 0.0
    %v4997 = vand.u32 %v4380, 4294901760
    %4998 = vmatpush1.msra.mxu0 %v4997
    %4999 = vmatprep.subr.mxu0 0.0
    %v5000 = vand.u32 %v4379, 4294901760
    %5001 = vmatpush1.msra.mxu0 %v5000
    %5002 = vmatprep.subr.mxu0 0.0
    %v5003 = vand.u32 %v4378, 4294901760
    %5004 = vmatpush1.msra.mxu0 %v5003
    %5005 = vmatprep.subr.mxu0 0.0
    %v5006 = vand.u32 %v4377, 4294901760
    %5007 = vmatpush1.msra.mxu0 %v5006
    %5008 = vmatprep.subr.mxu0 0.0
    %v5009 = vand.u32 %v4376, 4294901760
    %5010 = vmatpush1.msra.mxu0 %v5009
    %5011 = vmatprep.subr.mxu0 0.0
    %v5012 = vand.u32 %v4375, 4294901760
    %5013 = vmatpush1.msra.mxu0 %v5012
    %5014 = vmatprep.subr.mxu0 0.0
    %v5015 = vand.u32 %v4374, 4294901760
    %5016 = vmatpush1.msra.mxu0 %v5015
    %5017 = vmatprep.subr.mxu0 0.0
    %v5018 = vand.u32 %v4373, 4294901760
    %5019 = vmatpush1.msra.mxu0 %v5018
    %5020 = vmatprep.subr.mxu0 0.0
    %v5021 = vand.u32 %v4372, 4294901760
    %5022 = vmatpush1.msra.mxu0 %v5021
    %5023 = vmatprep.subr.mxu0 0.0
    %v5024 = vand.u32 %v4371, 4294901760
    %5025 = vmatpush1.msra.mxu0 %v5024
    %5026 = vmatprep.subr.mxu0 0.0
    %5027 = vmatpush2.msra.mxu0 0.0
    %5028 = vmatprep.subr.mxu0 0.0
    %5029 = vmatpush2.msra.mxu0 0.0
    %5030 = vmatprep.subr.mxu0 0.0
    %5031 = vmatpush2.msra.mxu0 0.0
    %5032 = vmatprep.subr.mxu0 0.0
    %5033 = vmatpush2.msra.mxu0 0.0
    %5034 = vmatprep.subr.mxu0 0.0
    %5035 = vmatpush2.msra.mxu0 0.0
    %5036 = vmatprep.subr.mxu0 0.0
    %5037 = vmatpush2.msra.mxu0 0.0
    %5038 = vmatprep.subr.mxu0 0.0
    %5039 = vmatpush2.msra.mxu0 0.0
    %5040 = vmatprep.subr.mxu0 0.0
    %5041 = vmatpush2.msra.mxu0 0.0
    %5042 = vmatprep.subr.mxu0 0.0
    %5043 = vmatpush2.msra.mxu0 0.0
    %5044 = vmatprep.subr.mxu0 0.0
    %5045 = vmatpush2.msra.mxu0 0.0
    %5046 = vmatprep.subr.mxu0 0.0
    %5047 = vmatpush2.msra.mxu0 0.0
    %5048 = vmatprep.subr.mxu0 0.0
    %5049 = vmatpush2.msra.mxu0 0.0
    %5050 = vmatprep.subr.mxu0 0.0
    %5051 = vmatpush2.msra.mxu0 0.0
    %5052 = vmatprep.subr.mxu0 0.0
    %5053 = vmatpush2.msra.mxu0 0.0
    %5054 = vmatprep.subr.mxu0 0.0
    %5055 = vmatpush2.msra.mxu0 0.0
    %5056 = vmatprep.subr.mxu0 0.0
    %5057 = vmatpush2.msra.mxu0 0.0
    %5058 = vmatprep.mubr.f32.mxu0 0.0
    %v5059 = vand.u32 %v4369, 4294901760
    %5060 = vmatmul.mubr.f32.gmra.mxu0 %v5059
    %v5061 = vpop.f32.mrf.mxu0
    %v5062 = vadd.f32 %v4969, %v5061
    %v5063 = vpop.f32.mrf.mxu0
    %5064 = vmatprep.mubr.f32.mxu0 0.0
    %v5065 = vand.u32 %v4370, 4294901760
    %5066 = vmatmul.mubr.f32.gmra.mxu0 %v5065
    %v5067 = vpop.f32.mrf.mxu0
    %v5068 = vadd.f32 %v4975, %v5067
    %v5069 = vpop.f32.mrf.mxu0
    %5070 = vdwg.mxu0
    %5071 = vst [vmem:[#allocation13] sm:$0xff] %v5062
    %5072 = vst [vmem:[#allocation13 + $0x8] sm:$0xff] %v5068
    // Predicated region
    $region50: #{tpu_custom_call.1} parent=1 // pred_check
      _
    $region51: #{tpu_custom_call.1} parent=1 // pred_check_branch
      %5074 = sbr.rel (0) target = $region53
    $region52: #{tpu_custom_call.1} parent=1 // pred_region
      %s5076 = ssub.s32 256, 256
      %5077 = vsyncadd [#allocation4], %s5076
      %s5078 = sshll.u32 [#allocation13], 4
      %s5079 = int_to_ptr.vmem [resolvable:$true] %s5078
      %5084 = dma.vmem_to_hbm [thread:$0]  %s5079, 256, %s6, [#allocation4], 128, 128, 8
    $region53: #{tpu_custom_call.1} parent=1 // pred_fallthru
      _
    // Predicated region
    $region54: #{tpu_custom_call.1} parent=1 // pred_check
      _
    $region55: #{tpu_custom_call.1} parent=1 // pred_check_branch
      %5086 = sbr.rel (0) target = $region57
    $region56: #{tpu_custom_call.1} parent=1 // pred_region
      %5087 = dma.done [#allocation4], 256
    $region57: #{tpu_custom_call.1} parent=1 // pred_fallthru
      _
    %5088 = vsyncpa [#allocation3], 1
    %5089 = vsyncpa [#allocation6], 1
    %5090 = vsyncpa [#allocation9], 1
    %5091 = vsyncpa [#allocation12], 1
    %5092 = vsyncpa [#allocation4], 1

</llo_original>
